<compile_context>
chip_gen: v7x
topology: tpu7x:2x2x1
jax: 0.10.0
libtpu: 0.0.40
codegen_flags: <defaults>
</compile_context>

<pallas_src>
import functools

import jax
import jax.numpy as jnp
import numpy as np
from jax.experimental import pallas as pl
from jax.experimental.pallas import tpu as pltpu

_BN_EPS = 1e-5
_TB = 8  # batch tile for the conv backbone (TB = B when B < 8)


# --------------------------------------------------------------------------
# Kernel 1: fused conv backbone (per batch tile)
#
# Lane packings:
#   conv1 out  : rows = (b, r)   lanes = s*6  + c    (s in [0,30), c in [0,6))
#   pool1 out  : rows = (i, b)   lanes = j*6  + c    (i,j in [0,15))
#   conv2 out  : rows = (i, b)   lanes = j*16 + co   (i,j in [0,11), co in [0,16))
#   features   : rows = b        lanes = (I*5+J)*16 + co  (NHWC flatten), padded to 512
#
# w1b[kh, s', s*6+c]        = conv1_w[c, 0, kh, s'-s]   (banded over width)
# w2b[kh, j'*6+c, j*16+co]  = conv2_w[co, c, kh, j'-j]  (banded over width)
# --------------------------------------------------------------------------
def _conv_backbone_kernel(x_ref, w1b_ref, b1p_ref, w2b_ref, b2p_ref, out_ref):
    tb = x_ref.shape[0]
    x = x_ref[...]                                          # (tb, 32, 32) f32, pre-padded

    # ---- conv1 (3x3) as 3 banded matmuls over the width axis ----
    z1 = None
    for kh in range(3):
        rows = x[:, kh:kh + 30, :].reshape(tb * 30, 32)     # rows = (b, r)
        part = jnp.dot(rows, w1b_ref[kh], preferred_element_type=jnp.float32)
        z1 = part if z1 is None else z1 + part
    y1 = jnp.maximum(z1 + b1p_ref[...], 0.0)                # (tb*30, 180)
    y1 = y1.reshape(tb, 30, 180)

    # ---- maxpool1 2x2: width (6-lane blocks), then height (rows) ----
    colmax = jnp.concatenate(
        [jnp.maximum(y1[:, :, 12 * j:12 * j + 6], y1[:, :, 12 * j + 6:12 * j + 12])
         for j in range(15)],
        axis=-1)                                            # (tb, 30, 90)
    p1 = jnp.concatenate(
        [jnp.maximum(colmax[:, 2 * i, :], colmax[:, 2 * i + 1, :])
         for i in range(15)],
        axis=0)                                             # (15*tb, 90), rows = (i, b)
    p1 = p1.reshape(15, tb, 90)

    # ---- conv2 (5x5, 6->16) as 5 banded matmuls, bf16 operands / f32 acc ----
    z2 = None
    for kh in range(5):
        rows = p1[kh:kh + 11].reshape(11 * tb, 90).astype(jnp.bfloat16)
        part = jnp.dot(rows, w2b_ref[kh], preferred_element_type=jnp.float32)
        z2 = part if z2 is None else z2 + part
    y2 = jnp.maximum(z2 + b2p_ref[...], 0.0)                # (11*tb, 176)
    y2 = y2.reshape(11, tb, 176)

    # ---- maxpool2 2x2 + NHWC flatten + zero-pad 400 -> 512 (lane-dense) ----
    pieces = []
    for i in range(5):                                      # pooled row I = i
        rmax = jnp.maximum(y2[2 * i], y2[2 * i + 1])        # (tb, 176)
        for j in range(5):                                  # pooled col J = j
            a = rmax[:, 32 * j:32 * j + 16]                 # conv col 2J
            b = rmax[:, 32 * j + 16:32 * j + 32]            # conv col 2J+1
            pieces.append(jnp.maximum(a, b))                # (tb, 16)
    pieces.append(jnp.zeros((tb, 112), jnp.float32))
    out_ref[...] = jnp.concatenate(pieces, axis=-1)         # (tb, 512)


# --------------------------------------------------------------------------
# Kernel 2: fused FC head (whole batch -> full-batch BatchNorm statistics)
# --------------------------------------------------------------------------
def _fc_head_kernel(x_ref,
                    w1_ref, b1_ref, g1_ref, be1_ref,
                    w2_ref, b2_ref, g2_ref, be2_ref,
                    w3_ref, b3_ref,
                    logits_ref, feat_ref):
    x = x_ref[...]                                                    # (B, 512) f32

    # fc1: Linear(400->128, rows padded to 512) -> BatchNorm1d -> ReLU
    z1 = jnp.dot(x.astype(jnp.bfloat16), w1_ref[...],
                 preferred_element_type=jnp.float32) + b1_ref[...]
    mu1 = jnp.mean(z1, axis=0, keepdims=True)
    var1 = jnp.mean((z1 - mu1) ** 2, axis=0, keepdims=True)           # biased var
    h1 = jnp.maximum(
        g1_ref[...] * (z1 - mu1) * jax.lax.rsqrt(var1 + _BN_EPS) + be1_ref[...], 0.0)

    # fc2[0:3]: Linear(128->84) -> BatchNorm1d -> ReLU
    z2 = jnp.dot(h1.astype(jnp.bfloat16), w2_ref[...],
                 preferred_element_type=jnp.float32) + b2_ref[...]
    mu2 = jnp.mean(z2, axis=0, keepdims=True)
    var2 = jnp.mean((z2 - mu2) ** 2, axis=0, keepdims=True)
    h2 = jnp.maximum(
        g2_ref[...] * (z2 - mu2) * jax.lax.rsqrt(var2 + _BN_EPS) + be2_ref[...], 0.0)

    # fc2[3]: Linear(84->10), columns zero-padded to 128 (lane-dense store)
    logits_ref[...] = jnp.dot(h2.astype(jnp.bfloat16), w3_ref[...],
                              preferred_element_type=jnp.float32) + b3_ref[...]
    feat_ref[...] = h1                                                # featuremap (detach = no-op)


def _vmem_spec():
    return pl.BlockSpec(memory_space=pltpu.MemorySpace.VMEM)


# --------------------------------------------------------------------------
# Forward pass
# --------------------------------------------------------------------------
@jax.jit
def lenet_forward(x_nchw, kp):
    """LeNet forward.  Input: (B, 1, 28, 28) NCHW float32.  Returns (logits, featuremap)."""
    bsz = x_nchw.shape[0]
    x = x_nchw.astype(jnp.float32).reshape(bsz, 28, 28)
    xpad = jnp.pad(x, ((0, 0), (2, 2), (2, 2)))                       # conv1 padding=2 -> 32x32

    tb = bsz if bsz < _TB else _TB
    n_tiles = pl.cdiv(bsz, tb)
    bpad = n_tiles * tb
    if bpad != bsz:
        xpad = jnp.pad(xpad, ((0, bpad - bsz), (0, 0), (0, 0)))

    feat = pl.pallas_call(
        _conv_backbone_kernel,
        out_shape=jax.ShapeDtypeStruct((bpad, 512), jnp.float32),
        grid=(n_tiles,),
        in_specs=[
            pl.BlockSpec((tb, 32, 32), lambda i: (i, 0, 0)),
            pl.BlockSpec((3, 32, 180), lambda i: (0, 0, 0)),
            pl.BlockSpec((1, 180), lambda i: (0, 0)),
            pl.BlockSpec((5, 90, 176), lambda i: (0, 0, 0)),
            pl.BlockSpec((1, 176), lambda i: (0, 0)),
        ],
        out_specs=pl.BlockSpec((tb, 512), lambda i: (i, 0)),
        compiler_params=pltpu.CompilerParams(dimension_semantics=("parallel",)),
    )(xpad, kp["w1b"], kp["b1p"], kp["w2b"], kp["b2p"])

    feat = feat[:bsz]   # drop batch padding BEFORE the fc head so BN stats stay exact

    logits_pad, featuremap = pl.pallas_call(
        _fc_head_kernel,
        out_shape=(jax.ShapeDtypeStruct((bsz, 128), jnp.float32),
                   jax.ShapeDtypeStruct((bsz, 128), jnp.float32)),
        in_specs=[_vmem_spec()] * 11,
        out_specs=(_vmem_spec(), _vmem_spec()),
    )(feat,
      kp["W1"], kp["b1"], kp["g1"], kp["be1"],
      kp["W2"], kp["b2"], kp["g2"], kp["be2"],
      kp["W3"], kp["b3"])

    return logits_pad[:, :10], featuremap


# --------------------------------------------------------------------------
# Parameter preparation: PyTorch-layout params -> kernel-ready layouts
# (banded conv matrices, tiled biases, permuted/padded FC weights).  One-time.
# --------------------------------------------------------------------------
def prepare_params(p):
    f32, bf16 = jnp.float32, jnp.bfloat16

    # conv1 banded weights: w1b[kh, s', s*6+c] = w_conv1[c, 0, kh, s'-s]
    w1t = jnp.transpose(p["w_conv1"][:, 0, :, :], (1, 2, 0))          # (3,3,6) [kh,kw,c]
    m1 = np.zeros((3, 32, 30), np.float32)
    for kw in range(3):
        for s in range(30):
            m1[kw, s + kw, s] = 1.0
    w1b = jnp.einsum("kwc,wps->kpsc", w1t, jnp.asarray(m1)).reshape(3, 32, 180).astype(f32)
    b1p = jnp.tile(p["b_conv1"], 30).reshape(1, 180).astype(f32)

    # conv2 banded weights: w2b[kh, j'*6+c, j*16+co] = w_conv2[co, c, kh, j'-j]
    w2t = jnp.transpose(p["w_conv2"], (2, 3, 1, 0))                   # (5,5,6,16) [kh,kw,cin,co]
    m2 = np.zeros((5, 15, 11), np.float32)
    for kw in range(5):
        for j in range(11):
            m2[kw, j + kw, j] = 1.0
    w2b = jnp.einsum("kwco,wpj->kpcjo", w2t, jnp.asarray(m2)).reshape(5, 90, 176).astype(bf16)
    b2p = jnp.tile(p["b_conv2"], 11).reshape(1, 176).astype(f32)

    # fc1: permute rows from PyTorch NCHW flatten (c*25+h*5+w) to the kernel's
    # NHWC flatten ((h*5+w)*16+c) and zero-pad 400 -> 512 rows.
    w1fc = p["W1"].reshape(128, 16, 5, 5).transpose(2, 3, 1, 0).reshape(400, 128)
    w1fc = jnp.pad(w1fc, ((0, 112), (0, 0))).astype(bf16)
    # fc2 / final linear (logits columns zero-padded 10 -> 128)
    w2fc = p["W2"].T.astype(bf16)                                     # (128, 84)
    w3fc = jnp.pad(p["W3"].T, ((0, 0), (0, 118))).astype(bf16)        # (84, 128)
    b3p = jnp.pad(p["b3"], (0, 118)).reshape(1, 128).astype(f32)

    return {
        "w1b": w1b, "b1p": b1p, "w2b": w2b, "b2p": b2p,
        "W1": w1fc,
        "b1": p["b1"].reshape(1, 128).astype(f32),
        "g1": p["g1"].reshape(1, 128).astype(f32),
        "be1": p["be1"].reshape(1, 128).astype(f32),
        "W2": w2fc,
        "b2": p["b2"].reshape(1, 84).astype(f32),
        "g2": p["g2"].reshape(1, 84).astype(f32),
        "be2": p["be2"].reshape(1, 84).astype(f32),
        "W3": w3fc, "b3": b3p,
    }


# --------------------------------------------------------------------------
# Deterministic PyTorch-layout parameter init (uniform fan-in, BN gamma=1/beta=0)
# --------------------------------------------------------------------------
def init_params(key):
    ks = jax.random.split(key, 10)

    def u(k, shape, fan_in):
        bound = float(fan_in) ** -0.5
        return jax.random.uniform(k, shape, jnp.float32, -bound, bound)

    return {
        "w_conv1": u(ks[0], (6, 1, 3, 3), 9),
        "b_conv1": u(ks[1], (6,), 9),
        "w_conv2": u(ks[2], (16, 6, 5, 5), 150),
        "b_conv2": u(ks[3], (16,), 150),
        "W1": u(ks[4], (128, 400), 400), "b1": u(ks[5], (128,), 400),
        "g1": jnp.ones((128,), jnp.float32), "be1": jnp.zeros((128,), jnp.float32),
        "W2": u(ks[6], (84, 128), 128), "b2": u(ks[7], (84,), 128),
        "g2": jnp.ones((84,), jnp.float32), "be2": jnp.zeros((84,), jnp.float32),
        "W3": u(ks[8], (10, 84), 84), "b3": u(ks[9], (10,), 84),
    }


if __name__ == "__main__":
    key = jax.random.PRNGKey(0)
    k_param, k_x = jax.random.split(key)
    params = init_params(k_param)
    kparams = prepare_params(params)

    # MNIST-sized input is required (fc1 expects 16*5*5 = 400 flattened features).
    x = jax.random.normal(k_x, (2, 1, 28, 28), jnp.float32)

    logits, featuremap = lenet_forward(x, kparams)
    jax.block_until_ready((logits, featuremap))

    assert logits.shape == (2, 10) and featuremap.shape == (2, 128)
    assert bool(jnp.all(jnp.isfinite(logits))) and bool(jnp.all(jnp.isfinite(featuremap)))
    print("KERNEL_OK")
</pallas_src>

<mosaic_0001>
module attributes {stable_mosaic.version = 11 : i64} {
  func.func @_fc_head_kernel(%arg0: memref<2x512xf32, #tpu.memory_space<vmem>>, %arg1: memref<512x128xbf16, #tpu.memory_space<vmem>>, %arg2: memref<1x128xf32, #tpu.memory_space<vmem>>, %arg3: memref<1x128xf32, #tpu.memory_space<vmem>>, %arg4: memref<1x128xf32, #tpu.memory_space<vmem>>, %arg5: memref<128x84xbf16, #tpu.memory_space<vmem>>, %arg6: memref<1x84xf32, #tpu.memory_space<vmem>>, %arg7: memref<1x84xf32, #tpu.memory_space<vmem>>, %arg8: memref<1x84xf32, #tpu.memory_space<vmem>>, %arg9: memref<84x128xbf16, #tpu.memory_space<vmem>>, %arg10: memref<1x128xf32, #tpu.memory_space<vmem>>, %arg11: memref<2x128xf32, #tpu.memory_space<vmem>>, %arg12: memref<2x128xf32, #tpu.memory_space<vmem>>) attributes {dimension_semantics = [], scalar_prefetch = 0 : i64, scratch_operands = 0 : i64, tpu.core_type = #tpu.core_type<tc>} {
    %c0 = arith.constant 0 : index
    %c0_0 = arith.constant 0 : index
    %0 = vector.load %arg0[%c0, %c0_0] : memref<2x512xf32, #tpu.memory_space<vmem>>, vector<2x512xf32>
    %1 = arith.truncf %0 : vector<2x512xf32> to vector<2x512xbf16>
    %c0_1 = arith.constant 0 : index
    %c0_2 = arith.constant 0 : index
    %2 = vector.load %arg1[%c0_1, %c0_2] : memref<512x128xbf16, #tpu.memory_space<vmem>>, vector<512x128xbf16>
    %cst = arith.constant dense<0.000000e+00> : vector<2x128xf32>
    %3 = tpu.matmul %1, %2, %cst {dimension_numbers = #tpu.dot_dimension_numbers<[1], [0], [0], [1], [0, 0, 1, 1], [], []>} : vector<2x512xbf16>, vector<512x128xbf16>, vector<2x128xf32> -> vector<2x128xf32>
    %c0_3 = arith.constant 0 : index
    %c0_4 = arith.constant 0 : index
    %4 = vector.load %arg2[%c0_3, %c0_4] : memref<1x128xf32, #tpu.memory_space<vmem>>, vector<1x128xf32>
    %5 = vector.broadcast %4 : vector<1x128xf32> to vector<2x128xf32>
    %6 = arith.addf %3, %5 : vector<2x128xf32>
    %cst_5 = arith.constant dense<0.000000e+00> : vector<128xf32>
    %7 = vector.multi_reduction <add>, %6, %cst_5 [0] : vector<2x128xf32> to vector<128xf32>
    %8 = vector.shape_cast %7 : vector<128xf32> to vector<1x128xf32>
    %cst_6 = arith.constant 2.000000e+00 : f32
    %9 = vector.broadcast %cst_6 : f32 to vector<1x128xf32>
    %10 = arith.divf %8, %9 : vector<1x128xf32>
    %11 = vector.broadcast %10 : vector<1x128xf32> to vector<2x128xf32>
    %12 = arith.subf %6, %11 : vector<2x128xf32>
    %13 = arith.mulf %12, %12 : vector<2x128xf32>
    %cst_7 = arith.constant dense<0.000000e+00> : vector<128xf32>
    %14 = vector.multi_reduction <add>, %13, %cst_7 [0] : vector<2x128xf32> to vector<128xf32>
    %15 = vector.shape_cast %14 : vector<128xf32> to vector<1x128xf32>
    %cst_8 = arith.constant 2.000000e+00 : f32
    %16 = vector.broadcast %cst_8 : f32 to vector<1x128xf32>
    %17 = arith.divf %15, %16 : vector<1x128xf32>
    %c0_9 = arith.constant 0 : index
    %c0_10 = arith.constant 0 : index
    %18 = vector.load %arg3[%c0_9, %c0_10] : memref<1x128xf32, #tpu.memory_space<vmem>>, vector<1x128xf32>
    %19 = vector.broadcast %10 : vector<1x128xf32> to vector<2x128xf32>
    %20 = arith.subf %6, %19 : vector<2x128xf32>
    %21 = vector.broadcast %18 : vector<1x128xf32> to vector<2x128xf32>
    %22 = arith.mulf %21, %20 : vector<2x128xf32>
    %cst_11 = arith.constant 9.99999974E-6 : f32
    %23 = vector.broadcast %cst_11 : f32 to vector<1x128xf32>
    %24 = arith.addf %17, %23 : vector<1x128xf32>
    %25 = math.rsqrt %24 : vector<1x128xf32>
    %26 = vector.broadcast %25 : vector<1x128xf32> to vector<2x128xf32>
    %27 = arith.mulf %22, %26 : vector<2x128xf32>
    %c0_12 = arith.constant 0 : index
    %c0_13 = arith.constant 0 : index
    %28 = vector.load %arg4[%c0_12, %c0_13] : memref<1x128xf32, #tpu.memory_space<vmem>>, vector<1x128xf32>
    %29 = vector.broadcast %28 : vector<1x128xf32> to vector<2x128xf32>
    %30 = arith.addf %27, %29 : vector<2x128xf32>
    %cst_14 = arith.constant 0.000000e+00 : f32
    %31 = vector.broadcast %cst_14 : f32 to vector<2x128xf32>
    %32 = arith.maximumf %30, %31 : vector<2x128xf32>
    %33 = arith.truncf %32 : vector<2x128xf32> to vector<2x128xbf16>
    %c0_15 = arith.constant 0 : index
    %c0_16 = arith.constant 0 : index
    %34 = vector.load %arg5[%c0_15, %c0_16] : memref<128x84xbf16, #tpu.memory_space<vmem>>, vector<128x84xbf16>
    %cst_17 = arith.constant dense<0.000000e+00> : vector<2x84xf32>
    %35 = tpu.matmul %33, %34, %cst_17 {dimension_numbers = #tpu.dot_dimension_numbers<[1], [0], [0], [1], [0, 0, 1, 1], [], []>} : vector<2x128xbf16>, vector<128x84xbf16>, vector<2x84xf32> -> vector<2x84xf32>
    %c0_18 = arith.constant 0 : index
    %c0_19 = arith.constant 0 : index
    %36 = vector.load %arg6[%c0_18, %c0_19] : memref<1x84xf32, #tpu.memory_space<vmem>>, vector<1x84xf32>
    %37 = vector.broadcast %36 : vector<1x84xf32> to vector<2x84xf32>
    %38 = arith.addf %35, %37 : vector<2x84xf32>
    %cst_20 = arith.constant dense<0.000000e+00> : vector<84xf32>
    %39 = vector.multi_reduction <add>, %38, %cst_20 [0] : vector<2x84xf32> to vector<84xf32>
    %40 = vector.shape_cast %39 : vector<84xf32> to vector<1x84xf32>
    %cst_21 = arith.constant 2.000000e+00 : f32
    %41 = vector.broadcast %cst_21 : f32 to vector<1x84xf32>
    %42 = arith.divf %40, %41 : vector<1x84xf32>
    %43 = vector.broadcast %42 : vector<1x84xf32> to vector<2x84xf32>
    %44 = arith.subf %38, %43 : vector<2x84xf32>
    %45 = arith.mulf %44, %44 : vector<2x84xf32>
    %cst_22 = arith.constant dense<0.000000e+00> : vector<84xf32>
    %46 = vector.multi_reduction <add>, %45, %cst_22 [0] : vector<2x84xf32> to vector<84xf32>
    %47 = vector.shape_cast %46 : vector<84xf32> to vector<1x84xf32>
    %cst_23 = arith.constant 2.000000e+00 : f32
    %48 = vector.broadcast %cst_23 : f32 to vector<1x84xf32>
    %49 = arith.divf %47, %48 : vector<1x84xf32>
    %c0_24 = arith.constant 0 : index
    %c0_25 = arith.constant 0 : index
    %50 = vector.load %arg7[%c0_24, %c0_25] : memref<1x84xf32, #tpu.memory_space<vmem>>, vector<1x84xf32>
    %51 = vector.broadcast %42 : vector<1x84xf32> to vector<2x84xf32>
    %52 = arith.subf %38, %51 : vector<2x84xf32>
    %53 = vector.broadcast %50 : vector<1x84xf32> to vector<2x84xf32>
    %54 = arith.mulf %53, %52 : vector<2x84xf32>
    %cst_26 = arith.constant 9.99999974E-6 : f32
    %55 = vector.broadcast %cst_26 : f32 to vector<1x84xf32>
    %56 = arith.addf %49, %55 : vector<1x84xf32>
    %57 = math.rsqrt %56 : vector<1x84xf32>
    %58 = vector.broadcast %57 : vector<1x84xf32> to vector<2x84xf32>
    %59 = arith.mulf %54, %58 : vector<2x84xf32>
    %c0_27 = arith.constant 0 : index
    %c0_28 = arith.constant 0 : index
    %60 = vector.load %arg8[%c0_27, %c0_28] : memref<1x84xf32, #tpu.memory_space<vmem>>, vector<1x84xf32>
    %61 = vector.broadcast %60 : vector<1x84xf32> to vector<2x84xf32>
    %62 = arith.addf %59, %61 : vector<2x84xf32>
    %cst_29 = arith.constant 0.000000e+00 : f32
    %63 = vector.broadcast %cst_29 : f32 to vector<2x84xf32>
    %64 = arith.maximumf %62, %63 : vector<2x84xf32>
    %65 = arith.truncf %64 : vector<2x84xf32> to vector<2x84xbf16>
    %c0_30 = arith.constant 0 : index
    %c0_31 = arith.constant 0 : index
    %66 = vector.load %arg9[%c0_30, %c0_31] : memref<84x128xbf16, #tpu.memory_space<vmem>>, vector<84x128xbf16>
    %cst_32 = arith.constant dense<0.000000e+00> : vector<2x128xf32>
    %67 = tpu.matmul %65, %66, %cst_32 {dimension_numbers = #tpu.dot_dimension_numbers<[1], [0], [0], [1], [0, 0, 1, 1], [], []>} : vector<2x84xbf16>, vector<84x128xbf16>, vector<2x128xf32> -> vector<2x128xf32>
    %c0_33 = arith.constant 0 : index
    %c0_34 = arith.constant 0 : index
    %68 = vector.load %arg10[%c0_33, %c0_34] : memref<1x128xf32, #tpu.memory_space<vmem>>, vector<1x128xf32>
    %69 = vector.broadcast %68 : vector<1x128xf32> to vector<2x128xf32>
    %70 = arith.addf %67, %69 : vector<2x128xf32>
    %c0_35 = arith.constant 0 : index
    %c0_36 = arith.constant 0 : index
    %71 = vector.load %arg11[%c0_35, %c0_36] : memref<2x128xf32, #tpu.memory_space<vmem>>, vector<2x128xf32>
    tpu.vector_store %arg11[%c0_35, %c0_36], %70 {strides = array<i32>} : memref<2x128xf32, #tpu.memory_space<vmem>>, vector<2x128xf32>,
    %c0_37 = arith.constant 0 : index
    %c0_38 = arith.constant 0 : index
    %72 = vector.load %arg12[%c0_37, %c0_38] : memref<2x128xf32, #tpu.memory_space<vmem>>, vector<2x128xf32>
    tpu.vector_store %arg12[%c0_37, %c0_38], %32 {strides = array<i32>} : memref<2x128xf32, #tpu.memory_space<vmem>>, vector<2x128xf32>,
    return
  }
}

module attributes {stable_mosaic.version = 11 : i64} {
  func.func @_conv_backbone_kernel(%arg0: i32, %arg1: memref<2x32x32xf32, #tpu.memory_space<vmem>>, %arg2: memref<3x32x180xf32, #tpu.memory_space<vmem>>, %arg3: memref<1x180xf32, #tpu.memory_space<vmem>>, %arg4: memref<5x90x176xbf16, #tpu.memory_space<vmem>>, %arg5: memref<1x176xf32, #tpu.memory_space<vmem>>, %arg6: memref<2x512xf32, #tpu.memory_space<vmem>>) attributes {dimension_semantics = [#tpu.dimension_semantics<parallel>], iteration_bounds = array<i64: 1>, scalar_prefetch = 0 : i64, scratch_operands = 0 : i64, tpu.core_type = #tpu.core_type<tc>, window_params = [{transform_indices = @transform_0, window_bounds = array<i64: 2, 32, 32>}, {pipeline_mode = #tpu.pipeline_mode<synchronous>, transform_indices = @transform_1, window_bounds = array<i64: 3, 32, 180>}, {pipeline_mode = #tpu.pipeline_mode<synchronous>, transform_indices = @transform_2, window_bounds = array<i64: 1, 180>}, {pipeline_mode = #tpu.pipeline_mode<synchronous>, transform_indices = @transform_3, window_bounds = array<i64: 5, 90, 176>}, {pipeline_mode = #tpu.pipeline_mode<synchronous>, transform_indices = @transform_4, window_bounds = array<i64: 1, 176>}, {transform_indices = @transform_5, window_bounds = array<i64: 2, 512>}]} {
    %c0 = arith.constant 0 : index
    %c0_0 = arith.constant 0 : index
    %c0_1 = arith.constant 0 : index
    %0 = vector.load %arg1[%c0, %c0_0, %c0_1] : memref<2x32x32xf32, #tpu.memory_space<vmem>>, vector<2x32x32xf32>
    %1 = vector.extract_strided_slice %0 {offsets = [0, 0, 0], sizes = [2, 30, 32], strides = [1, 1, 1]} : vector<2x32x32xf32> to vector<2x30x32xf32>
    %2 = vector.shape_cast %1 : vector<2x30x32xf32> to vector<60x32xf32>
    %c0_2 = arith.constant 0 : index
    %c0_3 = arith.constant 0 : index
    %c0_4 = arith.constant 0 : index
    %3 = vector.load %arg2[%c0_2, %c0_3, %c0_4] : memref<3x32x180xf32, #tpu.memory_space<vmem>>, vector<1x32x180xf32>
    %4 = vector.shape_cast %3 : vector<1x32x180xf32> to vector<32x180xf32>
    %cst = arith.constant dense<0.000000e+00> : vector<60x180xf32>
    %5 = tpu.matmul %2, %4, %cst {dimension_numbers = #tpu.dot_dimension_numbers<[1], [0], [0], [1], [0, 0, 1, 1], [], []>} : vector<60x32xf32>, vector<32x180xf32>, vector<60x180xf32> -> vector<60x180xf32>
    %6 = vector.extract_strided_slice %0 {offsets = [0, 1, 0], sizes = [2, 30, 32], strides = [1, 1, 1]} : vector<2x32x32xf32> to vector<2x30x32xf32>
    %7 = vector.shape_cast %6 : vector<2x30x32xf32> to vector<60x32xf32>
    %c1 = arith.constant 1 : index
    %c0_5 = arith.constant 0 : index
    %c0_6 = arith.constant 0 : index
    %8 = vector.load %arg2[%c1, %c0_5, %c0_6] : memref<3x32x180xf32, #tpu.memory_space<vmem>>, vector<1x32x180xf32>
    %9 = vector.shape_cast %8 : vector<1x32x180xf32> to vector<32x180xf32>
    %cst_7 = arith.constant dense<0.000000e+00> : vector<60x180xf32>
    %10 = tpu.matmul %7, %9, %cst_7 {dimension_numbers = #tpu.dot_dimension_numbers<[1], [0], [0], [1], [0, 0, 1, 1], [], []>} : vector<60x32xf32>, vector<32x180xf32>, vector<60x180xf32> -> vector<60x180xf32>
    %11 = arith.addf %5, %10 : vector<60x180xf32>
    %12 = vector.extract_strided_slice %0 {offsets = [0, 2, 0], sizes = [2, 30, 32], strides = [1, 1, 1]} : vector<2x32x32xf32> to vector<2x30x32xf32>
    %13 = vector.shape_cast %12 : vector<2x30x32xf32> to vector<60x32xf32>
    %c2 = arith.constant 2 : index
    %c0_8 = arith.constant 0 : index
    %c0_9 = arith.constant 0 : index
    %14 = vector.load %arg2[%c2, %c0_8, %c0_9] : memref<3x32x180xf32, #tpu.memory_space<vmem>>, vector<1x32x180xf32>
    %15 = vector.shape_cast %14 : vector<1x32x180xf32> to vector<32x180xf32>
    %cst_10 = arith.constant dense<0.000000e+00> : vector<60x180xf32>
    %16 = tpu.matmul %13, %15, %cst_10 {dimension_numbers = #tpu.dot_dimension_numbers<[1], [0], [0], [1], [0, 0, 1, 1], [], []>} : vector<60x32xf32>, vector<32x180xf32>, vector<60x180xf32> -> vector<60x180xf32>
    %17 = arith.addf %11, %16 : vector<60x180xf32>
    %c0_11 = arith.constant 0 : index
    %c0_12 = arith.constant 0 : index
    %18 = vector.load %arg3[%c0_11, %c0_12] : memref<1x180xf32, #tpu.memory_space<vmem>>, vector<1x180xf32>
    %19 = vector.broadcast %18 : vector<1x180xf32> to vector<60x180xf32>
    %20 = arith.addf %17, %19 : vector<60x180xf32>
    %cst_13 = arith.constant 0.000000e+00 : f32
    %21 = vector.broadcast %cst_13 : f32 to vector<60x180xf32>
    %22 = arith.maximumf %20, %21 : vector<60x180xf32>
    %23 = vector.shape_cast %22 : vector<60x180xf32> to vector<2x30x180xf32>
    %24 = vector.extract_strided_slice %23 {offsets = [0, 0, 0], sizes = [2, 30, 6], strides = [1, 1, 1]} : vector<2x30x180xf32> to vector<2x30x6xf32>
    %25 = vector.extract_strided_slice %23 {offsets = [0, 0, 6], sizes = [2, 30, 6], strides = [1, 1, 1]} : vector<2x30x180xf32> to vector<2x30x6xf32>
    %26 = arith.maximumf %24, %25 : vector<2x30x6xf32>
    %27 = vector.extract_strided_slice %23 {offsets = [0, 0, 12], sizes = [2, 30, 6], strides = [1, 1, 1]} : vector<2x30x180xf32> to vector<2x30x6xf32>
    %28 = vector.extract_strided_slice %23 {offsets = [0, 0, 18], sizes = [2, 30, 6], strides = [1, 1, 1]} : vector<2x30x180xf32> to vector<2x30x6xf32>
    %29 = arith.maximumf %27, %28 : vector<2x30x6xf32>
    %30 = vector.extract_strided_slice %23 {offsets = [0, 0, 24], sizes = [2, 30, 6], strides = [1, 1, 1]} : vector<2x30x180xf32> to vector<2x30x6xf32>
    %31 = vector.extract_strided_slice %23 {offsets = [0, 0, 30], sizes = [2, 30, 6], strides = [1, 1, 1]} : vector<2x30x180xf32> to vector<2x30x6xf32>
    %32 = arith.maximumf %30, %31 : vector<2x30x6xf32>
    %33 = vector.extract_strided_slice %23 {offsets = [0, 0, 36], sizes = [2, 30, 6], strides = [1, 1, 1]} : vector<2x30x180xf32> to vector<2x30x6xf32>
    %34 = vector.extract_strided_slice %23 {offsets = [0, 0, 42], sizes = [2, 30, 6], strides = [1, 1, 1]} : vector<2x30x180xf32> to vector<2x30x6xf32>
    %35 = arith.maximumf %33, %34 : vector<2x30x6xf32>
    %36 = vector.extract_strided_slice %23 {offsets = [0, 0, 48], sizes = [2, 30, 6], strides = [1, 1, 1]} : vector<2x30x180xf32> to vector<2x30x6xf32>
    %37 = vector.extract_strided_slice %23 {offsets = [0, 0, 54], sizes = [2, 30, 6], strides = [1, 1, 1]} : vector<2x30x180xf32> to vector<2x30x6xf32>
    %38 = arith.maximumf %36, %37 : vector<2x30x6xf32>
    %39 = vector.extract_strided_slice %23 {offsets = [0, 0, 60], sizes = [2, 30, 6], strides = [1, 1, 1]} : vector<2x30x180xf32> to vector<2x30x6xf32>
    %40 = vector.extract_strided_slice %23 {offsets = [0, 0, 66], sizes = [2, 30, 6], strides = [1, 1, 1]} : vector<2x30x180xf32> to vector<2x30x6xf32>
    %41 = arith.maximumf %39, %40 : vector<2x30x6xf32>
    %42 = vector.extract_strided_slice %23 {offsets = [0, 0, 72], sizes = [2, 30, 6], strides = [1, 1, 1]} : vector<2x30x180xf32> to vector<2x30x6xf32>
    %43 = vector.extract_strided_slice %23 {offsets = [0, 0, 78], sizes = [2, 30, 6], strides = [1, 1, 1]} : vector<2x30x180xf32> to vector<2x30x6xf32>
    %44 = arith.maximumf %42, %43 : vector<2x30x6xf32>
    %45 = vector.extract_strided_slice %23 {offsets = [0, 0, 84], sizes = [2, 30, 6], strides = [1, 1, 1]} : vector<2x30x180xf32> to vector<2x30x6xf32>
    %46 = vector.extract_strided_slice %23 {offsets = [0, 0, 90], sizes = [2, 30, 6], strides = [1, 1, 1]} : vector<2x30x180xf32> to vector<2x30x6xf32>
    %47 = arith.maximumf %45, %46 : vector<2x30x6xf32>
    %48 = vector.extract_strided_slice %23 {offsets = [0, 0, 96], sizes = [2, 30, 6], strides = [1, 1, 1]} : vector<2x30x180xf32> to vector<2x30x6xf32>
    %49 = vector.extract_strided_slice %23 {offsets = [0, 0, 102], sizes = [2, 30, 6], strides = [1, 1, 1]} : vector<2x30x180xf32> to vector<2x30x6xf32>
    %50 = arith.maximumf %48, %49 : vector<2x30x6xf32>
    %51 = vector.extract_strided_slice %23 {offsets = [0, 0, 108], sizes = [2, 30, 6], strides = [1, 1, 1]} : vector<2x30x180xf32> to vector<2x30x6xf32>
    %52 = vector.extract_strided_slice %23 {offsets = [0, 0, 114], sizes = [2, 30, 6], strides = [1, 1, 1]} : vector<2x30x180xf32> to vector<2x30x6xf32>
    %53 = arith.maximumf %51, %52 : vector<2x30x6xf32>
    %54 = vector.extract_strided_slice %23 {offsets = [0, 0, 120], sizes = [2, 30, 6], strides = [1, 1, 1]} : vector<2x30x180xf32> to vector<2x30x6xf32>
    %55 = vector.extract_strided_slice %23 {offsets = [0, 0, 126], sizes = [2, 30, 6], strides = [1, 1, 1]} : vector<2x30x180xf32> to vector<2x30x6xf32>
    %56 = arith.maximumf %54, %55 : vector<2x30x6xf32>
    %57 = vector.extract_strided_slice %23 {offsets = [0, 0, 132], sizes = [2, 30, 6], strides = [1, 1, 1]} : vector<2x30x180xf32> to vector<2x30x6xf32>
    %58 = vector.extract_strided_slice %23 {offsets = [0, 0, 138], sizes = [2, 30, 6], strides = [1, 1, 1]} : vector<2x30x180xf32> to vector<2x30x6xf32>
    %59 = arith.maximumf %57, %58 : vector<2x30x6xf32>
    %60 = vector.extract_strided_slice %23 {offsets = [0, 0, 144], sizes = [2, 30, 6], strides = [1, 1, 1]} : vector<2x30x180xf32> to vector<2x30x6xf32>
    %61 = vector.extract_strided_slice %23 {offsets = [0, 0, 150], sizes = [2, 30, 6], strides = [1, 1, 1]} : vector<2x30x180xf32> to vector<2x30x6xf32>
    %62 = arith.maximumf %60, %61 : vector<2x30x6xf32>
    %63 = vector.extract_strided_slice %23 {offsets = [0, 0, 156], sizes = [2, 30, 6], strides = [1, 1, 1]} : vector<2x30x180xf32> to vector<2x30x6xf32>
    %64 = vector.extract_strided_slice %23 {offsets = [0, 0, 162], sizes = [2, 30, 6], strides = [1, 1, 1]} : vector<2x30x180xf32> to vector<2x30x6xf32>
    %65 = arith.maximumf %63, %64 : vector<2x30x6xf32>
    %66 = vector.extract_strided_slice %23 {offsets = [0, 0, 168], sizes = [2, 30, 6], strides = [1, 1, 1]} : vector<2x30x180xf32> to vector<2x30x6xf32>
    %67 = vector.extract_strided_slice %23 {offsets = [0, 0, 174], sizes = [2, 30, 6], strides = [1, 1, 1]} : vector<2x30x180xf32> to vector<2x30x6xf32>
    %68 = arith.maximumf %66, %67 : vector<2x30x6xf32>
    %69 = tpu.concatenate %26, %29, %32, %35, %38, %41, %44, %47, %50, %53, %56, %59, %62, %65, %68 in 2 : vector<2x30x6xf32>, vector<2x30x6xf32>, vector<2x30x6xf32>, vector<2x30x6xf32>, vector<2x30x6xf32>, vector<2x30x6xf32>, vector<2x30x6xf32>, vector<2x30x6xf32>, vector<2x30x6xf32>, vector<2x30x6xf32>, vector<2x30x6xf32>, vector<2x30x6xf32>, vector<2x30x6xf32>, vector<2x30x6xf32>, vector<2x30x6xf32> -> vector<2x30x90xf32>
    %70 = vector.extract_strided_slice %69 {offsets = [0, 0, 0], sizes = [2, 1, 90], strides = [1, 1, 1]} : vector<2x30x90xf32> to vector<2x1x90xf32>
    %71 = vector.shape_cast %70 : vector<2x1x90xf32> to vector<2x90xf32>
    %72 = vector.extract_strided_slice %69 {offsets = [0, 1, 0], sizes = [2, 1, 90], strides = [1, 1, 1]} : vector<2x30x90xf32> to vector<2x1x90xf32>
    %73 = vector.shape_cast %72 : vector<2x1x90xf32> to vector<2x90xf32>
    %74 = arith.maximumf %71, %73 : vector<2x90xf32>
    %75 = vector.extract_strided_slice %69 {offsets = [0, 2, 0], sizes = [2, 1, 90], strides = [1, 1, 1]} : vector<2x30x90xf32> to vector<2x1x90xf32>
    %76 = vector.shape_cast %75 : vector<2x1x90xf32> to vector<2x90xf32>
    %77 = vector.extract_strided_slice %69 {offsets = [0, 3, 0], sizes = [2, 1, 90], strides = [1, 1, 1]} : vector<2x30x90xf32> to vector<2x1x90xf32>
    %78 = vector.shape_cast %77 : vector<2x1x90xf32> to vector<2x90xf32>
    %79 = arith.maximumf %76, %78 : vector<2x90xf32>
    %80 = vector.extract_strided_slice %69 {offsets = [0, 4, 0], sizes = [2, 1, 90], strides = [1, 1, 1]} : vector<2x30x90xf32> to vector<2x1x90xf32>
    %81 = vector.shape_cast %80 : vector<2x1x90xf32> to vector<2x90xf32>
    %82 = vector.extract_strided_slice %69 {offsets = [0, 5, 0], sizes = [2, 1, 90], strides = [1, 1, 1]} : vector<2x30x90xf32> to vector<2x1x90xf32>
    %83 = vector.shape_cast %82 : vector<2x1x90xf32> to vector<2x90xf32>
    %84 = arith.maximumf %81, %83 : vector<2x90xf32>
    %85 = vector.extract_strided_slice %69 {offsets = [0, 6, 0], sizes = [2, 1, 90], strides = [1, 1, 1]} : vector<2x30x90xf32> to vector<2x1x90xf32>
    %86 = vector.shape_cast %85 : vector<2x1x90xf32> to vector<2x90xf32>
    %87 = vector.extract_strided_slice %69 {offsets = [0, 7, 0], sizes = [2, 1, 90], strides = [1, 1, 1]} : vector<2x30x90xf32> to vector<2x1x90xf32>
    %88 = vector.shape_cast %87 : vector<2x1x90xf32> to vector<2x90xf32>
    %89 = arith.maximumf %86, %88 : vector<2x90xf32>
    %90 = vector.extract_strided_slice %69 {offsets = [0, 8, 0], sizes = [2, 1, 90], strides = [1, 1, 1]} : vector<2x30x90xf32> to vector<2x1x90xf32>
    %91 = vector.shape_cast %90 : vector<2x1x90xf32> to vector<2x90xf32>
    %92 = vector.extract_strided_slice %69 {offsets = [0, 9, 0], sizes = [2, 1, 90], strides = [1, 1, 1]} : vector<2x30x90xf32> to vector<2x1x90xf32>
    %93 = vector.shape_cast %92 : vector<2x1x90xf32> to vector<2x90xf32>
    %94 = arith.maximumf %91, %93 : vector<2x90xf32>
    %95 = vector.extract_strided_slice %69 {offsets = [0, 10, 0], sizes = [2, 1, 90], strides = [1, 1, 1]} : vector<2x30x90xf32> to vector<2x1x90xf32>
    %96 = vector.shape_cast %95 : vector<2x1x90xf32> to vector<2x90xf32>
    %97 = vector.extract_strided_slice %69 {offsets = [0, 11, 0], sizes = [2, 1, 90], strides = [1, 1, 1]} : vector<2x30x90xf32> to vector<2x1x90xf32>
    %98 = vector.shape_cast %97 : vector<2x1x90xf32> to vector<2x90xf32>
    %99 = arith.maximumf %96, %98 : vector<2x90xf32>
    %100 = vector.extract_strided_slice %69 {offsets = [0, 12, 0], sizes = [2, 1, 90], strides = [1, 1, 1]} : vector<2x30x90xf32> to vector<2x1x90xf32>
    %101 = vector.shape_cast %100 : vector<2x1x90xf32> to vector<2x90xf32>
    %102 = vector.extract_strided_slice %69 {offsets = [0, 13, 0], sizes = [2, 1, 90], strides = [1, 1, 1]} : vector<2x30x90xf32> to vector<2x1x90xf32>
    %103 = vector.shape_cast %102 : vector<2x1x90xf32> to vector<2x90xf32>
    %104 = arith.maximumf %101, %103 : vector<2x90xf32>
    %105 = vector.extract_strided_slice %69 {offsets = [0, 14, 0], sizes = [2, 1, 90], strides = [1, 1, 1]} : vector<2x30x90xf32> to vector<2x1x90xf32>
    %106 = vector.shape_cast %105 : vector<2x1x90xf32> to vector<2x90xf32>
    %107 = vector.extract_strided_slice %69 {offsets = [0, 15, 0], sizes = [2, 1, 90], strides = [1, 1, 1]} : vector<2x30x90xf32> to vector<2x1x90xf32>
    %108 = vector.shape_cast %107 : vector<2x1x90xf32> to vector<2x90xf32>
    %109 = arith.maximumf %106, %108 : vector<2x90xf32>
    %110 = vector.extract_strided_slice %69 {offsets = [0, 16, 0], sizes = [2, 1, 90], strides = [1, 1, 1]} : vector<2x30x90xf32> to vector<2x1x90xf32>
    %111 = vector.shape_cast %110 : vector<2x1x90xf32> to vector<2x90xf32>
    %112 = vector.extract_strided_slice %69 {offsets = [0, 17, 0], sizes = [2, 1, 90], strides = [1, 1, 1]} : vector<2x30x90xf32> to vector<2x1x90xf32>
    %113 = vector.shape_cast %112 : vector<2x1x90xf32> to vector<2x90xf32>
    %114 = arith.maximumf %111, %113 : vector<2x90xf32>
    %115 = vector.extract_strided_slice %69 {offsets = [0, 18, 0], sizes = [2, 1, 90], strides = [1, 1, 1]} : vector<2x30x90xf32> to vector<2x1x90xf32>
    %116 = vector.shape_cast %115 : vector<2x1x90xf32> to vector<2x90xf32>
    %117 = vector.extract_strided_slice %69 {offsets = [0, 19, 0], sizes = [2, 1, 90], strides = [1, 1, 1]} : vector<2x30x90xf32> to vector<2x1x90xf32>
    %118 = vector.shape_cast %117 : vector<2x1x90xf32> to vector<2x90xf32>
    %119 = arith.maximumf %116, %118 : vector<2x90xf32>
    %120 = vector.extract_strided_slice %69 {offsets = [0, 20, 0], sizes = [2, 1, 90], strides = [1, 1, 1]} : vector<2x30x90xf32> to vector<2x1x90xf32>
    %121 = vector.shape_cast %120 : vector<2x1x90xf32> to vector<2x90xf32>
    %122 = vector.extract_strided_slice %69 {offsets = [0, 21, 0], sizes = [2, 1, 90], strides = [1, 1, 1]} : vector<2x30x90xf32> to vector<2x1x90xf32>
    %123 = vector.shape_cast %122 : vector<2x1x90xf32> to vector<2x90xf32>
    %124 = arith.maximumf %121, %123 : vector<2x90xf32>
    %125 = vector.extract_strided_slice %69 {offsets = [0, 22, 0], sizes = [2, 1, 90], strides = [1, 1, 1]} : vector<2x30x90xf32> to vector<2x1x90xf32>
    %126 = vector.shape_cast %125 : vector<2x1x90xf32> to vector<2x90xf32>
    %127 = vector.extract_strided_slice %69 {offsets = [0, 23, 0], sizes = [2, 1, 90], strides = [1, 1, 1]} : vector<2x30x90xf32> to vector<2x1x90xf32>
    %128 = vector.shape_cast %127 : vector<2x1x90xf32> to vector<2x90xf32>
    %129 = arith.maximumf %126, %128 : vector<2x90xf32>
    %130 = vector.extract_strided_slice %69 {offsets = [0, 24, 0], sizes = [2, 1, 90], strides = [1, 1, 1]} : vector<2x30x90xf32> to vector<2x1x90xf32>
    %131 = vector.shape_cast %130 : vector<2x1x90xf32> to vector<2x90xf32>
    %132 = vector.extract_strided_slice %69 {offsets = [0, 25, 0], sizes = [2, 1, 90], strides = [1, 1, 1]} : vector<2x30x90xf32> to vector<2x1x90xf32>
    %133 = vector.shape_cast %132 : vector<2x1x90xf32> to vector<2x90xf32>
    %134 = arith.maximumf %131, %133 : vector<2x90xf32>
    %135 = vector.extract_strided_slice %69 {offsets = [0, 26, 0], sizes = [2, 1, 90], strides = [1, 1, 1]} : vector<2x30x90xf32> to vector<2x1x90xf32>
    %136 = vector.shape_cast %135 : vector<2x1x90xf32> to vector<2x90xf32>
    %137 = vector.extract_strided_slice %69 {offsets = [0, 27, 0], sizes = [2, 1, 90], strides = [1, 1, 1]} : vector<2x30x90xf32> to vector<2x1x90xf32>
    %138 = vector.shape_cast %137 : vector<2x1x90xf32> to vector<2x90xf32>
    %139 = arith.maximumf %136, %138 : vector<2x90xf32>
    %140 = vector.extract_strided_slice %69 {offsets = [0, 28, 0], sizes = [2, 1, 90], strides = [1, 1, 1]} : vector<2x30x90xf32> to vector<2x1x90xf32>
    %141 = vector.shape_cast %140 : vector<2x1x90xf32> to vector<2x90xf32>
    %142 = vector.extract_strided_slice %69 {offsets = [0, 29, 0], sizes = [2, 1, 90], strides = [1, 1, 1]} : vector<2x30x90xf32> to vector<2x1x90xf32>
    %143 = vector.shape_cast %142 : vector<2x1x90xf32> to vector<2x90xf32>
    %144 = arith.maximumf %141, %143 : vector<2x90xf32>
    %145 = tpu.concatenate %74, %79, %84, %89, %94, %99, %104, %109, %114, %119, %124, %129, %134, %139, %144 in 0 : vector<2x90xf32>, vector<2x90xf32>, vector<2x90xf32>, vector<2x90xf32>, vector<2x90xf32>, vector<2x90xf32>, vector<2x90xf32>, vector<2x90xf32>, vector<2x90xf32>, vector<2x90xf32>, vector<2x90xf32>, vector<2x90xf32>, vector<2x90xf32>, vector<2x90xf32>, vector<2x90xf32> -> vector<30x90xf32>
    %146 = vector.shape_cast %145 : vector<30x90xf32> to vector<15x2x90xf32>
    %147 = vector.extract_strided_slice %146 {offsets = [0, 0, 0], sizes = [11, 2, 90], strides = [1, 1, 1]} : vector<15x2x90xf32> to vector<11x2x90xf32>
    %148 = vector.shape_cast %147 : vector<11x2x90xf32> to vector<22x90xf32>
    %149 = arith.truncf %148 : vector<22x90xf32> to vector<22x90xbf16>
    %c0_14 = arith.constant 0 : index
    %c0_15 = arith.constant 0 : index
    %c0_16 = arith.constant 0 : index
    %150 = vector.load %arg4[%c0_14, %c0_15, %c0_16] : memref<5x90x176xbf16, #tpu.memory_space<vmem>>, vector<1x90x176xbf16>
    %151 = vector.shape_cast %150 : vector<1x90x176xbf16> to vector<90x176xbf16>
    %cst_17 = arith.constant dense<0.000000e+00> : vector<22x176xf32>
    %152 = tpu.matmul %149, %151, %cst_17 {dimension_numbers = #tpu.dot_dimension_numbers<[1], [0], [0], [1], [0, 0, 1, 1], [], []>} : vector<22x90xbf16>, vector<90x176xbf16>, vector<22x176xf32> -> vector<22x176xf32>
    %153 = vector.extract_strided_slice %146 {offsets = [1, 0, 0], sizes = [11, 2, 90], strides = [1, 1, 1]} : vector<15x2x90xf32> to vector<11x2x90xf32>
    %154 = vector.shape_cast %153 : vector<11x2x90xf32> to vector<22x90xf32>
    %155 = arith.truncf %154 : vector<22x90xf32> to vector<22x90xbf16>
    %c1_18 = arith.constant 1 : index
    %c0_19 = arith.constant 0 : index
    %c0_20 = arith.constant 0 : index
    %156 = vector.load %arg4[%c1_18, %c0_19, %c0_20] : memref<5x90x176xbf16, #tpu.memory_space<vmem>>, vector<1x90x176xbf16>
    %157 = vector.shape_cast %156 : vector<1x90x176xbf16> to vector<90x176xbf16>
    %cst_21 = arith.constant dense<0.000000e+00> : vector<22x176xf32>
    %158 = tpu.matmul %155, %157, %cst_21 {dimension_numbers = #tpu.dot_dimension_numbers<[1], [0], [0], [1], [0, 0, 1, 1], [], []>} : vector<22x90xbf16>, vector<90x176xbf16>, vector<22x176xf32> -> vector<22x176xf32>
    %159 = arith.addf %152, %158 : vector<22x176xf32>
    %160 = vector.extract_strided_slice %146 {offsets = [2, 0, 0], sizes = [11, 2, 90], strides = [1, 1, 1]} : vector<15x2x90xf32> to vector<11x2x90xf32>
    %161 = vector.shape_cast %160 : vector<11x2x90xf32> to vector<22x90xf32>
    %162 = arith.truncf %161 : vector<22x90xf32> to vector<22x90xbf16>
    %c2_22 = arith.constant 2 : index
    %c0_23 = arith.constant 0 : index
    %c0_24 = arith.constant 0 : index
    %163 = vector.load %arg4[%c2_22, %c0_23, %c0_24] : memref<5x90x176xbf16, #tpu.memory_space<vmem>>, vector<1x90x176xbf16>
    %164 = vector.shape_cast %163 : vector<1x90x176xbf16> to vector<90x176xbf16>
    %cst_25 = arith.constant dense<0.000000e+00> : vector<22x176xf32>
    %165 = tpu.matmul %162, %164, %cst_25 {dimension_numbers = #tpu.dot_dimension_numbers<[1], [0], [0], [1], [0, 0, 1, 1], [], []>} : vector<22x90xbf16>, vector<90x176xbf16>, vector<22x176xf32> -> vector<22x176xf32>
    %166 = arith.addf %159, %165 : vector<22x176xf32>
    %167 = vector.extract_strided_slice %146 {offsets = [3, 0, 0], sizes = [11, 2, 90], strides = [1, 1, 1]} : vector<15x2x90xf32> to vector<11x2x90xf32>
    %168 = vector.shape_cast %167 : vector<11x2x90xf32> to vector<22x90xf32>
    %169 = arith.truncf %168 : vector<22x90xf32> to vector<22x90xbf16>
    %c3 = arith.constant 3 : index
    %c0_26 = arith.constant 0 : index
    %c0_27 = arith.constant 0 : index
    %170 = vector.load %arg4[%c3, %c0_26, %c0_27] : memref<5x90x176xbf16, #tpu.memory_space<vmem>>, vector<1x90x176xbf16>
    %171 = vector.shape_cast %170 : vector<1x90x176xbf16> to vector<90x176xbf16>
    %cst_28 = arith.constant dense<0.000000e+00> : vector<22x176xf32>
    %172 = tpu.matmul %169, %171, %cst_28 {dimension_numbers = #tpu.dot_dimension_numbers<[1], [0], [0], [1], [0, 0, 1, 1], [], []>} : vector<22x90xbf16>, vector<90x176xbf16>, vector<22x176xf32> -> vector<22x176xf32>
    %173 = arith.addf %166, %172 : vector<22x176xf32>
    %174 = vector.extract_strided_slice %146 {offsets = [4, 0, 0], sizes = [11, 2, 90], strides = [1, 1, 1]} : vector<15x2x90xf32> to vector<11x2x90xf32>
    %175 = vector.shape_cast %174 : vector<11x2x90xf32> to vector<22x90xf32>
    %176 = arith.truncf %175 : vector<22x90xf32> to vector<22x90xbf16>
    %c4 = arith.constant 4 : index
    %c0_29 = arith.constant 0 : index
    %c0_30 = arith.constant 0 : index
    %177 = vector.load %arg4[%c4, %c0_29, %c0_30] : memref<5x90x176xbf16, #tpu.memory_space<vmem>>, vector<1x90x176xbf16>
    %178 = vector.shape_cast %177 : vector<1x90x176xbf16> to vector<90x176xbf16>
    %cst_31 = arith.constant dense<0.000000e+00> : vector<22x176xf32>
    %179 = tpu.matmul %176, %178, %cst_31 {dimension_numbers = #tpu.dot_dimension_numbers<[1], [0], [0], [1], [0, 0, 1, 1], [], []>} : vector<22x90xbf16>, vector<90x176xbf16>, vector<22x176xf32> -> vector<22x176xf32>
    %180 = arith.addf %173, %179 : vector<22x176xf32>
    %c0_32 = arith.constant 0 : index
    %c0_33 = arith.constant 0 : index
    %181 = vector.load %arg5[%c0_32, %c0_33] : memref<1x176xf32, #tpu.memory_space<vmem>>, vector<1x176xf32>
    %182 = vector.broadcast %181 : vector<1x176xf32> to vector<22x176xf32>
    %183 = arith.addf %180, %182 : vector<22x176xf32>
    %cst_34 = arith.constant 0.000000e+00 : f32
    %184 = vector.broadcast %cst_34 : f32 to vector<22x176xf32>
    %185 = arith.maximumf %183, %184 : vector<22x176xf32>
    %186 = vector.shape_cast %185 : vector<22x176xf32> to vector<11x2x176xf32>
    %187 = vector.extract_strided_slice %186 {offsets = [0, 0, 0], sizes = [1, 2, 176], strides = [1, 1, 1]} : vector<11x2x176xf32> to vector<1x2x176xf32>
    %188 = vector.shape_cast %187 : vector<1x2x176xf32> to vector<2x176xf32>
    %189 = vector.extract_strided_slice %186 {offsets = [1, 0, 0], sizes = [1, 2, 176], strides = [1, 1, 1]} : vector<11x2x176xf32> to vector<1x2x176xf32>
    %190 = vector.shape_cast %189 : vector<1x2x176xf32> to vector<2x176xf32>
    %191 = arith.maximumf %188, %190 : vector<2x176xf32>
    %192 = vector.extract_strided_slice %191 {offsets = [0, 0], sizes = [2, 16], strides = [1, 1]} : vector<2x176xf32> to vector<2x16xf32>
    %193 = vector.extract_strided_slice %191 {offsets = [0, 16], sizes = [2, 16], strides = [1, 1]} : vector<2x176xf32> to vector<2x16xf32>
    %194 = arith.maximumf %192, %193 : vector<2x16xf32>
    %195 = vector.extract_strided_slice %191 {offsets = [0, 32], sizes = [2, 16], strides = [1, 1]} : vector<2x176xf32> to vector<2x16xf32>
    %196 = vector.extract_strided_slice %191 {offsets = [0, 48], sizes = [2, 16], strides = [1, 1]} : vector<2x176xf32> to vector<2x16xf32>
    %197 = arith.maximumf %195, %196 : vector<2x16xf32>
    %198 = vector.extract_strided_slice %191 {offsets = [0, 64], sizes = [2, 16], strides = [1, 1]} : vector<2x176xf32> to vector<2x16xf32>
    %199 = vector.extract_strided_slice %191 {offsets = [0, 80], sizes = [2, 16], strides = [1, 1]} : vector<2x176xf32> to vector<2x16xf32>
    %200 = arith.maximumf %198, %199 : vector<2x16xf32>
    %201 = vector.extract_strided_slice %191 {offsets = [0, 96], sizes = [2, 16], strides = [1, 1]} : vector<2x176xf32> to vector<2x16xf32>
    %202 = vector.extract_strided_slice %191 {offsets = [0, 112], sizes = [2, 16], strides = [1, 1]} : vector<2x176xf32> to vector<2x16xf32>
    %203 = arith.maximumf %201, %202 : vector<2x16xf32>
    %204 = vector.extract_strided_slice %191 {offsets = [0, 128], sizes = [2, 16], strides = [1, 1]} : vector<2x176xf32> to vector<2x16xf32>
    %205 = vector.extract_strided_slice %191 {offsets = [0, 144], sizes = [2, 16], strides = [1, 1]} : vector<2x176xf32> to vector<2x16xf32>
    %206 = arith.maximumf %204, %205 : vector<2x16xf32>
    %207 = vector.extract_strided_slice %186 {offsets = [2, 0, 0], sizes = [1, 2, 176], strides = [1, 1, 1]} : vector<11x2x176xf32> to vector<1x2x176xf32>
    %208 = vector.shape_cast %207 : vector<1x2x176xf32> to vector<2x176xf32>
    %209 = vector.extract_strided_slice %186 {offsets = [3, 0, 0], sizes = [1, 2, 176], strides = [1, 1, 1]} : vector<11x2x176xf32> to vector<1x2x176xf32>
    %210 = vector.shape_cast %209 : vector<1x2x176xf32> to vector<2x176xf32>
    %211 = arith.maximumf %208, %210 : vector<2x176xf32>
    %212 = vector.extract_strided_slice %211 {offsets = [0, 0], sizes = [2, 16], strides = [1, 1]} : vector<2x176xf32> to vector<2x16xf32>
    %213 = vector.extract_strided_slice %211 {offsets = [0, 16], sizes = [2, 16], strides = [1, 1]} : vector<2x176xf32> to vector<2x16xf32>
    %214 = arith.maximumf %212, %213 : vector<2x16xf32>
    %215 = vector.extract_strided_slice %211 {offsets = [0, 32], sizes = [2, 16], strides = [1, 1]} : vector<2x176xf32> to vector<2x16xf32>
    %216 = vector.extract_strided_slice %211 {offsets = [0, 48], sizes = [2, 16], strides = [1, 1]} : vector<2x176xf32> to vector<2x16xf32>
    %217 = arith.maximumf %215, %216 : vector<2x16xf32>
    %218 = vector.extract_strided_slice %211 {offsets = [0, 64], sizes = [2, 16], strides = [1, 1]} : vector<2x176xf32> to vector<2x16xf32>
    %219 = vector.extract_strided_slice %211 {offsets = [0, 80], sizes = [2, 16], strides = [1, 1]} : vector<2x176xf32> to vector<2x16xf32>
    %220 = arith.maximumf %218, %219 : vector<2x16xf32>
    %221 = vector.extract_strided_slice %211 {offsets = [0, 96], sizes = [2, 16], strides = [1, 1]} : vector<2x176xf32> to vector<2x16xf32>
    %222 = vector.extract_strided_slice %211 {offsets = [0, 112], sizes = [2, 16], strides = [1, 1]} : vector<2x176xf32> to vector<2x16xf32>
    %223 = arith.maximumf %221, %222 : vector<2x16xf32>
    %224 = vector.extract_strided_slice %211 {offsets = [0, 128], sizes = [2, 16], strides = [1, 1]} : vector<2x176xf32> to vector<2x16xf32>
    %225 = vector.extract_strided_slice %211 {offsets = [0, 144], sizes = [2, 16], strides = [1, 1]} : vector<2x176xf32> to vector<2x16xf32>
    %226 = arith.maximumf %224, %225 : vector<2x16xf32>
    %227 = vector.extract_strided_slice %186 {offsets = [4, 0, 0], sizes = [1, 2, 176], strides = [1, 1, 1]} : vector<11x2x176xf32> to vector<1x2x176xf32>
    %228 = vector.shape_cast %227 : vector<1x2x176xf32> to vector<2x176xf32>
    %229 = vector.extract_strided_slice %186 {offsets = [5, 0, 0], sizes = [1, 2, 176], strides = [1, 1, 1]} : vector<11x2x176xf32> to vector<1x2x176xf32>
    %230 = vector.shape_cast %229 : vector<1x2x176xf32> to vector<2x176xf32>
    %231 = arith.maximumf %228, %230 : vector<2x176xf32>
    %232 = vector.extract_strided_slice %231 {offsets = [0, 0], sizes = [2, 16], strides = [1, 1]} : vector<2x176xf32> to vector<2x16xf32>
    %233 = vector.extract_strided_slice %231 {offsets = [0, 16], sizes = [2, 16], strides = [1, 1]} : vector<2x176xf32> to vector<2x16xf32>
    %234 = arith.maximumf %232, %233 : vector<2x16xf32>
    %235 = vector.extract_strided_slice %231 {offsets = [0, 32], sizes = [2, 16], strides = [1, 1]} : vector<2x176xf32> to vector<2x16xf32>
    %236 = vector.extract_strided_slice %231 {offsets = [0, 48], sizes = [2, 16], strides = [1, 1]} : vector<2x176xf32> to vector<2x16xf32>
    %237 = arith.maximumf %235, %236 : vector<2x16xf32>
    %238 = vector.extract_strided_slice %231 {offsets = [0, 64], sizes = [2, 16], strides = [1, 1]} : vector<2x176xf32> to vector<2x16xf32>
    %239 = vector.extract_strided_slice %231 {offsets = [0, 80], sizes = [2, 16], strides = [1, 1]} : vector<2x176xf32> to vector<2x16xf32>
    %240 = arith.maximumf %238, %239 : vector<2x16xf32>
    %241 = vector.extract_strided_slice %231 {offsets = [0, 96], sizes = [2, 16], strides = [1, 1]} : vector<2x176xf32> to vector<2x16xf32>
    %242 = vector.extract_strided_slice %231 {offsets = [0, 112], sizes = [2, 16], strides = [1, 1]} : vector<2x176xf32> to vector<2x16xf32>
    %243 = arith.maximumf %241, %242 : vector<2x16xf32>
    %244 = vector.extract_strided_slice %231 {offsets = [0, 128], sizes = [2, 16], strides = [1, 1]} : vector<2x176xf32> to vector<2x16xf32>
    %245 = vector.extract_strided_slice %231 {offsets = [0, 144], sizes = [2, 16], strides = [1, 1]} : vector<2x176xf32> to vector<2x16xf32>
    %246 = arith.maximumf %244, %245 : vector<2x16xf32>
    %247 = vector.extract_strided_slice %186 {offsets = [6, 0, 0], sizes = [1, 2, 176], strides = [1, 1, 1]} : vector<11x2x176xf32> to vector<1x2x176xf32>
    %248 = vector.shape_cast %247 : vector<1x2x176xf32> to vector<2x176xf32>
    %249 = vector.extract_strided_slice %186 {offsets = [7, 0, 0], sizes = [1, 2, 176], strides = [1, 1, 1]} : vector<11x2x176xf32> to vector<1x2x176xf32>
    %250 = vector.shape_cast %249 : vector<1x2x176xf32> to vector<2x176xf32>
    %251 = arith.maximumf %248, %250 : vector<2x176xf32>
    %252 = vector.extract_strided_slice %251 {offsets = [0, 0], sizes = [2, 16], strides = [1, 1]} : vector<2x176xf32> to vector<2x16xf32>
    %253 = vector.extract_strided_slice %251 {offsets = [0, 16], sizes = [2, 16], strides = [1, 1]} : vector<2x176xf32> to vector<2x16xf32>
    %254 = arith.maximumf %252, %253 : vector<2x16xf32>
    %255 = vector.extract_strided_slice %251 {offsets = [0, 32], sizes = [2, 16], strides = [1, 1]} : vector<2x176xf32> to vector<2x16xf32>
    %256 = vector.extract_strided_slice %251 {offsets = [0, 48], sizes = [2, 16], strides = [1, 1]} : vector<2x176xf32> to vector<2x16xf32>
    %257 = arith.maximumf %255, %256 : vector<2x16xf32>
    %258 = vector.extract_strided_slice %251 {offsets = [0, 64], sizes = [2, 16], strides = [1, 1]} : vector<2x176xf32> to vector<2x16xf32>
    %259 = vector.extract_strided_slice %251 {offsets = [0, 80], sizes = [2, 16], strides = [1, 1]} : vector<2x176xf32> to vector<2x16xf32>
    %260 = arith.maximumf %258, %259 : vector<2x16xf32>
    %261 = vector.extract_strided_slice %251 {offsets = [0, 96], sizes = [2, 16], strides = [1, 1]} : vector<2x176xf32> to vector<2x16xf32>
    %262 = vector.extract_strided_slice %251 {offsets = [0, 112], sizes = [2, 16], strides = [1, 1]} : vector<2x176xf32> to vector<2x16xf32>
    %263 = arith.maximumf %261, %262 : vector<2x16xf32>
    %264 = vector.extract_strided_slice %251 {offsets = [0, 128], sizes = [2, 16], strides = [1, 1]} : vector<2x176xf32> to vector<2x16xf32>
    %265 = vector.extract_strided_slice %251 {offsets = [0, 144], sizes = [2, 16], strides = [1, 1]} : vector<2x176xf32> to vector<2x16xf32>
    %266 = arith.maximumf %264, %265 : vector<2x16xf32>
    %267 = vector.extract_strided_slice %186 {offsets = [8, 0, 0], sizes = [1, 2, 176], strides = [1, 1, 1]} : vector<11x2x176xf32> to vector<1x2x176xf32>
    %268 = vector.shape_cast %267 : vector<1x2x176xf32> to vector<2x176xf32>
    %269 = vector.extract_strided_slice %186 {offsets = [9, 0, 0], sizes = [1, 2, 176], strides = [1, 1, 1]} : vector<11x2x176xf32> to vector<1x2x176xf32>
    %270 = vector.shape_cast %269 : vector<1x2x176xf32> to vector<2x176xf32>
    %271 = arith.maximumf %268, %270 : vector<2x176xf32>
    %272 = vector.extract_strided_slice %271 {offsets = [0, 0], sizes = [2, 16], strides = [1, 1]} : vector<2x176xf32> to vector<2x16xf32>
    %273 = vector.extract_strided_slice %271 {offsets = [0, 16], sizes = [2, 16], strides = [1, 1]} : vector<2x176xf32> to vector<2x16xf32>
    %274 = arith.maximumf %272, %273 : vector<2x16xf32>
    %275 = vector.extract_strided_slice %271 {offsets = [0, 32], sizes = [2, 16], strides = [1, 1]} : vector<2x176xf32> to vector<2x16xf32>
    %276 = vector.extract_strided_slice %271 {offsets = [0, 48], sizes = [2, 16], strides = [1, 1]} : vector<2x176xf32> to vector<2x16xf32>
    %277 = arith.maximumf %275, %276 : vector<2x16xf32>
    %278 = vector.extract_strided_slice %271 {offsets = [0, 64], sizes = [2, 16], strides = [1, 1]} : vector<2x176xf32> to vector<2x16xf32>
    %279 = vector.extract_strided_slice %271 {offsets = [0, 80], sizes = [2, 16], strides = [1, 1]} : vector<2x176xf32> to vector<2x16xf32>
    %280 = arith.maximumf %278, %279 : vector<2x16xf32>
    %281 = vector.extract_strided_slice %271 {offsets = [0, 96], sizes = [2, 16], strides = [1, 1]} : vector<2x176xf32> to vector<2x16xf32>
    %282 = vector.extract_strided_slice %271 {offsets = [0, 112], sizes = [2, 16], strides = [1, 1]} : vector<2x176xf32> to vector<2x16xf32>
    %283 = arith.maximumf %281, %282 : vector<2x16xf32>
    %284 = vector.extract_strided_slice %271 {offsets = [0, 128], sizes = [2, 16], strides = [1, 1]} : vector<2x176xf32> to vector<2x16xf32>
    %285 = vector.extract_strided_slice %271 {offsets = [0, 144], sizes = [2, 16], strides = [1, 1]} : vector<2x176xf32> to vector<2x16xf32>
    %286 = arith.maximumf %284, %285 : vector<2x16xf32>
    %cst_35 = arith.constant 0.000000e+00 : f32
    %287 = vector.broadcast %cst_35 : f32 to vector<2x112xf32>
    %288 = tpu.concatenate %194, %197, %200, %203, %206, %214, %217, %220, %223, %226, %234, %237, %240, %243, %246, %254 in 1 : vector<2x16xf32>, vector<2x16xf32>, vector<2x16xf32>, vector<2x16xf32>, vector<2x16xf32>, vector<2x16xf32>, vector<2x16xf32>, vector<2x16xf32>, vector<2x16xf32>, vector<2x16xf32>, vector<2x16xf32>, vector<2x16xf32>, vector<2x16xf32>, vector<2x16xf32>, vector<2x16xf32>, vector<2x16xf32> -> vector<2x256xf32>
    %289 = tpu.concatenate %257, %260, %263, %266, %274, %277, %280, %283, %286, %287 in 1 : vector<2x16xf32>, vector<2x16xf32>, vector<2x16xf32>, vector<2x16xf32>, vector<2x16xf32>, vector<2x16xf32>, vector<2x16xf32>, vector<2x16xf32>, vector<2x16xf32>, vector<2x112xf32> -> vector<2x256xf32>
    %290 = tpu.concatenate %288, %289 in 1 : vector<2x256xf32>, vector<2x256xf32> -> vector<2x512xf32>
    %c0_36 = arith.constant 0 : index
    %c0_37 = arith.constant 0 : index
    %291 = vector.load %arg6[%c0_36, %c0_37] : memref<2x512xf32, #tpu.memory_space<vmem>>, vector<2x512xf32>
    tpu.vector_store %arg6[%c0_36, %c0_37], %290 {strides = array<i32>} : memref<2x512xf32, #tpu.memory_space<vmem>>, vector<2x512xf32>,
    return
  }
  func.func @transform_0(%arg0: i32) -> (i32, i32, i32) {
    %c0_i32 = arith.constant 0 : i32
    %c0_i32_0 = arith.constant 0 : i32
    %c0_i32_1 = arith.constant 0 : i32
    return %arg0, %c0_i32, %c0_i32_0 : i32, i32, i32
  }
  func.func @transform_1(%arg0: i32) -> (i32, i32, i32) {
    %c0_i32 = arith.constant 0 : i32
    %c0_i32_0 = arith.constant 0 : i32
    %c0_i32_1 = arith.constant 0 : i32
    %c0_i32_2 = arith.constant 0 : i32
    return %c0_i32, %c0_i32_0, %c0_i32_1 : i32, i32, i32
  }
  func.func @transform_2(%arg0: i32) -> (i32, i32) {
    %c0_i32 = arith.constant 0 : i32
    %c0_i32_0 = arith.constant 0 : i32
    %c0_i32_1 = arith.constant 0 : i32
    return %c0_i32, %c0_i32_0 : i32, i32
  }
  func.func @transform_3(%arg0: i32) -> (i32, i32, i32) {
    %c0_i32 = arith.constant 0 : i32
    %c0_i32_0 = arith.constant 0 : i32
    %c0_i32_1 = arith.constant 0 : i32
    %c0_i32_2 = arith.constant 0 : i32
    return %c0_i32, %c0_i32_0, %c0_i32_1 : i32, i32, i32
  }
  func.func @transform_4(%arg0: i32) -> (i32, i32) {
    %c0_i32 = arith.constant 0 : i32
    %c0_i32_0 = arith.constant 0 : i32
    %c0_i32_1 = arith.constant 0 : i32
    return %c0_i32, %c0_i32_0 : i32, i32
  }
  func.func @transform_5(%arg0: i32) -> (i32, i32) {
    %c0_i32 = arith.constant 0 : i32
    %c0_i32_0 = arith.constant 0 : i32
    return %arg0, %c0_i32 : i32, i32
  }
}

</mosaic_0001>

<llo_original>
// kernel: lenet_forward.3
$region0: #{lenet_forward.3}
  #allocation0 [shape = 'u32[]', space=smem, size = 0x4, offset = 0x4, fixed_abs, tag = 'smem constant byte address 0x4 - core index']
  #allocation1 [shape = 'u32[144,128]{1,0:T(1,128)}', space=vmem, size = 0x12000, scoped, tag = 'internal scratch']
  %s0 = inlined_call_operand.vmem [shape: f32[2,512], index: 0, kind: input, shape index: {}]
  %s1 = inlined_call_operand.vmem [shape: bf16[512,128], index: 1, kind: input, shape index: {}]
  %s2 = inlined_call_operand.vmem [shape: f32[1,128], index: 2, kind: input, shape index: {}]
  %s3 = inlined_call_operand.vmem [shape: f32[1,128], index: 3, kind: input, shape index: {}]
  %s4 = inlined_call_operand.vmem [shape: f32[1,128], index: 4, kind: input, shape index: {}]
  %s5 = inlined_call_operand.vmem [shape: bf16[128,84], index: 5, kind: input, shape index: {}]
  %s6 = inlined_call_operand.vmem [shape: f32[1,84], index: 6, kind: input, shape index: {}]
  %s7 = inlined_call_operand.vmem [shape: f32[1,84], index: 7, kind: input, shape index: {}]
  %s8 = inlined_call_operand.vmem [shape: f32[1,84], index: 8, kind: input, shape index: {}]
  %s9 = inlined_call_operand.vmem [shape: bf16[84,128], index: 9, kind: input, shape index: {}]
  %s10 = inlined_call_operand.vmem [shape: f32[1,128], index: 10, kind: input, shape index: {}]
  %s11 = inlined_call_operand.hbm [shape: f32[2,128], index: 11, kind: output, shape index: {0}]
  %s12 = inlined_call_operand.hbm [shape: f32[2,128], index: 12, kind: output, shape index: {1}]
  %13 = xla_tuple %s11, %s12
  %s14 = sld [smem:[#allocation0]]
  $region62: #{lenet_forward.3} parent=0
    _
  %s16 = ssub.s32 1, %s14
  %s17 = scalar_select 0, %s16, %s14
  $region1: #{lenet_forward.3} parent=0
    #allocation2 [shape = 'u8[1024]{0}', space=vmem, size = 0x400, scoped, tag = 'output window, operand 0, single buffered']
    #allocation3 [shape = 's32[1]{0}', space=sflag, size = 0x4, scoped, tag = 'scoped memory for lenet_forward.3']
    #allocation4 [shape = 'u8[1024]{0}', space=vmem, size = 0x400, scoped, tag = 'output window, operand 1, single buffered']
    #allocation5 [shape = 's32[1]{0}', space=sflag, size = 0x4, scoped, tag = 'scoped memory for lenet_forward.3']
    %18 = vsyncpa [#allocation3], 0
    %19 = vsyncpa [#allocation5], 0
    // Predicated region
    $region2: #{lenet_forward.3} parent=1 // pred_check
      _
    $region3: #{lenet_forward.3} parent=1 // pred_check_branch
      %21 = sbr.rel (0) target = $region5
    $region4: #{lenet_forward.3} parent=1 // pred_region
      _
    $region5: #{lenet_forward.3} parent=1 // pred_fallthru
      _
    // Predicated region
    $region6: #{lenet_forward.3} parent=1 // pred_check
      _
    $region7: #{lenet_forward.3} parent=1 // pred_check_branch
      %23 = sbr.rel (0) target = $region9
    $region8: #{lenet_forward.3} parent=1 // pred_region
      _
    $region9: #{lenet_forward.3} parent=1 // pred_fallthru
      _
    // Predicated region
    $region10: #{lenet_forward.3} parent=1 // pred_check
      _
    $region11: #{lenet_forward.3} parent=1 // pred_check_branch
      %25 = sbr.rel (0) target = $region13
    $region12: #{lenet_forward.3} parent=1 // pred_region
      _
    $region13: #{lenet_forward.3} parent=1 // pred_fallthru
      _
    // Predicated region
    $region14: #{lenet_forward.3} parent=1 // pred_check
      _
    $region15: #{lenet_forward.3} parent=1 // pred_check_branch
      %27 = sbr.rel (0) target = $region17
    $region16: #{lenet_forward.3} parent=1 // pred_region
      _
    $region17: #{lenet_forward.3} parent=1 // pred_fallthru
      _
    // Predicated region
    $region18: #{lenet_forward.3} parent=1 // pred_check
      _
    $region19: #{lenet_forward.3} parent=1 // pred_check_branch
      %29 = sbr.rel (0) target = $region21
    $region20: #{lenet_forward.3} parent=1 // pred_region
      _
    $region21: #{lenet_forward.3} parent=1 // pred_fallthru
      _
    // Predicated region
    $region22: #{lenet_forward.3} parent=1 // pred_check
      _
    $region23: #{lenet_forward.3} parent=1 // pred_check_branch
      %31 = sbr.rel (0) target = $region25
    $region24: #{lenet_forward.3} parent=1 // pred_region
      _
    $region25: #{lenet_forward.3} parent=1 // pred_fallthru
      _
    // Predicated region
    $region26: #{lenet_forward.3} parent=1 // pred_check
      _
    $region27: #{lenet_forward.3} parent=1 // pred_check_branch
      %33 = sbr.rel (0) target = $region29
    $region28: #{lenet_forward.3} parent=1 // pred_region
      _
    $region29: #{lenet_forward.3} parent=1 // pred_fallthru
      _
    // Predicated region
    $region30: #{lenet_forward.3} parent=1 // pred_check
      _
    $region31: #{lenet_forward.3} parent=1 // pred_check_branch
      %35 = sbr.rel (0) target = $region33
    $region32: #{lenet_forward.3} parent=1 // pred_region
      _
    $region33: #{lenet_forward.3} parent=1 // pred_fallthru
      _
    // Predicated region
    $region34: #{lenet_forward.3} parent=1 // pred_check
      _
    $region35: #{lenet_forward.3} parent=1 // pred_check_branch
      %37 = sbr.rel (0) target = $region37
    $region36: #{lenet_forward.3} parent=1 // pred_region
      _
    $region37: #{lenet_forward.3} parent=1 // pred_fallthru
      _
    // Predicated region
    $region38: #{lenet_forward.3} parent=1 // pred_check
      _
    $region39: #{lenet_forward.3} parent=1 // pred_check_branch
      %39 = sbr.rel (0) target = $region41
    $region40: #{lenet_forward.3} parent=1 // pred_region
      _
    $region41: #{lenet_forward.3} parent=1 // pred_fallthru
      _
    // Predicated region
    $region42: #{lenet_forward.3} parent=1 // pred_check
      _
    $region43: #{lenet_forward.3} parent=1 // pred_check_branch
      %41 = sbr.rel (0) target = $region45
    $region44: #{lenet_forward.3} parent=1 // pred_region
      _
    $region45: #{lenet_forward.3} parent=1 // pred_fallthru
      _
    %v43 = vld [vmem:[%s0] sm:$0xff]
    %v45 = vcombine.high %v43, %v43
    %v47 = vunpack.c.l.s4 1983009808
    %v48 = vunpack.c.0.s8 %v47
    %v49 = vlaneseq
    %v50 = vshrl.u32 %v49, 7
    %v51 = vsub.s32 %v48, %v50
    %v52 = vrot.slane %v43, %v51
    %v54 = vunpack.c.l.s4 1983009808
    %v55 = vunpack.c.0.s8 %v54
    %v56 = vlaneseq
    %v57 = vshrl.u32 %v56, 7
    %v58 = vsub.s32 %v55, %v57
    %v59 = vrot.slane %v45, %v58
    %v60 = vcombine.high %v52, %v52
    %v61 = vcombine.high %v59, %v59
    %v66 = vpack.c.bf16 %v52, %v52
    %v67 = vpack.c.bf16 %v60, %v60
    %v68 = vpack.c.bf16 %v59, %v59
    %v69 = vpack.c.bf16 %v61, %v61
    %v70 = vld [vmem:[%s1] sm:$0xf]
    %v71 = vld [vmem:[%s1 + $0x4] sm:$0xf]
    %v72 = vld [vmem:[%s1 + $0x8] sm:$0xf]
    %v73 = vld [vmem:[%s1 + $0xc] sm:$0xf]
    %v74 = vld [vmem:[%s1 + $0x10] sm:$0xf]
    %v75 = vld [vmem:[%s1 + $0x14] sm:$0xf]
    %v76 = vld [vmem:[%s1 + $0x18] sm:$0xf]
    %v77 = vld [vmem:[%s1 + $0x1c] sm:$0xf]
    %v78 = vld [vmem:[%s1 + $0x20] sm:$0xf]
    %v79 = vld [vmem:[%s1 + $0x24] sm:$0xf]
    %v80 = vld [vmem:[%s1 + $0x28] sm:$0xf]
    %v81 = vld [vmem:[%s1 + $0x2c] sm:$0xf]
    %v82 = vld [vmem:[%s1 + $0x30] sm:$0xf]
    %v83 = vld [vmem:[%s1 + $0x34] sm:$0xf]
    %v84 = vld [vmem:[%s1 + $0x38] sm:$0xf]
    %v85 = vld [vmem:[%s1 + $0x3c] sm:$0xf]
    %v86 = vld [vmem:[%s1 + $0x40] sm:$0xf]
    %v87 = vld [vmem:[%s1 + $0x44] sm:$0xf]
    %v88 = vld [vmem:[%s1 + $0x48] sm:$0xf]
    %v89 = vld [vmem:[%s1 + $0x4c] sm:$0xf]
    %v90 = vld [vmem:[%s1 + $0x50] sm:$0xf]
    %v91 = vld [vmem:[%s1 + $0x54] sm:$0xf]
    %v92 = vld [vmem:[%s1 + $0x58] sm:$0xf]
    %v93 = vld [vmem:[%s1 + $0x5c] sm:$0xf]
    %v94 = vld [vmem:[%s1 + $0x60] sm:$0xf]
    %v95 = vld [vmem:[%s1 + $0x64] sm:$0xf]
    %v96 = vld [vmem:[%s1 + $0x68] sm:$0xf]
    %v97 = vld [vmem:[%s1 + $0x6c] sm:$0xf]
    %v98 = vld [vmem:[%s1 + $0x70] sm:$0xf]
    %v99 = vld [vmem:[%s1 + $0x74] sm:$0xf]
    %v100 = vld [vmem:[%s1 + $0x78] sm:$0xf]
    %v101 = vld [vmem:[%s1 + $0x7c] sm:$0xf]
    %v102 = vld [vmem:[%s1 + $0x80] sm:$0xf]
    %v103 = vld [vmem:[%s1 + $0x84] sm:$0xf]
    %v104 = vld [vmem:[%s1 + $0x88] sm:$0xf]
    %v105 = vld [vmem:[%s1 + $0x8c] sm:$0xf]
    %v106 = vld [vmem:[%s1 + $0x90] sm:$0xf]
    %v107 = vld [vmem:[%s1 + $0x94] sm:$0xf]
    %v108 = vld [vmem:[%s1 + $0x98] sm:$0xf]
    %v109 = vld [vmem:[%s1 + $0x9c] sm:$0xf]
    %v110 = vld [vmem:[%s1 + $0xa0] sm:$0xf]
    %v111 = vld [vmem:[%s1 + $0xa4] sm:$0xf]
    %v112 = vld [vmem:[%s1 + $0xa8] sm:$0xf]
    %v113 = vld [vmem:[%s1 + $0xac] sm:$0xf]
    %v114 = vld [vmem:[%s1 + $0xb0] sm:$0xf]
    %v115 = vld [vmem:[%s1 + $0xb4] sm:$0xf]
    %v116 = vld [vmem:[%s1 + $0xb8] sm:$0xf]
    %v117 = vld [vmem:[%s1 + $0xbc] sm:$0xf]
    %v118 = vld [vmem:[%s1 + $0xc0] sm:$0xf]
    %v119 = vld [vmem:[%s1 + $0xc4] sm:$0xf]
    %v120 = vld [vmem:[%s1 + $0xc8] sm:$0xf]
    %v121 = vld [vmem:[%s1 + $0xcc] sm:$0xf]
    %v122 = vld [vmem:[%s1 + $0xd0] sm:$0xf]
    %v123 = vld [vmem:[%s1 + $0xd4] sm:$0xf]
    %v124 = vld [vmem:[%s1 + $0xd8] sm:$0xf]
    %v125 = vld [vmem:[%s1 + $0xdc] sm:$0xf]
    %v126 = vld [vmem:[%s1 + $0xe0] sm:$0xf]
    %v127 = vld [vmem:[%s1 + $0xe4] sm:$0xf]
    %v128 = vld [vmem:[%s1 + $0xe8] sm:$0xf]
    %v129 = vld [vmem:[%s1 + $0xec] sm:$0xf]
    %v130 = vld [vmem:[%s1 + $0xf0] sm:$0xf]
    %v131 = vld [vmem:[%s1 + $0xf4] sm:$0xf]
    %v132 = vld [vmem:[%s1 + $0xf8] sm:$0xf]
    %v133 = vld [vmem:[%s1 + $0xfc] sm:$0xf]
    %v134 = vld [vmem:[%s2] sm:$0x1]
    %v136 = vlaneseq
    %v137 = vshrl.u32 %v136, 7
    %v138 = vsub.s32 0, %v137
    %v139 = vrot.slane %v134, %v138
    %v205 = vunpack.c.l.b16 %v70
    %v206 = vunpack.c.l.b16 %v71
    %v207 = vunpack.c.l.b16 %v72
    %v208 = vunpack.c.l.b16 %v73
    %v209 = vunpack.c.l.b16 %v74
    %v210 = vunpack.c.l.b16 %v75
    %v211 = vunpack.c.l.b16 %v76
    %v212 = vunpack.c.l.b16 %v77
    %v213 = vunpack.c.l.b16 %v78
    %v214 = vunpack.c.l.b16 %v79
    %v215 = vunpack.c.l.b16 %v80
    %v216 = vunpack.c.l.b16 %v81
    %v217 = vunpack.c.l.b16 %v82
    %v218 = vunpack.c.l.b16 %v83
    %v219 = vunpack.c.l.b16 %v84
    %v220 = vunpack.c.l.b16 %v85
    %v221 = vunpack.c.l.b16 %v86
    %v222 = vunpack.c.l.b16 %v87
    %v223 = vunpack.c.l.b16 %v88
    %v224 = vunpack.c.l.b16 %v89
    %v225 = vunpack.c.l.b16 %v90
    %v226 = vunpack.c.l.b16 %v91
    %v227 = vunpack.c.l.b16 %v92
    %v228 = vunpack.c.l.b16 %v93
    %v229 = vunpack.c.l.b16 %v94
    %v230 = vunpack.c.l.b16 %v95
    %v231 = vunpack.c.l.b16 %v96
    %v232 = vunpack.c.l.b16 %v97
    %v233 = vunpack.c.l.b16 %v98
    %v234 = vunpack.c.l.b16 %v99
    %v235 = vunpack.c.l.b16 %v100
    %v236 = vunpack.c.l.b16 %v101
    %v237 = vunpack.c.l.b16 %v102
    %v238 = vunpack.c.l.b16 %v103
    %v239 = vunpack.c.l.b16 %v104
    %v240 = vunpack.c.l.b16 %v105
    %v241 = vunpack.c.l.b16 %v106
    %v242 = vunpack.c.l.b16 %v107
    %v243 = vunpack.c.l.b16 %v108
    %v244 = vunpack.c.l.b16 %v109
    %v245 = vunpack.c.l.b16 %v110
    %v246 = vunpack.c.l.b16 %v111
    %v247 = vunpack.c.l.b16 %v112
    %v248 = vunpack.c.l.b16 %v113
    %v249 = vunpack.c.l.b16 %v114
    %v250 = vunpack.c.l.b16 %v115
    %v251 = vunpack.c.l.b16 %v116
    %v252 = vunpack.c.l.b16 %v117
    %v253 = vunpack.c.l.b16 %v118
    %v254 = vunpack.c.l.b16 %v119
    %v255 = vunpack.c.l.b16 %v120
    %v256 = vunpack.c.l.b16 %v121
    %v257 = vunpack.c.l.b16 %v122
    %v258 = vunpack.c.l.b16 %v123
    %v259 = vunpack.c.l.b16 %v124
    %v260 = vunpack.c.l.b16 %v125
    %v261 = vunpack.c.l.b16 %v126
    %v262 = vunpack.c.l.b16 %v127
    %v263 = vunpack.c.l.b16 %v128
    %v264 = vunpack.c.l.b16 %v129
    %v265 = vunpack.c.l.b16 %v130
    %v266 = vunpack.c.l.b16 %v131
    %v267 = vunpack.c.l.b16 %v132
    %v268 = vunpack.c.l.b16 %v133
    %v269 = vpack.c.b16 %v206, %v205
    %v270 = vpack.c.b16 %v208, %v207
    %v271 = vpack.c.b16 %v210, %v209
    %v272 = vpack.c.b16 %v212, %v211
    %v273 = vpack.c.b16 %v214, %v213
    %v274 = vpack.c.b16 %v216, %v215
    %v275 = vpack.c.b16 %v218, %v217
    %v276 = vpack.c.b16 %v220, %v219
    %v277 = vpack.c.b16 %v222, %v221
    %v278 = vpack.c.b16 %v224, %v223
    %v279 = vpack.c.b16 %v226, %v225
    %v280 = vpack.c.b16 %v228, %v227
    %v281 = vpack.c.b16 %v230, %v229
    %v282 = vpack.c.b16 %v232, %v231
    %v283 = vpack.c.b16 %v234, %v233
    %v284 = vpack.c.b16 %v236, %v235
    %v285 = vpack.c.b16 %v238, %v237
    %v286 = vpack.c.b16 %v240, %v239
    %v287 = vpack.c.b16 %v242, %v241
    %v288 = vpack.c.b16 %v244, %v243
    %v289 = vpack.c.b16 %v246, %v245
    %v290 = vpack.c.b16 %v248, %v247
    %v291 = vpack.c.b16 %v250, %v249
    %v292 = vpack.c.b16 %v252, %v251
    %v293 = vpack.c.b16 %v254, %v253
    %v294 = vpack.c.b16 %v256, %v255
    %v295 = vpack.c.b16 %v258, %v257
    %v296 = vpack.c.b16 %v260, %v259
    %v297 = vpack.c.b16 %v262, %v261
    %v298 = vpack.c.b16 %v264, %v263
    %v299 = vpack.c.b16 %v266, %v265
    %v300 = vpack.c.b16 %v268, %v267
    %333 = vmatprep.subr.bf16.mxu0 0
    %334 = vmatpush1.bf16.msra.mxu0 %v269
    %335 = vmatprep.subr.bf16.mxu0 0
    %336 = vmatpush1.bf16.msra.mxu0 %v270
    %337 = vmatprep.subr.bf16.mxu0 0
    %338 = vmatpush1.bf16.msra.mxu0 %v271
    %339 = vmatprep.subr.bf16.mxu0 0
    %340 = vmatpush1.bf16.msra.mxu0 %v272
    %341 = vmatprep.subr.bf16.mxu0 0
    %342 = vmatpush1.bf16.msra.mxu0 %v273
    %343 = vmatprep.subr.bf16.mxu0 0
    %344 = vmatpush1.bf16.msra.mxu0 %v274
    %345 = vmatprep.subr.bf16.mxu0 0
    %346 = vmatpush1.bf16.msra.mxu0 %v275
    %347 = vmatprep.subr.bf16.mxu0 0
    %348 = vmatpush1.bf16.msra.mxu0 %v276
    %349 = vmatprep.subr.bf16.mxu0 0
    %350 = vmatpush1.bf16.msra.mxu0 %v277
    %351 = vmatprep.subr.bf16.mxu0 0
    %352 = vmatpush1.bf16.msra.mxu0 %v278
    %353 = vmatprep.subr.bf16.mxu0 0
    %354 = vmatpush1.bf16.msra.mxu0 %v279
    %355 = vmatprep.subr.bf16.mxu0 0
    %356 = vmatpush1.bf16.msra.mxu0 %v280
    %357 = vmatprep.subr.bf16.mxu0 0
    %358 = vmatpush1.bf16.msra.mxu0 %v281
    %359 = vmatprep.subr.bf16.mxu0 0
    %360 = vmatpush1.bf16.msra.mxu0 %v282
    %361 = vmatprep.subr.bf16.mxu0 0
    %362 = vmatpush1.bf16.msra.mxu0 %v283
    %363 = vmatprep.subr.bf16.mxu0 0
    %364 = vmatpush1.bf16.msra.mxu0 %v284
    %365 = vmatprep.mubr.bf16.mxu0 %v67
    %366 = vmatmul.mubr.bf16.gmra.mrb[0].mxu0 %v66
    %v367 = vpop.f32.mrb[0].mxu0
    %v368 = vadd.f32 %v139, %v367
    %v369 = vpop.f32.mrb[0].mxu0
    %v370 = vpop.f32.mrb[0].mxu0
    %v371 = vpop.f32.mrb[0].mxu0
    %372 = vdwg.mxu0
    %373 = vmatprep.subr.bf16.mxu0 0
    %374 = vmatpush1.bf16.msra.mxu0 %v285
    %375 = vmatprep.subr.bf16.mxu0 0
    %376 = vmatpush1.bf16.msra.mxu0 %v286
    %377 = vmatprep.subr.bf16.mxu0 0
    %378 = vmatpush1.bf16.msra.mxu0 %v287
    %379 = vmatprep.subr.bf16.mxu0 0
    %380 = vmatpush1.bf16.msra.mxu0 %v288
    %381 = vmatprep.subr.bf16.mxu0 0
    %382 = vmatpush1.bf16.msra.mxu0 %v289
    %383 = vmatprep.subr.bf16.mxu0 0
    %384 = vmatpush1.bf16.msra.mxu0 %v290
    %385 = vmatprep.subr.bf16.mxu0 0
    %386 = vmatpush1.bf16.msra.mxu0 %v291
    %387 = vmatprep.subr.bf16.mxu0 0
    %388 = vmatpush1.bf16.msra.mxu0 %v292
    %389 = vmatprep.subr.bf16.mxu0 0
    %390 = vmatpush1.bf16.msra.mxu0 %v293
    %391 = vmatprep.subr.bf16.mxu0 0
    %392 = vmatpush1.bf16.msra.mxu0 %v294
    %393 = vmatprep.subr.bf16.mxu0 0
    %394 = vmatpush1.bf16.msra.mxu0 %v295
    %395 = vmatprep.subr.bf16.mxu0 0
    %396 = vmatpush1.bf16.msra.mxu0 %v296
    %397 = vmatprep.subr.bf16.mxu0 0
    %398 = vmatpush1.bf16.msra.mxu0 %v297
    %399 = vmatprep.subr.bf16.mxu0 0
    %400 = vmatpush1.bf16.msra.mxu0 %v298
    %401 = vmatprep.subr.bf16.mxu0 0
    %402 = vmatpush1.bf16.msra.mxu0 %v299
    %403 = vmatprep.subr.bf16.mxu0 0
    %404 = vmatpush1.bf16.msra.mxu0 %v300
    %405 = vmatprep.mubr.bf16.mxu0 %v69
    %406 = vmatmul.mubr.bf16.gmra.mrb[0].mxu0 %v68
    %v407 = vpop.f32.mrb[0].mxu0
    %v408 = vadd.f32 %v368, %v407
    %v409 = vpop.f32.mrb[0].mxu0
    %v410 = vpop.f32.mrb[0].mxu0
    %v411 = vpop.f32.mrb[0].mxu0
    %412 = vdwg.mxu0
    %vm413 = vcmask 1041408
    %v414 = vsel %vm413, %v408, 0.0
    %v415 = vrot.slane %v414, 4
    %v416 = vadd.f32 %v414, %v415
    %v417 = vrot.slane %v416, 2
    %v418 = vadd.f32 %v416, %v417
    %v419 = vrot.slane %v418, 1
    %v420 = vadd.f32 %v418, %v419
    %v421 = vrcp.pop 2.0
    %v422 = vmul.f32 %v420, %v421
    %v423 = vsub.f32 %v408, %v422
    %v424 = vmul.f32 %v423, %v423
    %v425 = vsel %vm413, %v424, 0.0
    %v426 = vrot.slane %v425, 4
    %v427 = vadd.f32 %v425, %v426
    %v428 = vrot.slane %v427, 2
    %v429 = vadd.f32 %v427, %v428
    %v430 = vrot.slane %v429, 1
    %v431 = vadd.f32 %v429, %v430
    %v432 = vmul.f32 %v431, %v421
    %v433 = vld [vmem:[%s3] sm:$0x1]
    %v435 = vlaneseq
    %v436 = vshrl.u32 %v435, 7
    %v437 = vsub.s32 0, %v436
    %v438 = vrot.slane %v433, %v437
    %v440 = vmul.f32 %v438, %v423
    %v441 = vadd.f32 %v432, 1e-05
    %v442 = vrsqrt.pop %v441
    %v443 = vmul.f32 %v440, %v442
    %v444 = vld [vmem:[%s4] sm:$0x1]
    %v446 = vlaneseq
    %v447 = vshrl.u32 %v446, 7
    %v448 = vsub.s32 0, %v447
    %v449 = vrot.slane %v444, %v448
    %v451 = vadd.f32 %v443, %v449
    %v452 = vmax.f32 %v451, 0.0
    %v453 = vpack.c.bf16 %v452, %v452
    %v454 = vld [vmem:[%s5] sm:$0xf]
    %v455 = vld [vmem:[%s5 + $0x4] sm:$0xf]
    %v456 = vld [vmem:[%s5 + $0x8] sm:$0xf]
    %v457 = vld [vmem:[%s5 + $0xc] sm:$0xf]
    %v458 = vld [vmem:[%s5 + $0x10] sm:$0xf]
    %v459 = vld [vmem:[%s5 + $0x14] sm:$0xf]
    %v460 = vld [vmem:[%s5 + $0x18] sm:$0xf]
    %v461 = vld [vmem:[%s5 + $0x1c] sm:$0xf]
    %v462 = vld [vmem:[%s5 + $0x20] sm:$0xf]
    %v463 = vld [vmem:[%s5 + $0x24] sm:$0xf]
    %v464 = vld [vmem:[%s5 + $0x28] sm:$0xf]
    %v465 = vld [vmem:[%s5 + $0x2c] sm:$0xf]
    %v466 = vld [vmem:[%s5 + $0x30] sm:$0xf]
    %v467 = vld [vmem:[%s5 + $0x34] sm:$0xf]
    %v468 = vld [vmem:[%s5 + $0x38] sm:$0xf]
    %v469 = vld [vmem:[%s5 + $0x3c] sm:$0xf]
    %v470 = vld [vmem:[%s6] sm:$0x1]
    %v472 = vlaneseq
    %v473 = vshrl.u32 %v472, 7
    %v474 = vsub.s32 0, %v473
    %v475 = vrot.slane %v470, %v474
    %v493 = vunpack.c.l.b16 %v454
    %v494 = vunpack.c.l.b16 %v455
    %v495 = vunpack.c.l.b16 %v456
    %v496 = vunpack.c.l.b16 %v457
    %v497 = vunpack.c.l.b16 %v458
    %v498 = vunpack.c.l.b16 %v459
    %v499 = vunpack.c.l.b16 %v460
    %v500 = vunpack.c.l.b16 %v461
    %v501 = vunpack.c.l.b16 %v462
    %v502 = vunpack.c.l.b16 %v463
    %v503 = vunpack.c.l.b16 %v464
    %v504 = vunpack.c.l.b16 %v465
    %v505 = vunpack.c.l.b16 %v466
    %v506 = vunpack.c.l.b16 %v467
    %v507 = vunpack.c.l.b16 %v468
    %v508 = vunpack.c.l.b16 %v469
    %v509 = vpack.c.b16 %v494, %v493
    %v510 = vpack.c.b16 %v496, %v495
    %v511 = vpack.c.b16 %v498, %v497
    %v512 = vpack.c.b16 %v500, %v499
    %v513 = vpack.c.b16 %v502, %v501
    %v514 = vpack.c.b16 %v504, %v503
    %v515 = vpack.c.b16 %v506, %v505
    %v516 = vpack.c.b16 %v508, %v507
    %525 = vmatprep.subr.bf16.mxu0 0
    %526 = vmatpush1.bf16.msra.mxu0 %v509
    %527 = vmatprep.subr.bf16.mxu0 0
    %528 = vmatpush1.bf16.msra.mxu0 %v510
    %529 = vmatprep.subr.bf16.mxu0 0
    %530 = vmatpush1.bf16.msra.mxu0 %v511
    %531 = vmatprep.subr.bf16.mxu0 0
    %532 = vmatpush1.bf16.msra.mxu0 %v512
    %533 = vmatprep.subr.bf16.mxu0 0
    %534 = vmatpush1.bf16.msra.mxu0 %v513
    %535 = vmatprep.subr.bf16.mxu0 0
    %536 = vmatpush1.bf16.msra.mxu0 %v514
    %537 = vmatprep.subr.bf16.mxu0 0
    %538 = vmatpush1.bf16.msra.mxu0 %v515
    %539 = vmatprep.subr.bf16.mxu0 0
    %540 = vmatpush1.bf16.msra.mxu0 %v516
    %541 = vmatprep.subr.bf16.mxu0 0
    %542 = vmatpush1.bf16.msra.mxu0 0
    %543 = vmatprep.subr.bf16.mxu0 0
    %544 = vmatpush1.bf16.msra.mxu0 0
    %545 = vmatprep.subr.bf16.mxu0 0
    %546 = vmatpush1.bf16.msra.mxu0 0
    %547 = vmatprep.subr.bf16.mxu0 0
    %548 = vmatpush1.bf16.msra.mxu0 0
    %549 = vmatprep.subr.bf16.mxu0 0
    %550 = vmatpush1.bf16.msra.mxu0 0
    %551 = vmatprep.subr.bf16.mxu0 0
    %552 = vmatpush1.bf16.msra.mxu0 0
    %553 = vmatprep.subr.bf16.mxu0 0
    %554 = vmatpush1.bf16.msra.mxu0 0
    %555 = vmatprep.subr.bf16.mxu0 0
    %556 = vmatpush1.bf16.msra.mxu0 0
    %557 = vmatprep.mubr.bf16.mxu0 0
    %558 = vmatmul.mubr.bf16.gmra.mrb[0].mxu0 %v453
    %v559 = vpop.f32.mrb[0].mxu0
    %v560 = vadd.f32 %v475, %v559
    %v561 = vpop.f32.mrb[0].mxu0
    %v562 = vpop.f32.mrb[0].mxu0
    %v563 = vpop.f32.mrb[0].mxu0
    %564 = vdwg.mxu0
    %vm565 = vcmask 680960
    %v566 = vsel %vm565, %v560, 0.0
    %v567 = vrot.slane %v566, 4
    %v568 = vadd.f32 %v566, %v567
    %v569 = vrot.slane %v568, 2
    %v570 = vadd.f32 %v568, %v569
    %v571 = vrot.slane %v570, 1
    %v572 = vadd.f32 %v570, %v571
    %v573 = vmul.f32 %v572, %v421
    %v574 = vsub.f32 %v560, %v573
    %v575 = vmul.f32 %v574, %v574
    %v576 = vsel %vm565, %v575, 0.0
    %v577 = vrot.slane %v576, 4
    %v578 = vadd.f32 %v576, %v577
    %v579 = vrot.slane %v578, 2
    %v580 = vadd.f32 %v578, %v579
    %v581 = vrot.slane %v580, 1
    %v582 = vadd.f32 %v580, %v581
    %v583 = vmul.f32 %v582, %v421
    %v584 = vld [vmem:[%s7] sm:$0x1]
    %v586 = vlaneseq
    %v587 = vshrl.u32 %v586, 7
    %v588 = vsub.s32 0, %v587
    %v589 = vrot.slane %v584, %v588
    %v591 = vmul.f32 %v589, %v574
    %v592 = vadd.f32 %v583, 1e-05
    %v593 = vrsqrt.pop %v592
    %v594 = vmul.f32 %v591, %v593
    %v595 = vld [vmem:[%s8] sm:$0x1]
    %v597 = vlaneseq
    %v598 = vshrl.u32 %v597, 7
    %v599 = vsub.s32 0, %v598
    %v600 = vrot.slane %v595, %v599
    %v602 = vadd.f32 %v594, %v600
    %v603 = vmax.f32 %v602, 0.0
    %v604 = vpack.c.bf16 %v603, %v603
    %v605 = vld [vmem:[%s9] sm:$0xf]
    %v606 = vld [vmem:[%s9 + $0x4] sm:$0xf]
    %v607 = vld [vmem:[%s9 + $0x8] sm:$0xf]
    %v608 = vld [vmem:[%s9 + $0xc] sm:$0xf]
    %v609 = vld [vmem:[%s9 + $0x10] sm:$0xf]
    %v610 = vld [vmem:[%s9 + $0x14] sm:$0xf]
    %v611 = vld [vmem:[%s9 + $0x18] sm:$0xf]
    %v612 = vld [vmem:[%s9 + $0x1c] sm:$0xf]
    %v613 = vld [vmem:[%s9 + $0x20] sm:$0xf]
    %v614 = vld [vmem:[%s9 + $0x24] sm:$0xf]
    %v615 = vld [vmem:[%s9 + $0x28] sm:$0x3]
    %v616 = vld [vmem:[%s10] sm:$0x1]
    %v618 = vlaneseq
    %v619 = vshrl.u32 %v618, 7
    %v620 = vsub.s32 0, %v619
    %v621 = vrot.slane %v616, %v620
    %v634 = vunpack.c.l.b16 %v605
    %v635 = vunpack.c.l.b16 %v606
    %v636 = vunpack.c.l.b16 %v607
    %v637 = vunpack.c.l.b16 %v608
    %v638 = vunpack.c.l.b16 %v609
    %v639 = vunpack.c.l.b16 %v610
    %v640 = vunpack.c.l.b16 %v611
    %v641 = vunpack.c.l.b16 %v612
    %v642 = vunpack.c.l.b16 %v613
    %v643 = vunpack.c.l.b16 %v614
    %v644 = vunpack.c.l.b16 %v615
    %v645 = vpack.c.b16 %v635, %v634
    %v646 = vpack.c.b16 %v637, %v636
    %v647 = vpack.c.b16 %v639, %v638
    %v648 = vpack.c.b16 %v641, %v640
    %v649 = vpack.c.b16 %v643, %v642
    %v650 = vpack.c.b16 %v644, %v644
    %vm656 = vcmask 687104
    %v658 = vsel %vm656, %v604, 0
    %v661 = vsel %vm413, %v650, 0
    %663 = vmatprep.subr.bf16.mxu0 0
    %664 = vmatpush1.bf16.msra.mxu0 %v645
    %665 = vmatprep.subr.bf16.mxu0 0
    %666 = vmatpush1.bf16.msra.mxu0 %v646
    %667 = vmatprep.subr.bf16.mxu0 0
    %668 = vmatpush1.bf16.msra.mxu0 %v647
    %669 = vmatprep.subr.bf16.mxu0 0
    %670 = vmatpush1.bf16.msra.mxu0 %v648
    %671 = vmatprep.subr.bf16.mxu0 0
    %672 = vmatpush1.bf16.msra.mxu0 %v649
    %673 = vmatprep.subr.bf16.mxu0 0
    %674 = vmatpush1.bf16.msra.mxu0 %v661
    %675 = vmatprep.subr.bf16.mxu0 0
    %676 = vmatpush1.bf16.msra.mxu0 0
    %677 = vmatprep.subr.bf16.mxu0 0
    %678 = vmatpush1.bf16.msra.mxu0 0
    %679 = vmatprep.subr.bf16.mxu0 0
    %680 = vmatpush1.bf16.msra.mxu0 0
    %681 = vmatprep.subr.bf16.mxu0 0
    %682 = vmatpush1.bf16.msra.mxu0 0
    %683 = vmatprep.subr.bf16.mxu0 0
    %684 = vmatpush1.bf16.msra.mxu0 0
    %685 = vmatprep.subr.bf16.mxu0 0
    %686 = vmatpush1.bf16.msra.mxu0 0
    %687 = vmatprep.subr.bf16.mxu0 0
    %688 = vmatpush1.bf16.msra.mxu0 0
    %689 = vmatprep.subr.bf16.mxu0 0
    %690 = vmatpush1.bf16.msra.mxu0 0
    %691 = vmatprep.subr.bf16.mxu0 0
    %692 = vmatpush1.bf16.msra.mxu0 0
    %693 = vmatprep.subr.bf16.mxu0 0
    %694 = vmatpush1.bf16.msra.mxu0 0
    %695 = vmatprep.mubr.bf16.mxu0 0
    %696 = vmatmul.mubr.bf16.gmra.mrb[0].mxu0 %v658
    %v697 = vpop.f32.mrb[0].mxu0
    %v698 = vadd.f32 %v621, %v697
    %v699 = vpop.f32.mrb[0].mxu0
    %v700 = vpop.f32.mrb[0].mxu0
    %v701 = vpop.f32.mrb[0].mxu0
    %702 = vdwg.mxu0
    %703 = vst [vmem:[#allocation2] sm:$0x3] %v698
    %704 = vst [vmem:[#allocation4] sm:$0x3] %v452
    // Predicated region
    $region46: #{lenet_forward.3} parent=1 // pred_check
      _
    $region47: #{lenet_forward.3} parent=1 // pred_check_branch
      %706 = sbr.rel (0) target = $region49
    $region48: #{lenet_forward.3} parent=1 // pred_region
      %s708 = ssub.s32 32, 32
      %709 = vsyncadd [#allocation3], %s708
      %s711 = sshll.u32 [#allocation2], 4
      %s712 = int_to_ptr.vmem [resolvable:$true] %s711
      %714 = dma.vmem_to_hbm [thread:$0]  %s712, 32, %s11, [#allocation3]
    $region49: #{lenet_forward.3} parent=1 // pred_fallthru
      _
    // Predicated region
    $region50: #{lenet_forward.3} parent=1 // pred_check
      _
    $region51: #{lenet_forward.3} parent=1 // pred_check_branch
      %716 = sbr.rel (0) target = $region53
    $region52: #{lenet_forward.3} parent=1 // pred_region
      %s718 = ssub.s32 32, 32
      %719 = vsyncadd [#allocation5], %s718
      %s721 = sshll.u32 [#allocation4], 4
      %s722 = int_to_ptr.vmem [resolvable:$true] %s721
      %724 = dma.vmem_to_hbm [thread:$0]  %s722, 32, %s12, [#allocation5]
    $region53: #{lenet_forward.3} parent=1 // pred_fallthru
      _
    // Predicated region
    $region54: #{lenet_forward.3} parent=1 // pred_check
      _
    $region55: #{lenet_forward.3} parent=1 // pred_check_branch
      %726 = sbr.rel (0) target = $region57
    $region56: #{lenet_forward.3} parent=1 // pred_region
      %727 = dma.done [#allocation3], 32
    $region57: #{lenet_forward.3} parent=1 // pred_fallthru
      _
    // Predicated region
    $region58: #{lenet_forward.3} parent=1 // pred_check
      _
    $region59: #{lenet_forward.3} parent=1 // pred_check_branch
      %729 = sbr.rel (0) target = $region61
    $region60: #{lenet_forward.3} parent=1 // pred_region
      %730 = dma.done [#allocation5], 32
    $region61: #{lenet_forward.3} parent=1 // pred_fallthru
      _
    %731 = vsyncpa [#allocation3], 1
    %732 = vsyncpa [#allocation5], 1

// kernel: lenet_forward.2
$region0: #{lenet_forward.2}
  #allocation0 [shape = 'u32[]', space=smem, size = 0x4, offset = 0x4, fixed_abs, tag = 'smem constant byte address 0x4 - core index']
  #allocation1 [shape = 'u32[144,128]{1,0:T(1,128)}', space=vmem, size = 0x12000, scoped, tag = 'internal scratch']
  %s0 = inlined_call_operand.vmem [shape: f32[2,32,32], index: 0, kind: input, shape index: {}]
  %s1 = inlined_call_operand.vmem [shape: f32[3,32,180], index: 1, kind: input, shape index: {}]
  %s2 = inlined_call_operand.vmem [shape: f32[1,180], index: 2, kind: input, shape index: {}]
  %s3 = inlined_call_operand.vmem [shape: bf16[5,90,176], index: 3, kind: input, shape index: {}]
  %s4 = inlined_call_operand.vmem [shape: f32[1,176], index: 4, kind: input, shape index: {}]
  %s5 = inlined_call_operand.vmem [shape: f32[2,512], index: 5, kind: output, shape index: {}]
  %s6 = sld [smem:[#allocation0]]
  $region30: #{lenet_forward.2} parent=0
    _
  %s8 = ssub.s32 1, %s6
  %s9 = scalar_select 0, %s8, %s6
  // Predicated region
  $region2: #{lenet_forward.2} parent=0 // pred_check
    _
  $region3: #{lenet_forward.2} parent=0 // pred_check_branch
    %11 = sbr.rel (0) target = $region5
  $region4: #{lenet_forward.2} parent=0 // pred_region
    _
  $region5: #{lenet_forward.2} parent=0 // pred_fallthru
    _
  // Predicated region
  $region6: #{lenet_forward.2} parent=0 // pred_check
    _
  $region7: #{lenet_forward.2} parent=0 // pred_check_branch
    %13 = sbr.rel (0) target = $region9
  $region8: #{lenet_forward.2} parent=0 // pred_region
    _
  $region9: #{lenet_forward.2} parent=0 // pred_fallthru
    _
  // Predicated region
  $region10: #{lenet_forward.2} parent=0 // pred_check
    _
  $region11: #{lenet_forward.2} parent=0 // pred_check_branch
    %15 = sbr.rel (0) target = $region13
  $region12: #{lenet_forward.2} parent=0 // pred_region
    _
  $region13: #{lenet_forward.2} parent=0 // pred_fallthru
    _
  // Predicated region
  $region14: #{lenet_forward.2} parent=0 // pred_check
    _
  $region15: #{lenet_forward.2} parent=0 // pred_check_branch
    %17 = sbr.rel (0) target = $region17
  $region16: #{lenet_forward.2} parent=0 // pred_region
    _
  $region17: #{lenet_forward.2} parent=0 // pred_fallthru
    _
  // Predicated region
  $region18: #{lenet_forward.2} parent=0 // pred_check
    _
  $region19: #{lenet_forward.2} parent=0 // pred_check_branch
    %19 = sbr.rel (0) target = $region21
  $region20: #{lenet_forward.2} parent=0 // pred_region
    _
  $region21: #{lenet_forward.2} parent=0 // pred_fallthru
    _
  %v21 = vld [vmem:[%s0] sm:$0xff]
  %v22 = vld [vmem:[%s0 + $0x8] sm:$0xff]
  %v23 = vld [vmem:[%s0 + $0x10] sm:$0xff]
  %v24 = vld [vmem:[%s0 + $0x18] sm:$0xff]
  %v25 = vld [vmem:[%s0 + $0x20] sm:$0xff]
  %v26 = vld [vmem:[%s0 + $0x28] sm:$0xff]
  %v27 = vld [vmem:[%s0 + $0x30] sm:$0xff]
  %v28 = vld [vmem:[%s0 + $0x38] sm:$0xff]
  %v37 = vcombine.high %v21, %v21
  %v39 = vunpack.c.l.s4 1983009808
  %v40 = vunpack.c.0.s8 %v39
  %v41 = vlaneseq
  %v42 = vshrl.u32 %v41, 7
  %v43 = vsub.s32 %v40, %v42
  %v44 = vrot.slane %v21, %v43
  %v46 = vunpack.c.l.s4 1983009808
  %v47 = vunpack.c.0.s8 %v46
  %v48 = vlaneseq
  %v49 = vshrl.u32 %v48, 7
  %v50 = vsub.s32 %v47, %v49
  %v51 = vrot.slane %v37, %v50
  %v52 = vcombine.high %v44, %v44
  %v53 = vcombine.high %v51, %v51
  %v54 = vcombine.high %v22, %v22
  %v56 = vunpack.c.l.s4 1983009808
  %v57 = vunpack.c.0.s8 %v56
  %v58 = vlaneseq
  %v59 = vshrl.u32 %v58, 7
  %v60 = vsub.s32 %v57, %v59
  %v61 = vrot.slane %v22, %v60
  %v63 = vunpack.c.l.s4 1983009808
  %v64 = vunpack.c.0.s8 %v63
  %v65 = vlaneseq
  %v66 = vshrl.u32 %v65, 7
  %v67 = vsub.s32 %v64, %v66
  %v68 = vrot.slane %v54, %v67
  %v69 = vcombine.high %v61, %v61
  %v70 = vcombine.high %v68, %v68
  %v71 = vcombine.high %v23, %v23
  %v73 = vunpack.c.l.s4 1983009808
  %v74 = vunpack.c.0.s8 %v73
  %v75 = vlaneseq
  %v76 = vshrl.u32 %v75, 7
  %v77 = vsub.s32 %v74, %v76
  %v78 = vrot.slane %v23, %v77
  %v80 = vunpack.c.l.s4 1983009808
  %v81 = vunpack.c.0.s8 %v80
  %v82 = vlaneseq
  %v83 = vshrl.u32 %v82, 7
  %v84 = vsub.s32 %v81, %v83
  %v85 = vrot.slane %v71, %v84
  %v86 = vcombine.high %v78, %v78
  %v87 = vcombine.high %v85, %v85
  %v88 = vcombine.high %v24, %v24
  %v90 = vunpack.c.l.s4 1983009808
  %v91 = vunpack.c.0.s8 %v90
  %v92 = vlaneseq
  %v93 = vshrl.u32 %v92, 7
  %v94 = vsub.s32 %v91, %v93
  %v95 = vrot.slane %v24, %v94
  %v97 = vunpack.c.l.s4 1983009808
  %v98 = vunpack.c.0.s8 %v97
  %v99 = vlaneseq
  %v100 = vshrl.u32 %v99, 7
  %v101 = vsub.s32 %v98, %v100
  %v102 = vrot.slane %v88, %v101
  %v103 = vcombine.high %v95, %v95
  %v104 = vcombine.high %v25, %v25
  %v106 = vunpack.c.l.s4 1983009808
  %v107 = vunpack.c.0.s8 %v106
  %v108 = vlaneseq
  %v109 = vshrl.u32 %v108, 7
  %v110 = vsub.s32 %v107, %v109
  %v111 = vrot.slane %v25, %v110
  %v113 = vunpack.c.l.s4 1983009808
  %v114 = vunpack.c.0.s8 %v113
  %v115 = vlaneseq
  %v116 = vshrl.u32 %v115, 7
  %v117 = vsub.s32 %v114, %v116
  %v118 = vrot.slane %v104, %v117
  %v119 = vcombine.high %v111, %v111
  %v120 = vcombine.high %v118, %v118
  %v121 = vcombine.high %v26, %v26
  %v123 = vunpack.c.l.s4 1983009808
  %v124 = vunpack.c.0.s8 %v123
  %v125 = vlaneseq
  %v126 = vshrl.u32 %v125, 7
  %v127 = vsub.s32 %v124, %v126
  %v128 = vrot.slane %v26, %v127
  %v130 = vunpack.c.l.s4 1983009808
  %v131 = vunpack.c.0.s8 %v130
  %v132 = vlaneseq
  %v133 = vshrl.u32 %v132, 7
  %v134 = vsub.s32 %v131, %v133
  %v135 = vrot.slane %v121, %v134
  %v136 = vcombine.high %v128, %v128
  %v137 = vcombine.high %v135, %v135
  %v138 = vcombine.high %v27, %v27
  %v140 = vunpack.c.l.s4 1983009808
  %v141 = vunpack.c.0.s8 %v140
  %v142 = vlaneseq
  %v143 = vshrl.u32 %v142, 7
  %v144 = vsub.s32 %v141, %v143
  %v145 = vrot.slane %v27, %v144
  %v147 = vunpack.c.l.s4 1983009808
  %v148 = vunpack.c.0.s8 %v147
  %v149 = vlaneseq
  %v150 = vshrl.u32 %v149, 7
  %v151 = vsub.s32 %v148, %v150
  %v152 = vrot.slane %v138, %v151
  %v153 = vcombine.high %v145, %v145
  %v154 = vcombine.high %v152, %v152
  %v155 = vcombine.high %v28, %v28
  %v157 = vunpack.c.l.s4 1983009808
  %v158 = vunpack.c.0.s8 %v157
  %v159 = vlaneseq
  %v160 = vshrl.u32 %v159, 7
  %v161 = vsub.s32 %v158, %v160
  %v162 = vrot.slane %v28, %v161
  %v164 = vunpack.c.l.s4 1983009808
  %v165 = vunpack.c.0.s8 %v164
  %v166 = vlaneseq
  %v167 = vshrl.u32 %v166, 7
  %v168 = vsub.s32 %v165, %v167
  %v169 = vrot.slane %v155, %v168
  %v170 = vcombine.high %v162, %v162
  %v171 = vld [vmem:[%s1] sm:$0xff]
  %v172 = vld [vmem:[%s1 + $0x8] sm:$0xff]
  %v173 = vld [vmem:[%s1 + $0x10] sm:$0xff]
  %v174 = vld [vmem:[%s1 + $0x18] sm:$0xff]
  %v175 = vld [vmem:[%s1 + $0x20] sm:$0xff]
  %v176 = vld [vmem:[%s1 + $0x28] sm:$0xff]
  %v177 = vld [vmem:[%s1 + $0x30] sm:$0xff]
  %v178 = vld [vmem:[%s1 + $0x38] sm:$0xff]
  %v179 = vcombine.high %v102, %v102
  %v180 = vcombine.high %v169, %v169
  %vm181 = vcmask 1040384
  %vm182 = vcmask 1042434
  %vm183 = vmor %vm181, %vm182
  %vm184 = vcmask 1044484
  %vm185 = vmor %vm183, %vm184
  %vm186 = vcmask 1046534
  %vm187 = vmor %vm185, %vm186
  %v188 = vrot.slane %v44, 7
  %v189 = vrot.slane %v188, 2
  %v190 = vrot.slane %v52, 7
  %v191 = vsel %vm187, %v189, %v190
  %v192 = vrot.slane %v190, 2
  %v193 = vrot.slane %v51, 7
  %v194 = vsel %vm187, %v192, %v193
  %v195 = vrot.slane %v193, 2
  %v196 = vrot.slane %v53, 7
  %v197 = vsel %vm187, %v195, %v196
  %v198 = vrot.slane %v196, 2
  %v199 = vrot.slane %v61, 7
  %v200 = vsel %vm187, %v198, %v199
  %v201 = vrot.slane %v199, 2
  %v202 = vrot.slane %v69, 7
  %v203 = vsel %vm187, %v201, %v202
  %v204 = vrot.slane %v202, 2
  %v205 = vrot.slane %v68, 7
  %v206 = vsel %vm187, %v204, %v205
  %v207 = vrot.slane %v205, 2
  %v208 = vrot.slane %v70, 7
  %v209 = vsel %vm187, %v207, %v208
  %v210 = vrot.slane %v208, 2
  %v211 = vrot.slane %v78, 7
  %v212 = vsel %vm187, %v210, %v211
  %v213 = vrot.slane %v211, 2
  %v214 = vrot.slane %v86, 7
  %v215 = vsel %vm187, %v213, %v214
  %v216 = vrot.slane %v214, 2
  %v217 = vrot.slane %v85, 7
  %v218 = vsel %vm187, %v216, %v217
  %v219 = vrot.slane %v217, 2
  %v220 = vrot.slane %v87, 7
  %v221 = vsel %vm187, %v219, %v220
  %v222 = vrot.slane %v220, 2
  %v223 = vrot.slane %v95, 7
  %v224 = vsel %vm187, %v222, %v223
  %v225 = vrot.slane %v223, 2
  %v226 = vrot.slane %v103, 7
  %v227 = vsel %vm187, %v225, %v226
  %v228 = vrot.slane %v226, 2
  %v229 = vrot.slane %v102, 7
  %v230 = vsel %vm187, %v228, %v229
  %v231 = vrot.slane %v229, 2
  %v232 = vrot.slane %v179, 7
  %v233 = vsel %vm187, %v231, %v232
  %v234 = vrot.slane %v111, 7
  %v235 = vrot.slane %v234, 2
  %v236 = vrot.slane %v119, 7
  %v237 = vsel %vm187, %v235, %v236
  %v238 = vrot.slane %v236, 2
  %v239 = vrot.slane %v118, 7
  %v240 = vsel %vm187, %v238, %v239
  %v241 = vrot.slane %v239, 2
  %v242 = vrot.slane %v120, 7
  %v243 = vsel %vm187, %v241, %v242
  %v244 = vrot.slane %v242, 2
  %v245 = vrot.slane %v128, 7
  %v246 = vsel %vm187, %v244, %v245
  %v247 = vrot.slane %v245, 2
  %v248 = vrot.slane %v136, 7
  %v249 = vsel %vm187, %v247, %v248
  %v250 = vrot.slane %v248, 2
  %v251 = vrot.slane %v135, 7
  %v252 = vsel %vm187, %v250, %v251
  %v253 = vrot.slane %v251, 2
  %v254 = vrot.slane %v137, 7
  %v255 = vsel %vm187, %v253, %v254
  %v256 = vrot.slane %v254, 2
  %v257 = vrot.slane %v145, 7
  %v258 = vsel %vm187, %v256, %v257
  %v259 = vrot.slane %v257, 2
  %v260 = vrot.slane %v153, 7
  %v261 = vsel %vm187, %v259, %v260
  %v262 = vrot.slane %v260, 2
  %v263 = vrot.slane %v152, 7
  %v264 = vsel %vm187, %v262, %v263
  %v265 = vrot.slane %v263, 2
  %v266 = vrot.slane %v154, 7
  %v267 = vsel %vm187, %v265, %v266
  %v268 = vrot.slane %v266, 2
  %v269 = vrot.slane %v162, 7
  %v270 = vsel %vm187, %v268, %v269
  %v271 = vrot.slane %v269, 2
  %v272 = vrot.slane %v170, 7
  %v273 = vsel %vm187, %v271, %v272
  %v274 = vrot.slane %v272, 2
  %v275 = vrot.slane %v169, 7
  %v276 = vsel %vm187, %v274, %v275
  %v277 = vrot.slane %v275, 2
  %v278 = vrot.slane %v180, 7
  %v279 = vsel %vm187, %v277, %v278
  %s280 = scalar_lea.vmem %s1, 64
  %v281 = vld [vmem:[%s280] sm:$0xff]
  %v282 = vld [vmem:[%s280 + $0x8] sm:$0xff]
  %v283 = vld [vmem:[%s280 + $0x10] sm:$0xff]
  %v284 = vld [vmem:[%s280 + $0x18] sm:$0xff]
  %v285 = vld [vmem:[%s280 + $0x20] sm:$0xff]
  %v286 = vld [vmem:[%s280 + $0x28] sm:$0xff]
  %v287 = vld [vmem:[%s280 + $0x30] sm:$0xff]
  %v288 = vld [vmem:[%s280 + $0x38] sm:$0xff]
  %v289 = vcombine.low %v191, %v194
  %v290 = vcombine.low %v197, %v200
  %v292 = vunpack.c.l.s4 1983009808
  %v293 = vunpack.c.0.s8 %v292
  %v294 = vlaneseq
  %v295 = vshrl.u32 %v294, 7
  %v296 = vsub.s32 %v293, %v295
  %v297 = vrot.slane %v289, %v296
  %v299 = vunpack.c.l.s4 1983009808
  %v300 = vunpack.c.0.s8 %v299
  %v301 = vlaneseq
  %v302 = vshrl.u32 %v301, 7
  %v303 = vsub.s32 %v300, %v302
  %v304 = vrot.slane %v290, %v303
  %v305 = vcombine.low %v297, %v304
  %v306 = vcombine.low %v203, %v206
  %v307 = vcombine.low %v209, %v212
  %v309 = vunpack.c.l.s4 1983009808
  %v310 = vunpack.c.0.s8 %v309
  %v311 = vlaneseq
  %v312 = vshrl.u32 %v311, 7
  %v313 = vsub.s32 %v310, %v312
  %v314 = vrot.slane %v306, %v313
  %v316 = vunpack.c.l.s4 1983009808
  %v317 = vunpack.c.0.s8 %v316
  %v318 = vlaneseq
  %v319 = vshrl.u32 %v318, 7
  %v320 = vsub.s32 %v317, %v319
  %v321 = vrot.slane %v307, %v320
  %v322 = vcombine.low %v314, %v321
  %v323 = vcombine.low %v215, %v218
  %v324 = vcombine.low %v221, %v224
  %v326 = vunpack.c.l.s4 1983009808
  %v327 = vunpack.c.0.s8 %v326
  %v328 = vlaneseq
  %v329 = vshrl.u32 %v328, 7
  %v330 = vsub.s32 %v327, %v329
  %v331 = vrot.slane %v323, %v330
  %v333 = vunpack.c.l.s4 1983009808
  %v334 = vunpack.c.0.s8 %v333
  %v335 = vlaneseq
  %v336 = vshrl.u32 %v335, 7
  %v337 = vsub.s32 %v334, %v336
  %v338 = vrot.slane %v324, %v337
  %v339 = vcombine.low %v331, %v338
  %v340 = vcombine.low %v227, %v230
  %v341 = vcombine.low %v233, %v237
  %v343 = vunpack.c.l.s4 1983009808
  %v344 = vunpack.c.0.s8 %v343
  %v345 = vlaneseq
  %v346 = vshrl.u32 %v345, 7
  %v347 = vsub.s32 %v344, %v346
  %v348 = vrot.slane %v340, %v347
  %v350 = vunpack.c.l.s4 1983009808
  %v351 = vunpack.c.0.s8 %v350
  %v352 = vlaneseq
  %v353 = vshrl.u32 %v352, 7
  %v354 = vsub.s32 %v351, %v353
  %v355 = vrot.slane %v341, %v354
  %v356 = vcombine.low %v348, %v355
  %v357 = vcombine.low %v240, %v243
  %v358 = vcombine.low %v246, %v249
  %v360 = vunpack.c.l.s4 1983009808
  %v361 = vunpack.c.0.s8 %v360
  %v362 = vlaneseq
  %v363 = vshrl.u32 %v362, 7
  %v364 = vsub.s32 %v361, %v363
  %v365 = vrot.slane %v357, %v364
  %v367 = vunpack.c.l.s4 1983009808
  %v368 = vunpack.c.0.s8 %v367
  %v369 = vlaneseq
  %v370 = vshrl.u32 %v369, 7
  %v371 = vsub.s32 %v368, %v370
  %v372 = vrot.slane %v358, %v371
  %v373 = vcombine.low %v365, %v372
  %v374 = vcombine.low %v252, %v255
  %v375 = vcombine.low %v258, %v261
  %v377 = vunpack.c.l.s4 1983009808
  %v378 = vunpack.c.0.s8 %v377
  %v379 = vlaneseq
  %v380 = vshrl.u32 %v379, 7
  %v381 = vsub.s32 %v378, %v380
  %v382 = vrot.slane %v374, %v381
  %v384 = vunpack.c.l.s4 1983009808
  %v385 = vunpack.c.0.s8 %v384
  %v386 = vlaneseq
  %v387 = vshrl.u32 %v386, 7
  %v388 = vsub.s32 %v385, %v387
  %v389 = vrot.slane %v375, %v388
  %v390 = vcombine.low %v382, %v389
  %v391 = vcombine.low %v264, %v267
  %v392 = vcombine.low %v270, %v273
  %v394 = vunpack.c.l.s4 1983009808
  %v395 = vunpack.c.0.s8 %v394
  %v396 = vlaneseq
  %v397 = vshrl.u32 %v396, 7
  %v398 = vsub.s32 %v395, %v397
  %v399 = vrot.slane %v391, %v398
  %v401 = vunpack.c.l.s4 1983009808
  %v402 = vunpack.c.0.s8 %v401
  %v403 = vlaneseq
  %v404 = vshrl.u32 %v403, 7
  %v405 = vsub.s32 %v402, %v404
  %v406 = vrot.slane %v392, %v405
  %v407 = vcombine.low %v399, %v406
  %v408 = vcombine.low %v276, %v279
  %v410 = vunpack.c.l.s4 1983009808
  %v411 = vunpack.c.0.s8 %v410
  %v412 = vlaneseq
  %v413 = vshrl.u32 %v412, 7
  %v414 = vsub.s32 %v411, %v413
  %v415 = vrot.slane %v408, %v414
  %vm416 = vcmask 261120
  %v417 = vsel %vm416, %v305, 0
  %v419 = vsel %vm416, %v322, 0
  %v421 = vsel %vm416, %v339, 0
  %v423 = vsel %vm416, %v356, 0
  %v425 = vsel %vm416, %v373, 0
  %v427 = vsel %vm416, %v390, 0
  %v429 = vsel %vm416, %v407, 0
  %v431 = vsel %vm416, %v415, 0
  %433 = vmatprep.subr.mxu0 %v282
  %434 = vmatpush1.msra.mxu0 %v281
  %435 = vmatprep.subr.mxu0 %v284
  %436 = vmatpush1.msra.mxu0 %v283
  %437 = vmatprep.subr.mxu0 %v286
  %438 = vmatpush1.msra.mxu0 %v285
  %439 = vmatprep.subr.mxu0 %v288
  %440 = vmatpush1.msra.mxu0 %v287
  %441 = vmatprep.subr.mxu0 0.0
  %442 = vmatpush1.msra.mxu0 0.0
  %443 = vmatprep.subr.mxu0 0.0
  %444 = vmatpush1.msra.mxu0 0.0
  %445 = vmatprep.subr.mxu0 0.0
  %446 = vmatpush1.msra.mxu0 0.0
  %447 = vmatprep.subr.mxu0 0.0
  %448 = vmatpush1.msra.mxu0 0.0
  %449 = vmatprep.subr.mxu0 0.0
  %450 = vmatpush1.msra.mxu0 0.0
  %451 = vmatprep.subr.mxu0 0.0
  %452 = vmatpush1.msra.mxu0 0.0
  %453 = vmatprep.subr.mxu0 0.0
  %454 = vmatpush1.msra.mxu0 0.0
  %455 = vmatprep.subr.mxu0 0.0
  %456 = vmatpush1.msra.mxu0 0.0
  %457 = vmatprep.subr.mxu0 0.0
  %458 = vmatpush1.msra.mxu0 0.0
  %459 = vmatprep.subr.mxu0 0.0
  %460 = vmatpush1.msra.mxu0 0.0
  %461 = vmatprep.subr.mxu0 0.0
  %462 = vmatpush1.msra.mxu0 0.0
  %463 = vmatprep.subr.mxu0 0.0
  %464 = vmatpush1.msra.mxu0 0.0
  %465 = vmatprep.subr.mxu0 0.0
  %466 = vmatpush1.msra.mxu0 0.0
  %467 = vmatprep.subr.mxu0 0.0
  %468 = vmatpush1.msra.mxu0 0.0
  %469 = vmatprep.subr.mxu0 0.0
  %470 = vmatpush1.msra.mxu0 0.0
  %471 = vmatprep.subr.mxu0 0.0
  %472 = vmatpush1.msra.mxu0 0.0
  %473 = vmatprep.subr.mxu0 0.0
  %474 = vmatpush1.msra.mxu0 0.0
  %475 = vmatprep.subr.mxu0 0.0
  %476 = vmatpush1.msra.mxu0 0.0
  %477 = vmatprep.subr.mxu0 0.0
  %478 = vmatpush1.msra.mxu0 0.0
  %479 = vmatprep.subr.mxu0 0.0
  %480 = vmatpush1.msra.mxu0 0.0
  %481 = vmatprep.subr.mxu0 0.0
  %482 = vmatpush1.msra.mxu0 0.0
  %483 = vmatprep.subr.mxu0 0.0
  %484 = vmatpush1.msra.mxu0 0.0
  %485 = vmatprep.subr.mxu0 0.0
  %486 = vmatpush1.msra.mxu0 0.0
  %487 = vmatprep.subr.mxu0 0.0
  %488 = vmatpush1.msra.mxu0 0.0
  %489 = vmatprep.subr.mxu0 0.0
  %490 = vmatpush1.msra.mxu0 0.0
  %491 = vmatprep.subr.mxu0 0.0
  %492 = vmatpush1.msra.mxu0 0.0
  %493 = vmatprep.subr.mxu0 0.0
  %494 = vmatpush1.msra.mxu0 0.0
  %495 = vmatprep.subr.mxu0 0.0
  %496 = vmatpush1.msra.mxu0 0.0
  %497 = vmatprep.mubr.f32.mxu0 0.0
  %498 = vmatmul.mubr.f32.gmra.mrb[0].mxu0 %v417
  %v499 = vpop.f32.mrb[0].mxu0
  %v500 = vadd.f32 0.0, %v499
  %v501 = vpop.f32.mrb[0].mxu0
  %v502 = vadd.f32 0.0, %v501
  %503 = vmatprep.mubr.f32.mxu0 0.0
  %504 = vmatmul.mubr.f32.gmra.mrb[0].mxu0 %v419
  %v505 = vpop.f32.mrb[0].mxu0
  %v506 = vadd.f32 0.0, %v505
  %v507 = vpop.f32.mrb[0].mxu0
  %v508 = vadd.f32 0.0, %v507
  %509 = vmatprep.mubr.f32.mxu0 0.0
  %510 = vmatmul.mubr.f32.gmra.mrb[0].mxu0 %v421
  %v511 = vpop.f32.mrb[0].mxu0
  %v512 = vadd.f32 0.0, %v511
  %v513 = vpop.f32.mrb[0].mxu0
  %v514 = vadd.f32 0.0, %v513
  %515 = vmatprep.mubr.f32.mxu0 0.0
  %516 = vmatmul.mubr.f32.gmra.mrb[0].mxu0 %v423
  %v517 = vpop.f32.mrb[0].mxu0
  %v518 = vadd.f32 0.0, %v517
  %v519 = vpop.f32.mrb[0].mxu0
  %v520 = vadd.f32 0.0, %v519
  %521 = vmatprep.mubr.f32.mxu0 0.0
  %522 = vmatmul.mubr.f32.gmra.mrb[0].mxu0 %v425
  %v523 = vpop.f32.mrb[0].mxu0
  %v524 = vadd.f32 0.0, %v523
  %v525 = vpop.f32.mrb[0].mxu0
  %v526 = vadd.f32 0.0, %v525
  %527 = vmatprep.mubr.f32.mxu0 0.0
  %528 = vmatmul.mubr.f32.gmra.mrb[0].mxu0 %v427
  %v529 = vpop.f32.mrb[0].mxu0
  %v530 = vadd.f32 0.0, %v529
  %v531 = vpop.f32.mrb[0].mxu0
  %v532 = vadd.f32 0.0, %v531
  %533 = vmatprep.mubr.f32.mxu0 0.0
  %534 = vmatmul.mubr.f32.gmra.mrb[0].mxu0 %v429
  %v535 = vpop.f32.mrb[0].mxu0
  %v536 = vadd.f32 0.0, %v535
  %v537 = vpop.f32.mrb[0].mxu0
  %v538 = vadd.f32 0.0, %v537
  %539 = vmatprep.mubr.f32.mxu0 0.0
  %540 = vmatmul.mubr.f32.gmra.mrb[0].mxu0 %v431
  %v541 = vpop.f32.mrb[0].mxu0
  %v542 = vadd.f32 0.0, %v541
  %v543 = vpop.f32.mrb[0].mxu0
  %v544 = vadd.f32 0.0, %v543
  %545 = vdwg.mxu0
  %v546 = vcombine.low %v44, %v52
  %v547 = vcombine.low %v51, %v53
  %v549 = vunpack.c.l.s4 1983009808
  %v550 = vunpack.c.0.s8 %v549
  %v551 = vlaneseq
  %v552 = vshrl.u32 %v551, 7
  %v553 = vsub.s32 %v550, %v552
  %v554 = vrot.slane %v546, %v553
  %v556 = vunpack.c.l.s4 1983009808
  %v557 = vunpack.c.0.s8 %v556
  %v558 = vlaneseq
  %v559 = vshrl.u32 %v558, 7
  %v560 = vsub.s32 %v557, %v559
  %v561 = vrot.slane %v547, %v560
  %v562 = vcombine.low %v554, %v561
  %v563 = vcombine.low %v61, %v69
  %v564 = vcombine.low %v68, %v70
  %v566 = vunpack.c.l.s4 1983009808
  %v567 = vunpack.c.0.s8 %v566
  %v568 = vlaneseq
  %v569 = vshrl.u32 %v568, 7
  %v570 = vsub.s32 %v567, %v569
  %v571 = vrot.slane %v563, %v570
  %v573 = vunpack.c.l.s4 1983009808
  %v574 = vunpack.c.0.s8 %v573
  %v575 = vlaneseq
  %v576 = vshrl.u32 %v575, 7
  %v577 = vsub.s32 %v574, %v576
  %v578 = vrot.slane %v564, %v577
  %v579 = vcombine.low %v571, %v578
  %v580 = vcombine.low %v78, %v86
  %v581 = vcombine.low %v85, %v87
  %v583 = vunpack.c.l.s4 1983009808
  %v584 = vunpack.c.0.s8 %v583
  %v585 = vlaneseq
  %v586 = vshrl.u32 %v585, 7
  %v587 = vsub.s32 %v584, %v586
  %v588 = vrot.slane %v580, %v587
  %v590 = vunpack.c.l.s4 1983009808
  %v591 = vunpack.c.0.s8 %v590
  %v592 = vlaneseq
  %v593 = vshrl.u32 %v592, 7
  %v594 = vsub.s32 %v591, %v593
  %v595 = vrot.slane %v581, %v594
  %v596 = vcombine.low %v588, %v595
  %v597 = vcombine.low %v95, %v103
  %v598 = vcombine.low %v102, %v111
  %v600 = vunpack.c.l.s4 1983009808
  %v601 = vunpack.c.0.s8 %v600
  %v602 = vlaneseq
  %v603 = vshrl.u32 %v602, 7
  %v604 = vsub.s32 %v601, %v603
  %v605 = vrot.slane %v597, %v604
  %v607 = vunpack.c.l.s4 1983009808
  %v608 = vunpack.c.0.s8 %v607
  %v609 = vlaneseq
  %v610 = vshrl.u32 %v609, 7
  %v611 = vsub.s32 %v608, %v610
  %v612 = vrot.slane %v598, %v611
  %v613 = vcombine.low %v605, %v612
  %v614 = vcombine.low %v119, %v118
  %v615 = vcombine.low %v120, %v128
  %v617 = vunpack.c.l.s4 1983009808
  %v618 = vunpack.c.0.s8 %v617
  %v619 = vlaneseq
  %v620 = vshrl.u32 %v619, 7
  %v621 = vsub.s32 %v618, %v620
  %v622 = vrot.slane %v614, %v621
  %v624 = vunpack.c.l.s4 1983009808
  %v625 = vunpack.c.0.s8 %v624
  %v626 = vlaneseq
  %v627 = vshrl.u32 %v626, 7
  %v628 = vsub.s32 %v625, %v627
  %v629 = vrot.slane %v615, %v628
  %v630 = vcombine.low %v622, %v629
  %v631 = vcombine.low %v136, %v135
  %v632 = vcombine.low %v137, %v145
  %v634 = vunpack.c.l.s4 1983009808
  %v635 = vunpack.c.0.s8 %v634
  %v636 = vlaneseq
  %v637 = vshrl.u32 %v636, 7
  %v638 = vsub.s32 %v635, %v637
  %v639 = vrot.slane %v631, %v638
  %v641 = vunpack.c.l.s4 1983009808
  %v642 = vunpack.c.0.s8 %v641
  %v643 = vlaneseq
  %v644 = vshrl.u32 %v643, 7
  %v645 = vsub.s32 %v642, %v644
  %v646 = vrot.slane %v632, %v645
  %v647 = vcombine.low %v639, %v646
  %v648 = vcombine.low %v153, %v152
  %v649 = vcombine.low %v154, %v162
  %v651 = vunpack.c.l.s4 1983009808
  %v652 = vunpack.c.0.s8 %v651
  %v653 = vlaneseq
  %v654 = vshrl.u32 %v653, 7
  %v655 = vsub.s32 %v652, %v654
  %v656 = vrot.slane %v648, %v655
  %v658 = vunpack.c.l.s4 1983009808
  %v659 = vunpack.c.0.s8 %v658
  %v660 = vlaneseq
  %v661 = vshrl.u32 %v660, 7
  %v662 = vsub.s32 %v659, %v661
  %v663 = vrot.slane %v649, %v662
  %v664 = vcombine.low %v656, %v663
  %v665 = vcombine.low %v170, %v169
  %v667 = vunpack.c.l.s4 1983009808
  %v668 = vunpack.c.0.s8 %v667
  %v669 = vlaneseq
  %v670 = vshrl.u32 %v669, 7
  %v671 = vsub.s32 %v668, %v670
  %v672 = vrot.slane %v665, %v671
  %v673 = vsel %vm416, %v562, 0
  %v675 = vsel %vm416, %v579, 0
  %v677 = vsel %vm416, %v596, 0
  %v679 = vsel %vm416, %v613, 0
  %v681 = vsel %vm416, %v630, 0
  %v683 = vsel %vm416, %v647, 0
  %v685 = vsel %vm416, %v664, 0
  %v687 = vsel %vm416, %v672, 0
  %689 = vmatprep.subr.mxu0 %v172
  %690 = vmatpush1.msra.mxu0 %v171
  %691 = vmatprep.subr.mxu0 %v174
  %692 = vmatpush1.msra.mxu0 %v173
  %693 = vmatprep.subr.mxu0 %v176
  %694 = vmatpush1.msra.mxu0 %v175
  %695 = vmatprep.subr.mxu0 %v178
  %696 = vmatpush1.msra.mxu0 %v177
  %697 = vmatprep.subr.mxu0 0.0
  %698 = vmatpush1.msra.mxu0 0.0
  %699 = vmatprep.subr.mxu0 0.0
  %700 = vmatpush1.msra.mxu0 0.0
  %701 = vmatprep.subr.mxu0 0.0
  %702 = vmatpush1.msra.mxu0 0.0
  %703 = vmatprep.subr.mxu0 0.0
  %704 = vmatpush1.msra.mxu0 0.0
  %705 = vmatprep.subr.mxu0 0.0
  %706 = vmatpush1.msra.mxu0 0.0
  %707 = vmatprep.subr.mxu0 0.0
  %708 = vmatpush1.msra.mxu0 0.0
  %709 = vmatprep.subr.mxu0 0.0
  %710 = vmatpush1.msra.mxu0 0.0
  %711 = vmatprep.subr.mxu0 0.0
  %712 = vmatpush1.msra.mxu0 0.0
  %713 = vmatprep.subr.mxu0 0.0
  %714 = vmatpush1.msra.mxu0 0.0
  %715 = vmatprep.subr.mxu0 0.0
  %716 = vmatpush1.msra.mxu0 0.0
  %717 = vmatprep.subr.mxu0 0.0
  %718 = vmatpush1.msra.mxu0 0.0
  %719 = vmatprep.subr.mxu0 0.0
  %720 = vmatpush1.msra.mxu0 0.0
  %721 = vmatprep.subr.mxu0 0.0
  %722 = vmatpush1.msra.mxu0 0.0
  %723 = vmatprep.subr.mxu0 0.0
  %724 = vmatpush1.msra.mxu0 0.0
  %725 = vmatprep.subr.mxu0 0.0
  %726 = vmatpush1.msra.mxu0 0.0
  %727 = vmatprep.subr.mxu0 0.0
  %728 = vmatpush1.msra.mxu0 0.0
  %729 = vmatprep.subr.mxu0 0.0
  %730 = vmatpush1.msra.mxu0 0.0
  %731 = vmatprep.subr.mxu0 0.0
  %732 = vmatpush1.msra.mxu0 0.0
  %733 = vmatprep.subr.mxu0 0.0
  %734 = vmatpush1.msra.mxu0 0.0
  %735 = vmatprep.subr.mxu0 0.0
  %736 = vmatpush1.msra.mxu0 0.0
  %737 = vmatprep.subr.mxu0 0.0
  %738 = vmatpush1.msra.mxu0 0.0
  %739 = vmatprep.subr.mxu0 0.0
  %740 = vmatpush1.msra.mxu0 0.0
  %741 = vmatprep.subr.mxu0 0.0
  %742 = vmatpush1.msra.mxu0 0.0
  %743 = vmatprep.subr.mxu0 0.0
  %744 = vmatpush1.msra.mxu0 0.0
  %745 = vmatprep.subr.mxu0 0.0
  %746 = vmatpush1.msra.mxu0 0.0
  %747 = vmatprep.subr.mxu0 0.0
  %748 = vmatpush1.msra.mxu0 0.0
  %749 = vmatprep.subr.mxu0 0.0
  %750 = vmatpush1.msra.mxu0 0.0
  %751 = vmatprep.subr.mxu0 0.0
  %752 = vmatpush1.msra.mxu0 0.0
  %753 = vmatprep.mubr.f32.mxu0 0.0
  %754 = vmatmul.mubr.f32.gmra.mrb[0].mxu0 %v673
  %v755 = vpop.f32.mrb[0].mxu0
  %v756 = vadd.f32 %v500, %v755
  %v757 = vpop.f32.mrb[0].mxu0
  %v758 = vadd.f32 %v502, %v757
  %759 = vmatprep.mubr.f32.mxu0 0.0
  %760 = vmatmul.mubr.f32.gmra.mrb[0].mxu0 %v675
  %v761 = vpop.f32.mrb[0].mxu0
  %v762 = vadd.f32 %v506, %v761
  %v763 = vpop.f32.mrb[0].mxu0
  %v764 = vadd.f32 %v508, %v763
  %765 = vmatprep.mubr.f32.mxu0 0.0
  %766 = vmatmul.mubr.f32.gmra.mrb[0].mxu0 %v677
  %v767 = vpop.f32.mrb[0].mxu0
  %v768 = vadd.f32 %v512, %v767
  %v769 = vpop.f32.mrb[0].mxu0
  %v770 = vadd.f32 %v514, %v769
  %771 = vmatprep.mubr.f32.mxu0 0.0
  %772 = vmatmul.mubr.f32.gmra.mrb[0].mxu0 %v679
  %v773 = vpop.f32.mrb[0].mxu0
  %v774 = vadd.f32 %v518, %v773
  %v775 = vpop.f32.mrb[0].mxu0
  %v776 = vadd.f32 %v520, %v775
  %777 = vmatprep.mubr.f32.mxu0 0.0
  %778 = vmatmul.mubr.f32.gmra.mrb[0].mxu0 %v681
  %v779 = vpop.f32.mrb[0].mxu0
  %v780 = vadd.f32 %v524, %v779
  %v781 = vpop.f32.mrb[0].mxu0
  %v782 = vadd.f32 %v526, %v781
  %783 = vmatprep.mubr.f32.mxu0 0.0
  %784 = vmatmul.mubr.f32.gmra.mrb[0].mxu0 %v683
  %v785 = vpop.f32.mrb[0].mxu0
  %v786 = vadd.f32 %v530, %v785
  %v787 = vpop.f32.mrb[0].mxu0
  %v788 = vadd.f32 %v532, %v787
  %789 = vmatprep.mubr.f32.mxu0 0.0
  %790 = vmatmul.mubr.f32.gmra.mrb[0].mxu0 %v685
  %v791 = vpop.f32.mrb[0].mxu0
  %v792 = vadd.f32 %v536, %v791
  %v793 = vpop.f32.mrb[0].mxu0
  %v794 = vadd.f32 %v538, %v793
  %795 = vmatprep.mubr.f32.mxu0 0.0
  %796 = vmatmul.mubr.f32.gmra.mrb[0].mxu0 %v687
  %v797 = vpop.f32.mrb[0].mxu0
  %v798 = vadd.f32 %v542, %v797
  %v799 = vpop.f32.mrb[0].mxu0
  %v800 = vadd.f32 %v544, %v799
  %801 = vdwg.mxu0
  %s802 = scalar_lea.vmem %s1, 128
  %v803 = vld [vmem:[%s802] sm:$0xff]
  %v804 = vld [vmem:[%s802 + $0x8] sm:$0xff]
  %v805 = vld [vmem:[%s802 + $0x10] sm:$0xff]
  %v806 = vld [vmem:[%s802 + $0x18] sm:$0xff]
  %v807 = vld [vmem:[%s802 + $0x20] sm:$0xff]
  %v808 = vld [vmem:[%s802 + $0x28] sm:$0xff]
  %v809 = vld [vmem:[%s802 + $0x30] sm:$0xff]
  %v810 = vld [vmem:[%s802 + $0x38] sm:$0xff]
  %v811 = vcombine.low %v52, %v51
  %v812 = vcombine.low %v53, %v61
  %v814 = vunpack.c.l.s4 1983009808
  %v815 = vunpack.c.0.s8 %v814
  %v816 = vlaneseq
  %v817 = vshrl.u32 %v816, 7
  %v818 = vsub.s32 %v815, %v817
  %v819 = vrot.slane %v811, %v818
  %v821 = vunpack.c.l.s4 1983009808
  %v822 = vunpack.c.0.s8 %v821
  %v823 = vlaneseq
  %v824 = vshrl.u32 %v823, 7
  %v825 = vsub.s32 %v822, %v824
  %v826 = vrot.slane %v812, %v825
  %v827 = vcombine.low %v819, %v826
  %v828 = vcombine.low %v69, %v68
  %v829 = vcombine.low %v70, %v78
  %v831 = vunpack.c.l.s4 1983009808
  %v832 = vunpack.c.0.s8 %v831
  %v833 = vlaneseq
  %v834 = vshrl.u32 %v833, 7
  %v835 = vsub.s32 %v832, %v834
  %v836 = vrot.slane %v828, %v835
  %v838 = vunpack.c.l.s4 1983009808
  %v839 = vunpack.c.0.s8 %v838
  %v840 = vlaneseq
  %v841 = vshrl.u32 %v840, 7
  %v842 = vsub.s32 %v839, %v841
  %v843 = vrot.slane %v829, %v842
  %v844 = vcombine.low %v836, %v843
  %v845 = vcombine.low %v86, %v85
  %v846 = vcombine.low %v87, %v95
  %v848 = vunpack.c.l.s4 1983009808
  %v849 = vunpack.c.0.s8 %v848
  %v850 = vlaneseq
  %v851 = vshrl.u32 %v850, 7
  %v852 = vsub.s32 %v849, %v851
  %v853 = vrot.slane %v845, %v852
  %v855 = vunpack.c.l.s4 1983009808
  %v856 = vunpack.c.0.s8 %v855
  %v857 = vlaneseq
  %v858 = vshrl.u32 %v857, 7
  %v859 = vsub.s32 %v856, %v858
  %v860 = vrot.slane %v846, %v859
  %v861 = vcombine.low %v853, %v860
  %v862 = vcombine.low %v103, %v102
  %v863 = vcombine.low %v179, %v119
  %v865 = vunpack.c.l.s4 1983009808
  %v866 = vunpack.c.0.s8 %v865
  %v867 = vlaneseq
  %v868 = vshrl.u32 %v867, 7
  %v869 = vsub.s32 %v866, %v868
  %v870 = vrot.slane %v862, %v869
  %v872 = vunpack.c.l.s4 1983009808
  %v873 = vunpack.c.0.s8 %v872
  %v874 = vlaneseq
  %v875 = vshrl.u32 %v874, 7
  %v876 = vsub.s32 %v873, %v875
  %v877 = vrot.slane %v863, %v876
  %v878 = vcombine.low %v870, %v877
  %v879 = vcombine.low %v118, %v120
  %v880 = vcombine.low %v128, %v136
  %v882 = vunpack.c.l.s4 1983009808
  %v883 = vunpack.c.0.s8 %v882
  %v884 = vlaneseq
  %v885 = vshrl.u32 %v884, 7
  %v886 = vsub.s32 %v883, %v885
  %v887 = vrot.slane %v879, %v886
  %v889 = vunpack.c.l.s4 1983009808
  %v890 = vunpack.c.0.s8 %v889
  %v891 = vlaneseq
  %v892 = vshrl.u32 %v891, 7
  %v893 = vsub.s32 %v890, %v892
  %v894 = vrot.slane %v880, %v893
  %v895 = vcombine.low %v887, %v894
  %v896 = vcombine.low %v135, %v137
  %v897 = vcombine.low %v145, %v153
  %v899 = vunpack.c.l.s4 1983009808
  %v900 = vunpack.c.0.s8 %v899
  %v901 = vlaneseq
  %v902 = vshrl.u32 %v901, 7
  %v903 = vsub.s32 %v900, %v902
  %v904 = vrot.slane %v896, %v903
  %v906 = vunpack.c.l.s4 1983009808
  %v907 = vunpack.c.0.s8 %v906
  %v908 = vlaneseq
  %v909 = vshrl.u32 %v908, 7
  %v910 = vsub.s32 %v907, %v909
  %v911 = vrot.slane %v897, %v910
  %v912 = vcombine.low %v904, %v911
  %v913 = vcombine.low %v152, %v154
  %v914 = vcombine.low %v162, %v170
  %v916 = vunpack.c.l.s4 1983009808
  %v917 = vunpack.c.0.s8 %v916
  %v918 = vlaneseq
  %v919 = vshrl.u32 %v918, 7
  %v920 = vsub.s32 %v917, %v919
  %v921 = vrot.slane %v913, %v920
  %v923 = vunpack.c.l.s4 1983009808
  %v924 = vunpack.c.0.s8 %v923
  %v925 = vlaneseq
  %v926 = vshrl.u32 %v925, 7
  %v927 = vsub.s32 %v924, %v926
  %v928 = vrot.slane %v914, %v927
  %v929 = vcombine.low %v921, %v928
  %v930 = vcombine.low %v169, %v180
  %v932 = vunpack.c.l.s4 1983009808
  %v933 = vunpack.c.0.s8 %v932
  %v934 = vlaneseq
  %v935 = vshrl.u32 %v934, 7
  %v936 = vsub.s32 %v933, %v935
  %v937 = vrot.slane %v930, %v936
  %v938 = vsel %vm416, %v827, 0
  %v940 = vsel %vm416, %v844, 0
  %v942 = vsel %vm416, %v861, 0
  %v944 = vsel %vm416, %v878, 0
  %v946 = vsel %vm416, %v895, 0
  %v948 = vsel %vm416, %v912, 0
  %v950 = vsel %vm416, %v929, 0
  %v952 = vsel %vm416, %v937, 0
  %954 = vmatprep.subr.mxu0 %v804
  %955 = vmatpush1.msra.mxu0 %v803
  %956 = vmatprep.subr.mxu0 %v806
  %957 = vmatpush1.msra.mxu0 %v805
  %958 = vmatprep.subr.mxu0 %v808
  %959 = vmatpush1.msra.mxu0 %v807
  %960 = vmatprep.subr.mxu0 %v810
  %961 = vmatpush1.msra.mxu0 %v809
  %962 = vmatprep.subr.mxu0 0.0
  %963 = vmatpush1.msra.mxu0 0.0
  %964 = vmatprep.subr.mxu0 0.0
  %965 = vmatpush1.msra.mxu0 0.0
  %966 = vmatprep.subr.mxu0 0.0
  %967 = vmatpush1.msra.mxu0 0.0
  %968 = vmatprep.subr.mxu0 0.0
  %969 = vmatpush1.msra.mxu0 0.0
  %970 = vmatprep.subr.mxu0 0.0
  %971 = vmatpush1.msra.mxu0 0.0
  %972 = vmatprep.subr.mxu0 0.0
  %973 = vmatpush1.msra.mxu0 0.0
  %974 = vmatprep.subr.mxu0 0.0
  %975 = vmatpush1.msra.mxu0 0.0
  %976 = vmatprep.subr.mxu0 0.0
  %977 = vmatpush1.msra.mxu0 0.0
  %978 = vmatprep.subr.mxu0 0.0
  %979 = vmatpush1.msra.mxu0 0.0
  %980 = vmatprep.subr.mxu0 0.0
  %981 = vmatpush1.msra.mxu0 0.0
  %982 = vmatprep.subr.mxu0 0.0
  %983 = vmatpush1.msra.mxu0 0.0
  %984 = vmatprep.subr.mxu0 0.0
  %985 = vmatpush1.msra.mxu0 0.0
  %986 = vmatprep.subr.mxu0 0.0
  %987 = vmatpush1.msra.mxu0 0.0
  %988 = vmatprep.subr.mxu0 0.0
  %989 = vmatpush1.msra.mxu0 0.0
  %990 = vmatprep.subr.mxu0 0.0
  %991 = vmatpush1.msra.mxu0 0.0
  %992 = vmatprep.subr.mxu0 0.0
  %993 = vmatpush1.msra.mxu0 0.0
  %994 = vmatprep.subr.mxu0 0.0
  %995 = vmatpush1.msra.mxu0 0.0
  %996 = vmatprep.subr.mxu0 0.0
  %997 = vmatpush1.msra.mxu0 0.0
  %998 = vmatprep.subr.mxu0 0.0
  %999 = vmatpush1.msra.mxu0 0.0
  %1000 = vmatprep.subr.mxu0 0.0
  %1001 = vmatpush1.msra.mxu0 0.0
  %1002 = vmatprep.subr.mxu0 0.0
  %1003 = vmatpush1.msra.mxu0 0.0
  %1004 = vmatprep.subr.mxu0 0.0
  %1005 = vmatpush1.msra.mxu0 0.0
  %1006 = vmatprep.subr.mxu0 0.0
  %1007 = vmatpush1.msra.mxu0 0.0
  %1008 = vmatprep.subr.mxu0 0.0
  %1009 = vmatpush1.msra.mxu0 0.0
  %1010 = vmatprep.subr.mxu0 0.0
  %1011 = vmatpush1.msra.mxu0 0.0
  %1012 = vmatprep.subr.mxu0 0.0
  %1013 = vmatpush1.msra.mxu0 0.0
  %1014 = vmatprep.subr.mxu0 0.0
  %1015 = vmatpush1.msra.mxu0 0.0
  %1016 = vmatprep.subr.mxu0 0.0
  %1017 = vmatpush1.msra.mxu0 0.0
  %1018 = vmatprep.mubr.f32.mxu0 0.0
  %1019 = vmatmul.mubr.f32.gmra.mrb[0].mxu0 %v938
  %v1020 = vpop.f32.mrb[0].mxu0
  %v1021 = vadd.f32 0.0, %v1020
  %v1022 = vpop.f32.mrb[0].mxu0
  %v1023 = vadd.f32 0.0, %v1022
  %1024 = vmatprep.mubr.f32.mxu0 0.0
  %1025 = vmatmul.mubr.f32.gmra.mrb[0].mxu0 %v940
  %v1026 = vpop.f32.mrb[0].mxu0
  %v1027 = vadd.f32 0.0, %v1026
  %v1028 = vpop.f32.mrb[0].mxu0
  %v1029 = vadd.f32 0.0, %v1028
  %1030 = vmatprep.mubr.f32.mxu0 0.0
  %1031 = vmatmul.mubr.f32.gmra.mrb[0].mxu0 %v942
  %v1032 = vpop.f32.mrb[0].mxu0
  %v1033 = vadd.f32 0.0, %v1032
  %v1034 = vpop.f32.mrb[0].mxu0
  %v1035 = vadd.f32 0.0, %v1034
  %1036 = vmatprep.mubr.f32.mxu0 0.0
  %1037 = vmatmul.mubr.f32.gmra.mrb[0].mxu0 %v944
  %v1038 = vpop.f32.mrb[0].mxu0
  %v1039 = vadd.f32 0.0, %v1038
  %v1040 = vpop.f32.mrb[0].mxu0
  %v1041 = vadd.f32 0.0, %v1040
  %1042 = vmatprep.mubr.f32.mxu0 0.0
  %1043 = vmatmul.mubr.f32.gmra.mrb[0].mxu0 %v946
  %v1044 = vpop.f32.mrb[0].mxu0
  %v1045 = vadd.f32 0.0, %v1044
  %v1046 = vpop.f32.mrb[0].mxu0
  %v1047 = vadd.f32 0.0, %v1046
  %1048 = vmatprep.mubr.f32.mxu0 0.0
  %1049 = vmatmul.mubr.f32.gmra.mrb[0].mxu0 %v948
  %v1050 = vpop.f32.mrb[0].mxu0
  %v1051 = vadd.f32 0.0, %v1050
  %v1052 = vpop.f32.mrb[0].mxu0
  %v1053 = vadd.f32 0.0, %v1052
  %1054 = vmatprep.mubr.f32.mxu0 0.0
  %1055 = vmatmul.mubr.f32.gmra.mrb[0].mxu0 %v950
  %v1056 = vpop.f32.mrb[0].mxu0
  %v1057 = vadd.f32 0.0, %v1056
  %v1058 = vpop.f32.mrb[0].mxu0
  %v1059 = vadd.f32 0.0, %v1058
  %1060 = vmatprep.mubr.f32.mxu0 0.0
  %1061 = vmatmul.mubr.f32.gmra.mrb[0].mxu0 %v952
  %v1062 = vpop.f32.mrb[0].mxu0
  %v1063 = vadd.f32 0.0, %v1062
  %v1064 = vpop.f32.mrb[0].mxu0
  %v1065 = vadd.f32 0.0, %v1064
  %1066 = vdwg.mxu0
  %v1067 = vadd.f32 %v756, %v1021
  %v1068 = vadd.f32 %v758, %v1023
  %v1069 = vadd.f32 %v762, %v1027
  %v1070 = vadd.f32 %v764, %v1029
  %v1071 = vadd.f32 %v768, %v1033
  %v1072 = vadd.f32 %v770, %v1035
  %v1073 = vadd.f32 %v774, %v1039
  %v1074 = vadd.f32 %v776, %v1041
  %v1075 = vadd.f32 %v780, %v1045
  %v1076 = vadd.f32 %v782, %v1047
  %v1077 = vadd.f32 %v786, %v1051
  %v1078 = vadd.f32 %v788, %v1053
  %v1079 = vadd.f32 %v792, %v1057
  %v1080 = vadd.f32 %v794, %v1059
  %v1081 = vadd.f32 %v798, %v1063
  %v1082 = vadd.f32 %v800, %v1065
  %v1083 = vld [vmem:[%s2] sm:$0x3]
  %v1085 = vlaneseq
  %v1086 = vshrl.u32 %v1085, 7
  %v1087 = vsub.s32 0, %v1086
  %v1088 = vrot.slane %v1083, %v1087
  %v1089 = vlaneseq
  %v1090 = vshrl.u32 %v1089, 7
  %v1091 = vsub.s32 1, %v1090
  %v1092 = vrot.slane %v1083, %v1091
  %v1095 = vadd.f32 %v1067, %v1088
  %v1096 = vadd.f32 %v1068, %v1092
  %v1097 = vadd.f32 %v1069, %v1088
  %v1098 = vadd.f32 %v1070, %v1092
  %v1099 = vadd.f32 %v1071, %v1088
  %v1100 = vadd.f32 %v1072, %v1092
  %v1101 = vadd.f32 %v1073, %v1088
  %v1102 = vadd.f32 %v1074, %v1092
  %v1103 = vadd.f32 %v1075, %v1088
  %v1104 = vadd.f32 %v1076, %v1092
  %v1105 = vadd.f32 %v1077, %v1088
  %v1106 = vadd.f32 %v1078, %v1092
  %v1107 = vadd.f32 %v1079, %v1088
  %v1108 = vadd.f32 %v1080, %v1092
  %v1109 = vadd.f32 %v1081, %v1088
  %v1110 = vadd.f32 %v1082, %v1092
  %v1111 = vmax.f32 %v1095, 0.0
  %v1112 = vmax.f32 %v1096, 0.0
  %v1113 = vmax.f32 %v1097, 0.0
  %v1114 = vmax.f32 %v1098, 0.0
  %v1115 = vmax.f32 %v1099, 0.0
  %v1116 = vmax.f32 %v1100, 0.0
  %v1117 = vmax.f32 %v1101, 0.0
  %v1118 = vmax.f32 %v1102, 0.0
  %v1119 = vmax.f32 %v1103, 0.0
  %v1120 = vmax.f32 %v1104, 0.0
  %v1121 = vmax.f32 %v1105, 0.0
  %v1122 = vmax.f32 %v1106, 0.0
  %v1123 = vmax.f32 %v1107, 0.0
  %v1124 = vmax.f32 %v1108, 0.0
  %v1125 = vmax.f32 %v1109, 0.0
  %v1126 = vmax.f32 %v1110, 0.0
  %v1143 = vcombine.low %v1111, %v1112
  %v1144 = vcombine.high %v1111, %v1112
  %v1146 = vunpack.c.l.s4 1983009808
  %v1147 = vunpack.c.0.s8 %v1146
  %v1148 = vlaneseq
  %v1149 = vshrl.u32 %v1148, 7
  %v1150 = vsub.s32 %v1147, %v1149
  %v1151 = vrot.slane %v1143, %v1150
  %v1153 = vunpack.c.l.s4 1983009808
  %v1154 = vunpack.c.0.s8 %v1153
  %v1155 = vlaneseq
  %v1156 = vshrl.u32 %v1155, 7
  %v1157 = vsub.s32 %v1154, %v1156
  %v1158 = vrot.slane %v1144, %v1157
  %v1159 = vcombine.high %v1151, %v1151
  %v1160 = vcombine.high %v1158, %v1158
  %v1161 = vcombine.low %v1113, %v1114
  %v1162 = vcombine.high %v1113, %v1114
  %v1164 = vunpack.c.l.s4 1983009808
  %v1165 = vunpack.c.0.s8 %v1164
  %v1166 = vlaneseq
  %v1167 = vshrl.u32 %v1166, 7
  %v1168 = vsub.s32 %v1165, %v1167
  %v1169 = vrot.slane %v1161, %v1168
  %v1171 = vunpack.c.l.s4 1983009808
  %v1172 = vunpack.c.0.s8 %v1171
  %v1173 = vlaneseq
  %v1174 = vshrl.u32 %v1173, 7
  %v1175 = vsub.s32 %v1172, %v1174
  %v1176 = vrot.slane %v1162, %v1175
  %v1177 = vcombine.high %v1169, %v1169
  %v1178 = vcombine.high %v1176, %v1176
  %v1179 = vcombine.low %v1115, %v1116
  %v1180 = vcombine.high %v1115, %v1116
  %v1182 = vunpack.c.l.s4 1983009808
  %v1183 = vunpack.c.0.s8 %v1182
  %v1184 = vlaneseq
  %v1185 = vshrl.u32 %v1184, 7
  %v1186 = vsub.s32 %v1183, %v1185
  %v1187 = vrot.slane %v1179, %v1186
  %v1189 = vunpack.c.l.s4 1983009808
  %v1190 = vunpack.c.0.s8 %v1189
  %v1191 = vlaneseq
  %v1192 = vshrl.u32 %v1191, 7
  %v1193 = vsub.s32 %v1190, %v1192
  %v1194 = vrot.slane %v1180, %v1193
  %v1195 = vcombine.high %v1187, %v1187
  %v1196 = vcombine.high %v1194, %v1194
  %v1197 = vcombine.low %v1117, %v1118
  %v1198 = vcombine.high %v1117, %v1118
  %v1200 = vunpack.c.l.s4 1983009808
  %v1201 = vunpack.c.0.s8 %v1200
  %v1202 = vlaneseq
  %v1203 = vshrl.u32 %v1202, 7
  %v1204 = vsub.s32 %v1201, %v1203
  %v1205 = vrot.slane %v1197, %v1204
  %v1207 = vunpack.c.l.s4 1983009808
  %v1208 = vunpack.c.0.s8 %v1207
  %v1209 = vlaneseq
  %v1210 = vshrl.u32 %v1209, 7
  %v1211 = vsub.s32 %v1208, %v1210
  %v1212 = vrot.slane %v1198, %v1211
  %v1213 = vcombine.high %v1205, %v1205
  %v1214 = vcombine.high %v1212, %v1212
  %v1215 = vcombine.low %v1119, %v1120
  %v1216 = vcombine.high %v1119, %v1120
  %v1218 = vunpack.c.l.s4 1983009808
  %v1219 = vunpack.c.0.s8 %v1218
  %v1220 = vlaneseq
  %v1221 = vshrl.u32 %v1220, 7
  %v1222 = vsub.s32 %v1219, %v1221
  %v1223 = vrot.slane %v1215, %v1222
  %v1225 = vunpack.c.l.s4 1983009808
  %v1226 = vunpack.c.0.s8 %v1225
  %v1227 = vlaneseq
  %v1228 = vshrl.u32 %v1227, 7
  %v1229 = vsub.s32 %v1226, %v1228
  %v1230 = vrot.slane %v1216, %v1229
  %v1231 = vcombine.high %v1223, %v1223
  %v1232 = vcombine.high %v1230, %v1230
  %v1233 = vcombine.low %v1121, %v1122
  %v1234 = vcombine.high %v1121, %v1122
  %v1236 = vunpack.c.l.s4 1983009808
  %v1237 = vunpack.c.0.s8 %v1236
  %v1238 = vlaneseq
  %v1239 = vshrl.u32 %v1238, 7
  %v1240 = vsub.s32 %v1237, %v1239
  %v1241 = vrot.slane %v1233, %v1240
  %v1243 = vunpack.c.l.s4 1983009808
  %v1244 = vunpack.c.0.s8 %v1243
  %v1245 = vlaneseq
  %v1246 = vshrl.u32 %v1245, 7
  %v1247 = vsub.s32 %v1244, %v1246
  %v1248 = vrot.slane %v1234, %v1247
  %v1249 = vcombine.high %v1241, %v1241
  %v1250 = vcombine.high %v1248, %v1248
  %v1251 = vcombine.low %v1123, %v1124
  %v1252 = vcombine.high %v1123, %v1124
  %v1254 = vunpack.c.l.s4 1983009808
  %v1255 = vunpack.c.0.s8 %v1254
  %v1256 = vlaneseq
  %v1257 = vshrl.u32 %v1256, 7
  %v1258 = vsub.s32 %v1255, %v1257
  %v1259 = vrot.slane %v1251, %v1258
  %v1261 = vunpack.c.l.s4 1983009808
  %v1262 = vunpack.c.0.s8 %v1261
  %v1263 = vlaneseq
  %v1264 = vshrl.u32 %v1263, 7
  %v1265 = vsub.s32 %v1262, %v1264
  %v1266 = vrot.slane %v1252, %v1265
  %v1267 = vcombine.high %v1259, %v1259
  %v1268 = vcombine.high %v1266, %v1266
  %v1269 = vcombine.low %v1125, %v1126
  %v1271 = vunpack.c.l.s4 1983009808
  %v1272 = vunpack.c.0.s8 %v1271
  %v1273 = vlaneseq
  %v1274 = vshrl.u32 %v1273, 7
  %v1275 = vsub.s32 %v1272, %v1274
  %v1276 = vrot.slane %v1269, %v1275
  %v1277 = vcombine.high %v1276, %v1276
  %1308 = vrot.lane.b32.xlu0 %v1151, 122
  %v1309 = vpop.permute.xlu0 %1308
  %1310 = vrot.lane.b32.xlu0 %v1159, 122
  %v1311 = vpop.permute.xlu0 %1310
  %1312 = vrot.lane.b32.xlu0 %v1158, 122
  %v1313 = vpop.permute.xlu0 %1312
  %1314 = vrot.lane.b32.xlu0 %v1160, 122
  %v1315 = vpop.permute.xlu0 %1314
  %1316 = vrot.lane.b32.xlu0 %v1169, 122
  %v1317 = vpop.permute.xlu0 %1316
  %1318 = vrot.lane.b32.xlu0 %v1177, 122
  %v1319 = vpop.permute.xlu0 %1318
  %1320 = vrot.lane.b32.xlu0 %v1176, 122
  %v1321 = vpop.permute.xlu0 %1320
  %1322 = vrot.lane.b32.xlu0 %v1178, 122
  %v1323 = vpop.permute.xlu0 %1322
  %1324 = vrot.lane.b32.xlu0 %v1187, 122
  %v1325 = vpop.permute.xlu0 %1324
  %1326 = vrot.lane.b32.xlu0 %v1195, 122
  %v1327 = vpop.permute.xlu0 %1326
  %1328 = vrot.lane.b32.xlu0 %v1194, 122
  %v1329 = vpop.permute.xlu0 %1328
  %1330 = vrot.lane.b32.xlu0 %v1196, 122
  %v1331 = vpop.permute.xlu0 %1330
  %1332 = vrot.lane.b32.xlu0 %v1205, 122
  %v1333 = vpop.permute.xlu0 %1332
  %1334 = vrot.lane.b32.xlu0 %v1213, 122
  %v1335 = vpop.permute.xlu0 %1334
  %1336 = vrot.lane.b32.xlu0 %v1212, 122
  %v1337 = vpop.permute.xlu0 %1336
  %1338 = vrot.lane.b32.xlu0 %v1214, 122
  %v1339 = vpop.permute.xlu0 %1338
  %1340 = vrot.lane.b32.xlu0 %v1223, 122
  %v1341 = vpop.permute.xlu0 %1340
  %1342 = vrot.lane.b32.xlu0 %v1231, 122
  %v1343 = vpop.permute.xlu0 %1342
  %1344 = vrot.lane.b32.xlu0 %v1230, 122
  %v1345 = vpop.permute.xlu0 %1344
  %1346 = vrot.lane.b32.xlu0 %v1232, 122
  %v1347 = vpop.permute.xlu0 %1346
  %1348 = vrot.lane.b32.xlu0 %v1241, 122
  %v1349 = vpop.permute.xlu0 %1348
  %1350 = vrot.lane.b32.xlu0 %v1249, 122
  %v1351 = vpop.permute.xlu0 %1350
  %1352 = vrot.lane.b32.xlu0 %v1248, 122
  %v1353 = vpop.permute.xlu0 %1352
  %1354 = vrot.lane.b32.xlu0 %v1250, 122
  %v1355 = vpop.permute.xlu0 %1354
  %1356 = vrot.lane.b32.xlu0 %v1259, 122
  %v1357 = vpop.permute.xlu0 %1356
  %1358 = vrot.lane.b32.xlu0 %v1267, 122
  %v1359 = vpop.permute.xlu0 %1358
  %1360 = vrot.lane.b32.xlu0 %v1266, 122
  %v1361 = vpop.permute.xlu0 %1360
  %1362 = vrot.lane.b32.xlu0 %v1268, 122
  %v1363 = vpop.permute.xlu0 %1362
  %1364 = vrot.lane.b32.xlu0 %v1276, 122
  %v1365 = vpop.permute.xlu0 %1364
  %1366 = vrot.lane.b32.xlu0 %v1277, 122
  %v1367 = vpop.permute.xlu0 %1366
  %v1398 = vmax.f32 %v1151, %v1309
  %v1399 = vmax.f32 %v1159, %v1311
  %v1400 = vmax.f32 %v1158, %v1313
  %v1401 = vmax.f32 %v1160, %v1315
  %v1402 = vmax.f32 %v1169, %v1317
  %v1403 = vmax.f32 %v1177, %v1319
  %v1404 = vmax.f32 %v1176, %v1321
  %v1405 = vmax.f32 %v1178, %v1323
  %v1406 = vmax.f32 %v1187, %v1325
  %v1407 = vmax.f32 %v1195, %v1327
  %v1408 = vmax.f32 %v1194, %v1329
  %v1409 = vmax.f32 %v1196, %v1331
  %v1410 = vmax.f32 %v1205, %v1333
  %v1411 = vmax.f32 %v1213, %v1335
  %v1412 = vmax.f32 %v1212, %v1337
  %v1413 = vmax.f32 %v1214, %v1339
  %v1414 = vmax.f32 %v1223, %v1341
  %v1415 = vmax.f32 %v1231, %v1343
  %v1416 = vmax.f32 %v1230, %v1345
  %v1417 = vmax.f32 %v1232, %v1347
  %v1418 = vmax.f32 %v1241, %v1349
  %v1419 = vmax.f32 %v1249, %v1351
  %v1420 = vmax.f32 %v1248, %v1353
  %v1421 = vmax.f32 %v1250, %v1355
  %v1422 = vmax.f32 %v1259, %v1357
  %v1423 = vmax.f32 %v1267, %v1359
  %v1424 = vmax.f32 %v1266, %v1361
  %v1425 = vmax.f32 %v1268, %v1363
  %v1426 = vmax.f32 %v1276, %v1365
  %v1427 = vmax.f32 %v1277, %v1367
  %v1428 = vrot.slane %v1309, 2
  %v1429 = vrot.slane %v1311, 2
  %v1430 = vrot.slane %v1313, 2
  %v1431 = vrot.slane %v1315, 2
  %v1432 = vrot.slane %v1317, 2
  %v1433 = vrot.slane %v1319, 2
  %v1434 = vrot.slane %v1321, 2
  %v1435 = vrot.slane %v1323, 2
  %v1436 = vrot.slane %v1325, 2
  %v1437 = vrot.slane %v1327, 2
  %v1438 = vrot.slane %v1329, 2
  %v1439 = vrot.slane %v1331, 2
  %v1440 = vrot.slane %v1333, 2
  %v1441 = vrot.slane %v1335, 2
  %v1442 = vrot.slane %v1337, 2
  %v1443 = vrot.slane %v1339, 2
  %v1444 = vrot.slane %v1341, 2
  %v1445 = vrot.slane %v1343, 2
  %v1446 = vrot.slane %v1345, 2
  %v1447 = vrot.slane %v1347, 2
  %v1448 = vrot.slane %v1349, 2
  %v1449 = vrot.slane %v1351, 2
  %v1450 = vrot.slane %v1353, 2
  %v1451 = vrot.slane %v1355, 2
  %v1452 = vrot.slane %v1357, 2
  %v1453 = vrot.slane %v1359, 2
  %v1454 = vrot.slane %v1361, 2
  %v1455 = vrot.slane %v1363, 2
  %v1456 = vrot.slane %v1365, 2
  %v1457 = vrot.slane %v1367, 2
  %vm1458 = vcmask 998400
  %v1459 = vsel %vm1458, %v1309, %v1428
  %v1460 = vsel %vm1458, %v1311, %v1429
  %v1461 = vsel %vm1458, %v1313, %v1430
  %v1462 = vsel %vm1458, %v1315, %v1431
  %v1463 = vsel %vm1458, %v1317, %v1432
  %v1464 = vsel %vm1458, %v1319, %v1433
  %v1465 = vsel %vm1458, %v1321, %v1434
  %v1466 = vsel %vm1458, %v1323, %v1435
  %v1467 = vsel %vm1458, %v1325, %v1436
  %v1468 = vsel %vm1458, %v1327, %v1437
  %v1469 = vsel %vm1458, %v1329, %v1438
  %v1470 = vsel %vm1458, %v1331, %v1439
  %v1471 = vsel %vm1458, %v1333, %v1440
  %v1472 = vsel %vm1458, %v1335, %v1441
  %v1473 = vsel %vm1458, %v1337, %v1442
  %v1474 = vsel %vm1458, %v1339, %v1443
  %v1475 = vsel %vm1458, %v1341, %v1444
  %v1476 = vsel %vm1458, %v1343, %v1445
  %v1477 = vsel %vm1458, %v1345, %v1446
  %v1478 = vsel %vm1458, %v1347, %v1447
  %v1479 = vsel %vm1458, %v1349, %v1448
  %v1480 = vsel %vm1458, %v1351, %v1449
  %v1481 = vsel %vm1458, %v1353, %v1450
  %v1482 = vsel %vm1458, %v1355, %v1451
  %v1483 = vsel %vm1458, %v1357, %v1452
  %v1484 = vsel %vm1458, %v1359, %v1453
  %v1485 = vsel %vm1458, %v1361, %v1454
  %v1486 = vsel %vm1458, %v1363, %v1455
  %v1487 = vsel %vm1458, %v1365, %v1456
  %v1488 = vsel %vm1458, %v1367, %v1457
  %v1519 = vmax.f32 %v1151, %v1459
  %v1520 = vmax.f32 %v1159, %v1460
  %v1521 = vmax.f32 %v1158, %v1461
  %v1522 = vmax.f32 %v1160, %v1462
  %v1523 = vmax.f32 %v1169, %v1463
  %v1524 = vmax.f32 %v1177, %v1464
  %v1525 = vmax.f32 %v1176, %v1465
  %v1526 = vmax.f32 %v1178, %v1466
  %v1527 = vmax.f32 %v1187, %v1467
  %v1528 = vmax.f32 %v1195, %v1468
  %v1529 = vmax.f32 %v1194, %v1469
  %v1530 = vmax.f32 %v1196, %v1470
  %v1531 = vmax.f32 %v1205, %v1471
  %v1532 = vmax.f32 %v1213, %v1472
  %v1533 = vmax.f32 %v1212, %v1473
  %v1534 = vmax.f32 %v1214, %v1474
  %v1535 = vmax.f32 %v1223, %v1475
  %v1536 = vmax.f32 %v1231, %v1476
  %v1537 = vmax.f32 %v1230, %v1477
  %v1538 = vmax.f32 %v1232, %v1478
  %v1539 = vmax.f32 %v1241, %v1479
  %v1540 = vmax.f32 %v1249, %v1480
  %v1541 = vmax.f32 %v1248, %v1481
  %v1542 = vmax.f32 %v1250, %v1482
  %v1543 = vmax.f32 %v1259, %v1483
  %v1544 = vmax.f32 %v1267, %v1484
  %v1545 = vmax.f32 %v1266, %v1485
  %v1546 = vmax.f32 %v1268, %v1486
  %v1547 = vmax.f32 %v1276, %v1487
  %v1548 = vmax.f32 %v1277, %v1488
  %1549 = vrot.lane.b32.xlu0 %v1151, 124
  %v1550 = vpop.permute.xlu0 %1549
  %1551 = vrot.lane.b32.xlu0 %v1159, 124
  %v1552 = vpop.permute.xlu0 %1551
  %1553 = vrot.lane.b32.xlu0 %v1158, 124
  %v1554 = vpop.permute.xlu0 %1553
  %1555 = vrot.lane.b32.xlu0 %v1160, 124
  %v1556 = vpop.permute.xlu0 %1555
  %1557 = vrot.lane.b32.xlu0 %v1169, 124
  %v1558 = vpop.permute.xlu0 %1557
  %1559 = vrot.lane.b32.xlu0 %v1177, 124
  %v1560 = vpop.permute.xlu0 %1559
  %1561 = vrot.lane.b32.xlu0 %v1176, 124
  %v1562 = vpop.permute.xlu0 %1561
  %1563 = vrot.lane.b32.xlu0 %v1178, 124
  %v1564 = vpop.permute.xlu0 %1563
  %1565 = vrot.lane.b32.xlu0 %v1187, 124
  %v1566 = vpop.permute.xlu0 %1565
  %1567 = vrot.lane.b32.xlu0 %v1195, 124
  %v1568 = vpop.permute.xlu0 %1567
  %1569 = vrot.lane.b32.xlu0 %v1194, 124
  %v1570 = vpop.permute.xlu0 %1569
  %1571 = vrot.lane.b32.xlu0 %v1196, 124
  %v1572 = vpop.permute.xlu0 %1571
  %1573 = vrot.lane.b32.xlu0 %v1205, 124
  %v1574 = vpop.permute.xlu0 %1573
  %1575 = vrot.lane.b32.xlu0 %v1213, 124
  %v1576 = vpop.permute.xlu0 %1575
  %1577 = vrot.lane.b32.xlu0 %v1212, 124
  %v1578 = vpop.permute.xlu0 %1577
  %1579 = vrot.lane.b32.xlu0 %v1214, 124
  %v1580 = vpop.permute.xlu0 %1579
  %1581 = vrot.lane.b32.xlu0 %v1223, 124
  %v1582 = vpop.permute.xlu0 %1581
  %1583 = vrot.lane.b32.xlu0 %v1231, 124
  %v1584 = vpop.permute.xlu0 %1583
  %1585 = vrot.lane.b32.xlu0 %v1230, 124
  %v1586 = vpop.permute.xlu0 %1585
  %1587 = vrot.lane.b32.xlu0 %v1232, 124
  %v1588 = vpop.permute.xlu0 %1587
  %1589 = vrot.lane.b32.xlu0 %v1241, 124
  %v1590 = vpop.permute.xlu0 %1589
  %1591 = vrot.lane.b32.xlu0 %v1249, 124
  %v1592 = vpop.permute.xlu0 %1591
  %1593 = vrot.lane.b32.xlu0 %v1248, 124
  %v1594 = vpop.permute.xlu0 %1593
  %1595 = vrot.lane.b32.xlu0 %v1250, 124
  %v1596 = vpop.permute.xlu0 %1595
  %1597 = vrot.lane.b32.xlu0 %v1259, 124
  %v1598 = vpop.permute.xlu0 %1597
  %1599 = vrot.lane.b32.xlu0 %v1267, 124
  %v1600 = vpop.permute.xlu0 %1599
  %1601 = vrot.lane.b32.xlu0 %v1266, 124
  %v1602 = vpop.permute.xlu0 %1601
  %1603 = vrot.lane.b32.xlu0 %v1268, 124
  %v1604 = vpop.permute.xlu0 %1603
  %1605 = vrot.lane.b32.xlu0 %v1276, 124
  %v1606 = vpop.permute.xlu0 %1605
  %1607 = vrot.lane.b32.xlu0 %v1277, 124
  %v1608 = vpop.permute.xlu0 %1607
  %v1609 = vrot.slane %v1550, 2
  %v1610 = vrot.slane %v1552, 2
  %v1611 = vrot.slane %v1554, 2
  %v1612 = vrot.slane %v1556, 2
  %v1613 = vrot.slane %v1558, 2
  %v1614 = vrot.slane %v1560, 2
  %v1615 = vrot.slane %v1562, 2
  %v1616 = vrot.slane %v1564, 2
  %v1617 = vrot.slane %v1566, 2
  %v1618 = vrot.slane %v1568, 2
  %v1619 = vrot.slane %v1570, 2
  %v1620 = vrot.slane %v1572, 2
  %v1621 = vrot.slane %v1574, 2
  %v1622 = vrot.slane %v1576, 2
  %v1623 = vrot.slane %v1578, 2
  %v1624 = vrot.slane %v1580, 2
  %v1625 = vrot.slane %v1582, 2
  %v1626 = vrot.slane %v1584, 2
  %v1627 = vrot.slane %v1586, 2
  %v1628 = vrot.slane %v1588, 2
  %v1629 = vrot.slane %v1590, 2
  %v1630 = vrot.slane %v1592, 2
  %v1631 = vrot.slane %v1594, 2
  %v1632 = vrot.slane %v1596, 2
  %v1633 = vrot.slane %v1598, 2
  %v1634 = vrot.slane %v1600, 2
  %v1635 = vrot.slane %v1602, 2
  %v1636 = vrot.slane %v1604, 2
  %v1637 = vrot.slane %v1606, 2
  %v1638 = vrot.slane %v1608, 2
  %1669 = vrot.lane.b32.xlu0 %v1151, 118
  %v1670 = vpop.permute.xlu0 %1669
  %1671 = vrot.lane.b32.xlu0 %v1159, 118
  %v1672 = vpop.permute.xlu0 %1671
  %1673 = vrot.lane.b32.xlu0 %v1158, 118
  %v1674 = vpop.permute.xlu0 %1673
  %1675 = vrot.lane.b32.xlu0 %v1160, 118
  %v1676 = vpop.permute.xlu0 %1675
  %1677 = vrot.lane.b32.xlu0 %v1169, 118
  %v1678 = vpop.permute.xlu0 %1677
  %1679 = vrot.lane.b32.xlu0 %v1177, 118
  %v1680 = vpop.permute.xlu0 %1679
  %1681 = vrot.lane.b32.xlu0 %v1176, 118
  %v1682 = vpop.permute.xlu0 %1681
  %1683 = vrot.lane.b32.xlu0 %v1178, 118
  %v1684 = vpop.permute.xlu0 %1683
  %1685 = vrot.lane.b32.xlu0 %v1187, 118
  %v1686 = vpop.permute.xlu0 %1685
  %1687 = vrot.lane.b32.xlu0 %v1195, 118
  %v1688 = vpop.permute.xlu0 %1687
  %1689 = vrot.lane.b32.xlu0 %v1194, 118
  %v1690 = vpop.permute.xlu0 %1689
  %1691 = vrot.lane.b32.xlu0 %v1196, 118
  %v1692 = vpop.permute.xlu0 %1691
  %1693 = vrot.lane.b32.xlu0 %v1205, 118
  %v1694 = vpop.permute.xlu0 %1693
  %1695 = vrot.lane.b32.xlu0 %v1213, 118
  %v1696 = vpop.permute.xlu0 %1695
  %1697 = vrot.lane.b32.xlu0 %v1212, 118
  %v1698 = vpop.permute.xlu0 %1697
  %1699 = vrot.lane.b32.xlu0 %v1214, 118
  %v1700 = vpop.permute.xlu0 %1699
  %1701 = vrot.lane.b32.xlu0 %v1223, 118
  %v1702 = vpop.permute.xlu0 %1701
  %1703 = vrot.lane.b32.xlu0 %v1231, 118
  %v1704 = vpop.permute.xlu0 %1703
  %1705 = vrot.lane.b32.xlu0 %v1230, 118
  %v1706 = vpop.permute.xlu0 %1705
  %1707 = vrot.lane.b32.xlu0 %v1232, 118
  %v1708 = vpop.permute.xlu0 %1707
  %1709 = vrot.lane.b32.xlu0 %v1241, 118
  %v1710 = vpop.permute.xlu0 %1709
  %1711 = vrot.lane.b32.xlu0 %v1249, 118
  %v1712 = vpop.permute.xlu0 %1711
  %1713 = vrot.lane.b32.xlu0 %v1248, 118
  %v1714 = vpop.permute.xlu0 %1713
  %1715 = vrot.lane.b32.xlu0 %v1250, 118
  %v1716 = vpop.permute.xlu0 %1715
  %1717 = vrot.lane.b32.xlu0 %v1259, 118
  %v1718 = vpop.permute.xlu0 %1717
  %1719 = vrot.lane.b32.xlu0 %v1267, 118
  %v1720 = vpop.permute.xlu0 %1719
  %1721 = vrot.lane.b32.xlu0 %v1266, 118
  %v1722 = vpop.permute.xlu0 %1721
  %1723 = vrot.lane.b32.xlu0 %v1268, 118
  %v1724 = vpop.permute.xlu0 %1723
  %1725 = vrot.lane.b32.xlu0 %v1276, 118
  %v1726 = vpop.permute.xlu0 %1725
  %1727 = vrot.lane.b32.xlu0 %v1277, 118
  %v1728 = vpop.permute.xlu0 %1727
  %v1729 = vrot.slane %v1670, 2
  %v1730 = vrot.slane %v1672, 2
  %v1731 = vrot.slane %v1674, 2
  %v1732 = vrot.slane %v1676, 2
  %v1733 = vrot.slane %v1678, 2
  %v1734 = vrot.slane %v1680, 2
  %v1735 = vrot.slane %v1682, 2
  %v1736 = vrot.slane %v1684, 2
  %v1737 = vrot.slane %v1686, 2
  %v1738 = vrot.slane %v1688, 2
  %v1739 = vrot.slane %v1690, 2
  %v1740 = vrot.slane %v1692, 2
  %v1741 = vrot.slane %v1694, 2
  %v1742 = vrot.slane %v1696, 2
  %v1743 = vrot.slane %v1698, 2
  %v1744 = vrot.slane %v1700, 2
  %v1745 = vrot.slane %v1702, 2
  %v1746 = vrot.slane %v1704, 2
  %v1747 = vrot.slane %v1706, 2
  %v1748 = vrot.slane %v1708, 2
  %v1749 = vrot.slane %v1710, 2
  %v1750 = vrot.slane %v1712, 2
  %v1751 = vrot.slane %v1714, 2
  %v1752 = vrot.slane %v1716, 2
  %v1753 = vrot.slane %v1718, 2
  %v1754 = vrot.slane %v1720, 2
  %v1755 = vrot.slane %v1722, 2
  %v1756 = vrot.slane %v1724, 2
  %v1757 = vrot.slane %v1726, 2
  %v1758 = vrot.slane %v1728, 2
  %v1789 = vmax.f32 %v1609, %v1729
  %v1790 = vmax.f32 %v1610, %v1730
  %v1791 = vmax.f32 %v1611, %v1731
  %v1792 = vmax.f32 %v1612, %v1732
  %v1793 = vmax.f32 %v1613, %v1733
  %v1794 = vmax.f32 %v1614, %v1734
  %v1795 = vmax.f32 %v1615, %v1735
  %v1796 = vmax.f32 %v1616, %v1736
  %v1797 = vmax.f32 %v1617, %v1737
  %v1798 = vmax.f32 %v1618, %v1738
  %v1799 = vmax.f32 %v1619, %v1739
  %v1800 = vmax.f32 %v1620, %v1740
  %v1801 = vmax.f32 %v1621, %v1741
  %v1802 = vmax.f32 %v1622, %v1742
  %v1803 = vmax.f32 %v1623, %v1743
  %v1804 = vmax.f32 %v1624, %v1744
  %v1805 = vmax.f32 %v1625, %v1745
  %v1806 = vmax.f32 %v1626, %v1746
  %v1807 = vmax.f32 %v1627, %v1747
  %v1808 = vmax.f32 %v1628, %v1748
  %v1809 = vmax.f32 %v1629, %v1749
  %v1810 = vmax.f32 %v1630, %v1750
  %v1811 = vmax.f32 %v1631, %v1751
  %v1812 = vmax.f32 %v1632, %v1752
  %v1813 = vmax.f32 %v1633, %v1753
  %v1814 = vmax.f32 %v1634, %v1754
  %v1815 = vmax.f32 %v1635, %v1755
  %v1816 = vmax.f32 %v1636, %v1756
  %v1817 = vmax.f32 %v1637, %v1757
  %v1818 = vmax.f32 %v1638, %v1758
  %1819 = vrot.lane.b32.xlu0 %v1151, 112
  %v1820 = vpop.permute.xlu0 %1819
  %1821 = vrot.lane.b32.xlu0 %v1159, 112
  %v1822 = vpop.permute.xlu0 %1821
  %1823 = vrot.lane.b32.xlu0 %v1158, 112
  %v1824 = vpop.permute.xlu0 %1823
  %1825 = vrot.lane.b32.xlu0 %v1160, 112
  %v1826 = vpop.permute.xlu0 %1825
  %1827 = vrot.lane.b32.xlu0 %v1169, 112
  %v1828 = vpop.permute.xlu0 %1827
  %1829 = vrot.lane.b32.xlu0 %v1177, 112
  %v1830 = vpop.permute.xlu0 %1829
  %1831 = vrot.lane.b32.xlu0 %v1176, 112
  %v1832 = vpop.permute.xlu0 %1831
  %1833 = vrot.lane.b32.xlu0 %v1178, 112
  %v1834 = vpop.permute.xlu0 %1833
  %1835 = vrot.lane.b32.xlu0 %v1187, 112
  %v1836 = vpop.permute.xlu0 %1835
  %1837 = vrot.lane.b32.xlu0 %v1195, 112
  %v1838 = vpop.permute.xlu0 %1837
  %1839 = vrot.lane.b32.xlu0 %v1194, 112
  %v1840 = vpop.permute.xlu0 %1839
  %1841 = vrot.lane.b32.xlu0 %v1196, 112
  %v1842 = vpop.permute.xlu0 %1841
  %1843 = vrot.lane.b32.xlu0 %v1205, 112
  %v1844 = vpop.permute.xlu0 %1843
  %1845 = vrot.lane.b32.xlu0 %v1213, 112
  %v1846 = vpop.permute.xlu0 %1845
  %1847 = vrot.lane.b32.xlu0 %v1212, 112
  %v1848 = vpop.permute.xlu0 %1847
  %1849 = vrot.lane.b32.xlu0 %v1214, 112
  %v1850 = vpop.permute.xlu0 %1849
  %1851 = vrot.lane.b32.xlu0 %v1223, 112
  %v1852 = vpop.permute.xlu0 %1851
  %1853 = vrot.lane.b32.xlu0 %v1231, 112
  %v1854 = vpop.permute.xlu0 %1853
  %1855 = vrot.lane.b32.xlu0 %v1230, 112
  %v1856 = vpop.permute.xlu0 %1855
  %1857 = vrot.lane.b32.xlu0 %v1232, 112
  %v1858 = vpop.permute.xlu0 %1857
  %1859 = vrot.lane.b32.xlu0 %v1241, 112
  %v1860 = vpop.permute.xlu0 %1859
  %1861 = vrot.lane.b32.xlu0 %v1249, 112
  %v1862 = vpop.permute.xlu0 %1861
  %1863 = vrot.lane.b32.xlu0 %v1248, 112
  %v1864 = vpop.permute.xlu0 %1863
  %1865 = vrot.lane.b32.xlu0 %v1250, 112
  %v1866 = vpop.permute.xlu0 %1865
  %1867 = vrot.lane.b32.xlu0 %v1259, 112
  %v1868 = vpop.permute.xlu0 %1867
  %1869 = vrot.lane.b32.xlu0 %v1267, 112
  %v1870 = vpop.permute.xlu0 %1869
  %1871 = vrot.lane.b32.xlu0 %v1266, 112
  %v1872 = vpop.permute.xlu0 %1871
  %1873 = vrot.lane.b32.xlu0 %v1268, 112
  %v1874 = vpop.permute.xlu0 %1873
  %1875 = vrot.lane.b32.xlu0 %v1276, 112
  %v1876 = vpop.permute.xlu0 %1875
  %1877 = vrot.lane.b32.xlu0 %v1277, 112
  %v1878 = vpop.permute.xlu0 %1877
  %v1879 = vrot.slane %v1820, 2
  %v1880 = vrot.slane %v1822, 2
  %v1881 = vrot.slane %v1824, 2
  %v1882 = vrot.slane %v1826, 2
  %v1883 = vrot.slane %v1828, 2
  %v1884 = vrot.slane %v1830, 2
  %v1885 = vrot.slane %v1832, 2
  %v1886 = vrot.slane %v1834, 2
  %v1887 = vrot.slane %v1836, 2
  %v1888 = vrot.slane %v1838, 2
  %v1889 = vrot.slane %v1840, 2
  %v1890 = vrot.slane %v1842, 2
  %v1891 = vrot.slane %v1844, 2
  %v1892 = vrot.slane %v1846, 2
  %v1893 = vrot.slane %v1848, 2
  %v1894 = vrot.slane %v1850, 2
  %v1895 = vrot.slane %v1852, 2
  %v1896 = vrot.slane %v1854, 2
  %v1897 = vrot.slane %v1856, 2
  %v1898 = vrot.slane %v1858, 2
  %v1899 = vrot.slane %v1860, 2
  %v1900 = vrot.slane %v1862, 2
  %v1901 = vrot.slane %v1864, 2
  %v1902 = vrot.slane %v1866, 2
  %v1903 = vrot.slane %v1868, 2
  %v1904 = vrot.slane %v1870, 2
  %v1905 = vrot.slane %v1872, 2
  %v1906 = vrot.slane %v1874, 2
  %v1907 = vrot.slane %v1876, 2
  %v1908 = vrot.slane %v1878, 2
  %1939 = vrot.lane.b32.xlu0 %v1151, 106
  %v1940 = vpop.permute.xlu0 %1939
  %1941 = vrot.lane.b32.xlu0 %v1159, 106
  %v1942 = vpop.permute.xlu0 %1941
  %1943 = vrot.lane.b32.xlu0 %v1158, 106
  %v1944 = vpop.permute.xlu0 %1943
  %1945 = vrot.lane.b32.xlu0 %v1160, 106
  %v1946 = vpop.permute.xlu0 %1945
  %1947 = vrot.lane.b32.xlu0 %v1169, 106
  %v1948 = vpop.permute.xlu0 %1947
  %1949 = vrot.lane.b32.xlu0 %v1177, 106
  %v1950 = vpop.permute.xlu0 %1949
  %1951 = vrot.lane.b32.xlu0 %v1176, 106
  %v1952 = vpop.permute.xlu0 %1951
  %1953 = vrot.lane.b32.xlu0 %v1178, 106
  %v1954 = vpop.permute.xlu0 %1953
  %1955 = vrot.lane.b32.xlu0 %v1187, 106
  %v1956 = vpop.permute.xlu0 %1955
  %1957 = vrot.lane.b32.xlu0 %v1195, 106
  %v1958 = vpop.permute.xlu0 %1957
  %1959 = vrot.lane.b32.xlu0 %v1194, 106
  %v1960 = vpop.permute.xlu0 %1959
  %1961 = vrot.lane.b32.xlu0 %v1196, 106
  %v1962 = vpop.permute.xlu0 %1961
  %1963 = vrot.lane.b32.xlu0 %v1205, 106
  %v1964 = vpop.permute.xlu0 %1963
  %1965 = vrot.lane.b32.xlu0 %v1213, 106
  %v1966 = vpop.permute.xlu0 %1965
  %1967 = vrot.lane.b32.xlu0 %v1212, 106
  %v1968 = vpop.permute.xlu0 %1967
  %1969 = vrot.lane.b32.xlu0 %v1214, 106
  %v1970 = vpop.permute.xlu0 %1969
  %1971 = vrot.lane.b32.xlu0 %v1223, 106
  %v1972 = vpop.permute.xlu0 %1971
  %1973 = vrot.lane.b32.xlu0 %v1231, 106
  %v1974 = vpop.permute.xlu0 %1973
  %1975 = vrot.lane.b32.xlu0 %v1230, 106
  %v1976 = vpop.permute.xlu0 %1975
  %1977 = vrot.lane.b32.xlu0 %v1232, 106
  %v1978 = vpop.permute.xlu0 %1977
  %1979 = vrot.lane.b32.xlu0 %v1241, 106
  %v1980 = vpop.permute.xlu0 %1979
  %1981 = vrot.lane.b32.xlu0 %v1249, 106
  %v1982 = vpop.permute.xlu0 %1981
  %1983 = vrot.lane.b32.xlu0 %v1248, 106
  %v1984 = vpop.permute.xlu0 %1983
  %1985 = vrot.lane.b32.xlu0 %v1250, 106
  %v1986 = vpop.permute.xlu0 %1985
  %1987 = vrot.lane.b32.xlu0 %v1259, 106
  %v1988 = vpop.permute.xlu0 %1987
  %1989 = vrot.lane.b32.xlu0 %v1267, 106
  %v1990 = vpop.permute.xlu0 %1989
  %1991 = vrot.lane.b32.xlu0 %v1266, 106
  %v1992 = vpop.permute.xlu0 %1991
  %1993 = vrot.lane.b32.xlu0 %v1268, 106
  %v1994 = vpop.permute.xlu0 %1993
  %1995 = vrot.lane.b32.xlu0 %v1276, 106
  %v1996 = vpop.permute.xlu0 %1995
  %1997 = vrot.lane.b32.xlu0 %v1277, 106
  %v1998 = vpop.permute.xlu0 %1997
  %v1999 = vrot.slane %v1940, 2
  %v2000 = vrot.slane %v1942, 2
  %v2001 = vrot.slane %v1944, 2
  %v2002 = vrot.slane %v1946, 2
  %v2003 = vrot.slane %v1948, 2
  %v2004 = vrot.slane %v1950, 2
  %v2005 = vrot.slane %v1952, 2
  %v2006 = vrot.slane %v1954, 2
  %v2007 = vrot.slane %v1956, 2
  %v2008 = vrot.slane %v1958, 2
  %v2009 = vrot.slane %v1960, 2
  %v2010 = vrot.slane %v1962, 2
  %v2011 = vrot.slane %v1964, 2
  %v2012 = vrot.slane %v1966, 2
  %v2013 = vrot.slane %v1968, 2
  %v2014 = vrot.slane %v1970, 2
  %v2015 = vrot.slane %v1972, 2
  %v2016 = vrot.slane %v1974, 2
  %v2017 = vrot.slane %v1976, 2
  %v2018 = vrot.slane %v1978, 2
  %v2019 = vrot.slane %v1980, 2
  %v2020 = vrot.slane %v1982, 2
  %v2021 = vrot.slane %v1984, 2
  %v2022 = vrot.slane %v1986, 2
  %v2023 = vrot.slane %v1988, 2
  %v2024 = vrot.slane %v1990, 2
  %v2025 = vrot.slane %v1992, 2
  %v2026 = vrot.slane %v1994, 2
  %v2027 = vrot.slane %v1996, 2
  %v2028 = vrot.slane %v1998, 2
  %v2059 = vmax.f32 %v1879, %v1999
  %v2060 = vmax.f32 %v1880, %v2000
  %v2061 = vmax.f32 %v1881, %v2001
  %v2062 = vmax.f32 %v1882, %v2002
  %v2063 = vmax.f32 %v1883, %v2003
  %v2064 = vmax.f32 %v1884, %v2004
  %v2065 = vmax.f32 %v1885, %v2005
  %v2066 = vmax.f32 %v1886, %v2006
  %v2067 = vmax.f32 %v1887, %v2007
  %v2068 = vmax.f32 %v1888, %v2008
  %v2069 = vmax.f32 %v1889, %v2009
  %v2070 = vmax.f32 %v1890, %v2010
  %v2071 = vmax.f32 %v1891, %v2011
  %v2072 = vmax.f32 %v1892, %v2012
  %v2073 = vmax.f32 %v1893, %v2013
  %v2074 = vmax.f32 %v1894, %v2014
  %v2075 = vmax.f32 %v1895, %v2015
  %v2076 = vmax.f32 %v1896, %v2016
  %v2077 = vmax.f32 %v1897, %v2017
  %v2078 = vmax.f32 %v1898, %v2018
  %v2079 = vmax.f32 %v1899, %v2019
  %v2080 = vmax.f32 %v1900, %v2020
  %v2081 = vmax.f32 %v1901, %v2021
  %v2082 = vmax.f32 %v1902, %v2022
  %v2083 = vmax.f32 %v1903, %v2023
  %v2084 = vmax.f32 %v1904, %v2024
  %v2085 = vmax.f32 %v1905, %v2025
  %v2086 = vmax.f32 %v1906, %v2026
  %v2087 = vmax.f32 %v1907, %v2027
  %v2088 = vmax.f32 %v1908, %v2028
  %2089 = vrot.lane.b32.xlu0 %v1151, 100
  %v2090 = vpop.permute.xlu0 %2089
  %2091 = vrot.lane.b32.xlu0 %v1159, 100
  %v2092 = vpop.permute.xlu0 %2091
  %2093 = vrot.lane.b32.xlu0 %v1158, 100
  %v2094 = vpop.permute.xlu0 %2093
  %2095 = vrot.lane.b32.xlu0 %v1160, 100
  %v2096 = vpop.permute.xlu0 %2095
  %2097 = vrot.lane.b32.xlu0 %v1169, 100
  %v2098 = vpop.permute.xlu0 %2097
  %2099 = vrot.lane.b32.xlu0 %v1177, 100
  %v2100 = vpop.permute.xlu0 %2099
  %2101 = vrot.lane.b32.xlu0 %v1176, 100
  %v2102 = vpop.permute.xlu0 %2101
  %2103 = vrot.lane.b32.xlu0 %v1178, 100
  %v2104 = vpop.permute.xlu0 %2103
  %2105 = vrot.lane.b32.xlu0 %v1187, 100
  %v2106 = vpop.permute.xlu0 %2105
  %2107 = vrot.lane.b32.xlu0 %v1195, 100
  %v2108 = vpop.permute.xlu0 %2107
  %2109 = vrot.lane.b32.xlu0 %v1194, 100
  %v2110 = vpop.permute.xlu0 %2109
  %2111 = vrot.lane.b32.xlu0 %v1196, 100
  %v2112 = vpop.permute.xlu0 %2111
  %2113 = vrot.lane.b32.xlu0 %v1205, 100
  %v2114 = vpop.permute.xlu0 %2113
  %2115 = vrot.lane.b32.xlu0 %v1213, 100
  %v2116 = vpop.permute.xlu0 %2115
  %2117 = vrot.lane.b32.xlu0 %v1212, 100
  %v2118 = vpop.permute.xlu0 %2117
  %2119 = vrot.lane.b32.xlu0 %v1214, 100
  %v2120 = vpop.permute.xlu0 %2119
  %2121 = vrot.lane.b32.xlu0 %v1223, 100
  %v2122 = vpop.permute.xlu0 %2121
  %2123 = vrot.lane.b32.xlu0 %v1231, 100
  %v2124 = vpop.permute.xlu0 %2123
  %2125 = vrot.lane.b32.xlu0 %v1230, 100
  %v2126 = vpop.permute.xlu0 %2125
  %2127 = vrot.lane.b32.xlu0 %v1232, 100
  %v2128 = vpop.permute.xlu0 %2127
  %2129 = vrot.lane.b32.xlu0 %v1241, 100
  %v2130 = vpop.permute.xlu0 %2129
  %2131 = vrot.lane.b32.xlu0 %v1249, 100
  %v2132 = vpop.permute.xlu0 %2131
  %2133 = vrot.lane.b32.xlu0 %v1248, 100
  %v2134 = vpop.permute.xlu0 %2133
  %2135 = vrot.lane.b32.xlu0 %v1250, 100
  %v2136 = vpop.permute.xlu0 %2135
  %2137 = vrot.lane.b32.xlu0 %v1259, 100
  %v2138 = vpop.permute.xlu0 %2137
  %2139 = vrot.lane.b32.xlu0 %v1267, 100
  %v2140 = vpop.permute.xlu0 %2139
  %2141 = vrot.lane.b32.xlu0 %v1266, 100
  %v2142 = vpop.permute.xlu0 %2141
  %2143 = vrot.lane.b32.xlu0 %v1268, 100
  %v2144 = vpop.permute.xlu0 %2143
  %2145 = vrot.lane.b32.xlu0 %v1276, 100
  %v2146 = vpop.permute.xlu0 %2145
  %2147 = vrot.lane.b32.xlu0 %v1277, 100
  %v2148 = vpop.permute.xlu0 %2147
  %v2149 = vrot.slane %v2090, 2
  %v2150 = vrot.slane %v2092, 2
  %v2151 = vrot.slane %v2094, 2
  %v2152 = vrot.slane %v2096, 2
  %v2153 = vrot.slane %v2098, 2
  %v2154 = vrot.slane %v2100, 2
  %v2155 = vrot.slane %v2102, 2
  %v2156 = vrot.slane %v2104, 2
  %v2157 = vrot.slane %v2106, 2
  %v2158 = vrot.slane %v2108, 2
  %v2159 = vrot.slane %v2110, 2
  %v2160 = vrot.slane %v2112, 2
  %v2161 = vrot.slane %v2114, 2
  %v2162 = vrot.slane %v2116, 2
  %v2163 = vrot.slane %v2118, 2
  %v2164 = vrot.slane %v2120, 2
  %v2165 = vrot.slane %v2122, 2
  %v2166 = vrot.slane %v2124, 2
  %v2167 = vrot.slane %v2126, 2
  %v2168 = vrot.slane %v2128, 2
  %v2169 = vrot.slane %v2130, 2
  %v2170 = vrot.slane %v2132, 2
  %v2171 = vrot.slane %v2134, 2
  %v2172 = vrot.slane %v2136, 2
  %v2173 = vrot.slane %v2138, 2
  %v2174 = vrot.slane %v2140, 2
  %v2175 = vrot.slane %v2142, 2
  %v2176 = vrot.slane %v2144, 2
  %v2177 = vrot.slane %v2146, 2
  %v2178 = vrot.slane %v2148, 2
  %2209 = vrot.lane.b32.xlu0 %v1151, 94
  %v2210 = vpop.permute.xlu0 %2209
  %2211 = vrot.lane.b32.xlu0 %v1159, 94
  %v2212 = vpop.permute.xlu0 %2211
  %2213 = vrot.lane.b32.xlu0 %v1158, 94
  %v2214 = vpop.permute.xlu0 %2213
  %2215 = vrot.lane.b32.xlu0 %v1160, 94
  %v2216 = vpop.permute.xlu0 %2215
  %2217 = vrot.lane.b32.xlu0 %v1169, 94
  %v2218 = vpop.permute.xlu0 %2217
  %2219 = vrot.lane.b32.xlu0 %v1177, 94
  %v2220 = vpop.permute.xlu0 %2219
  %2221 = vrot.lane.b32.xlu0 %v1176, 94
  %v2222 = vpop.permute.xlu0 %2221
  %2223 = vrot.lane.b32.xlu0 %v1178, 94
  %v2224 = vpop.permute.xlu0 %2223
  %2225 = vrot.lane.b32.xlu0 %v1187, 94
  %v2226 = vpop.permute.xlu0 %2225
  %2227 = vrot.lane.b32.xlu0 %v1195, 94
  %v2228 = vpop.permute.xlu0 %2227
  %2229 = vrot.lane.b32.xlu0 %v1194, 94
  %v2230 = vpop.permute.xlu0 %2229
  %2231 = vrot.lane.b32.xlu0 %v1196, 94
  %v2232 = vpop.permute.xlu0 %2231
  %2233 = vrot.lane.b32.xlu0 %v1205, 94
  %v2234 = vpop.permute.xlu0 %2233
  %2235 = vrot.lane.b32.xlu0 %v1213, 94
  %v2236 = vpop.permute.xlu0 %2235
  %2237 = vrot.lane.b32.xlu0 %v1212, 94
  %v2238 = vpop.permute.xlu0 %2237
  %2239 = vrot.lane.b32.xlu0 %v1214, 94
  %v2240 = vpop.permute.xlu0 %2239
  %2241 = vrot.lane.b32.xlu0 %v1223, 94
  %v2242 = vpop.permute.xlu0 %2241
  %2243 = vrot.lane.b32.xlu0 %v1231, 94
  %v2244 = vpop.permute.xlu0 %2243
  %2245 = vrot.lane.b32.xlu0 %v1230, 94
  %v2246 = vpop.permute.xlu0 %2245
  %2247 = vrot.lane.b32.xlu0 %v1232, 94
  %v2248 = vpop.permute.xlu0 %2247
  %2249 = vrot.lane.b32.xlu0 %v1241, 94
  %v2250 = vpop.permute.xlu0 %2249
  %2251 = vrot.lane.b32.xlu0 %v1249, 94
  %v2252 = vpop.permute.xlu0 %2251
  %2253 = vrot.lane.b32.xlu0 %v1248, 94
  %v2254 = vpop.permute.xlu0 %2253
  %2255 = vrot.lane.b32.xlu0 %v1250, 94
  %v2256 = vpop.permute.xlu0 %2255
  %2257 = vrot.lane.b32.xlu0 %v1259, 94
  %v2258 = vpop.permute.xlu0 %2257
  %2259 = vrot.lane.b32.xlu0 %v1267, 94
  %v2260 = vpop.permute.xlu0 %2259
  %2261 = vrot.lane.b32.xlu0 %v1266, 94
  %v2262 = vpop.permute.xlu0 %2261
  %2263 = vrot.lane.b32.xlu0 %v1268, 94
  %v2264 = vpop.permute.xlu0 %2263
  %2265 = vrot.lane.b32.xlu0 %v1276, 94
  %v2266 = vpop.permute.xlu0 %2265
  %2267 = vrot.lane.b32.xlu0 %v1277, 94
  %v2268 = vpop.permute.xlu0 %2267
  %v2269 = vrot.slane %v2210, 2
  %v2270 = vrot.slane %v2212, 2
  %v2271 = vrot.slane %v2214, 2
  %v2272 = vrot.slane %v2216, 2
  %v2273 = vrot.slane %v2218, 2
  %v2274 = vrot.slane %v2220, 2
  %v2275 = vrot.slane %v2222, 2
  %v2276 = vrot.slane %v2224, 2
  %v2277 = vrot.slane %v2226, 2
  %v2278 = vrot.slane %v2228, 2
  %v2279 = vrot.slane %v2230, 2
  %v2280 = vrot.slane %v2232, 2
  %v2281 = vrot.slane %v2234, 2
  %v2282 = vrot.slane %v2236, 2
  %v2283 = vrot.slane %v2238, 2
  %v2284 = vrot.slane %v2240, 2
  %v2285 = vrot.slane %v2242, 2
  %v2286 = vrot.slane %v2244, 2
  %v2287 = vrot.slane %v2246, 2
  %v2288 = vrot.slane %v2248, 2
  %v2289 = vrot.slane %v2250, 2
  %v2290 = vrot.slane %v2252, 2
  %v2291 = vrot.slane %v2254, 2
  %v2292 = vrot.slane %v2256, 2
  %v2293 = vrot.slane %v2258, 2
  %v2294 = vrot.slane %v2260, 2
  %v2295 = vrot.slane %v2262, 2
  %v2296 = vrot.slane %v2264, 2
  %v2297 = vrot.slane %v2266, 2
  %v2298 = vrot.slane %v2268, 2
  %v2329 = vmax.f32 %v2149, %v2269
  %v2330 = vmax.f32 %v2150, %v2270
  %v2331 = vmax.f32 %v2151, %v2271
  %v2332 = vmax.f32 %v2152, %v2272
  %v2333 = vmax.f32 %v2153, %v2273
  %v2334 = vmax.f32 %v2154, %v2274
  %v2335 = vmax.f32 %v2155, %v2275
  %v2336 = vmax.f32 %v2156, %v2276
  %v2337 = vmax.f32 %v2157, %v2277
  %v2338 = vmax.f32 %v2158, %v2278
  %v2339 = vmax.f32 %v2159, %v2279
  %v2340 = vmax.f32 %v2160, %v2280
  %v2341 = vmax.f32 %v2161, %v2281
  %v2342 = vmax.f32 %v2162, %v2282
  %v2343 = vmax.f32 %v2163, %v2283
  %v2344 = vmax.f32 %v2164, %v2284
  %v2345 = vmax.f32 %v2165, %v2285
  %v2346 = vmax.f32 %v2166, %v2286
  %v2347 = vmax.f32 %v2167, %v2287
  %v2348 = vmax.f32 %v2168, %v2288
  %v2349 = vmax.f32 %v2169, %v2289
  %v2350 = vmax.f32 %v2170, %v2290
  %v2351 = vmax.f32 %v2171, %v2291
  %v2352 = vmax.f32 %v2172, %v2292
  %v2353 = vmax.f32 %v2173, %v2293
  %v2354 = vmax.f32 %v2174, %v2294
  %v2355 = vmax.f32 %v2175, %v2295
  %v2356 = vmax.f32 %v2176, %v2296
  %v2357 = vmax.f32 %v2177, %v2297
  %v2358 = vmax.f32 %v2178, %v2298
  %2359 = vrot.lane.b32.xlu0 %v1151, 88
  %v2360 = vpop.permute.xlu0 %2359
  %2361 = vrot.lane.b32.xlu0 %v1159, 88
  %v2362 = vpop.permute.xlu0 %2361
  %2363 = vrot.lane.b32.xlu0 %v1158, 88
  %v2364 = vpop.permute.xlu0 %2363
  %2365 = vrot.lane.b32.xlu0 %v1160, 88
  %v2366 = vpop.permute.xlu0 %2365
  %2367 = vrot.lane.b32.xlu0 %v1169, 88
  %v2368 = vpop.permute.xlu0 %2367
  %2369 = vrot.lane.b32.xlu0 %v1177, 88
  %v2370 = vpop.permute.xlu0 %2369
  %2371 = vrot.lane.b32.xlu0 %v1176, 88
  %v2372 = vpop.permute.xlu0 %2371
  %2373 = vrot.lane.b32.xlu0 %v1178, 88
  %v2374 = vpop.permute.xlu0 %2373
  %2375 = vrot.lane.b32.xlu0 %v1187, 88
  %v2376 = vpop.permute.xlu0 %2375
  %2377 = vrot.lane.b32.xlu0 %v1195, 88
  %v2378 = vpop.permute.xlu0 %2377
  %2379 = vrot.lane.b32.xlu0 %v1194, 88
  %v2380 = vpop.permute.xlu0 %2379
  %2381 = vrot.lane.b32.xlu0 %v1196, 88
  %v2382 = vpop.permute.xlu0 %2381
  %2383 = vrot.lane.b32.xlu0 %v1205, 88
  %v2384 = vpop.permute.xlu0 %2383
  %2385 = vrot.lane.b32.xlu0 %v1213, 88
  %v2386 = vpop.permute.xlu0 %2385
  %2387 = vrot.lane.b32.xlu0 %v1212, 88
  %v2388 = vpop.permute.xlu0 %2387
  %2389 = vrot.lane.b32.xlu0 %v1214, 88
  %v2390 = vpop.permute.xlu0 %2389
  %2391 = vrot.lane.b32.xlu0 %v1223, 88
  %v2392 = vpop.permute.xlu0 %2391
  %2393 = vrot.lane.b32.xlu0 %v1231, 88
  %v2394 = vpop.permute.xlu0 %2393
  %2395 = vrot.lane.b32.xlu0 %v1230, 88
  %v2396 = vpop.permute.xlu0 %2395
  %2397 = vrot.lane.b32.xlu0 %v1232, 88
  %v2398 = vpop.permute.xlu0 %2397
  %2399 = vrot.lane.b32.xlu0 %v1241, 88
  %v2400 = vpop.permute.xlu0 %2399
  %2401 = vrot.lane.b32.xlu0 %v1249, 88
  %v2402 = vpop.permute.xlu0 %2401
  %2403 = vrot.lane.b32.xlu0 %v1248, 88
  %v2404 = vpop.permute.xlu0 %2403
  %2405 = vrot.lane.b32.xlu0 %v1250, 88
  %v2406 = vpop.permute.xlu0 %2405
  %2407 = vrot.lane.b32.xlu0 %v1259, 88
  %v2408 = vpop.permute.xlu0 %2407
  %2409 = vrot.lane.b32.xlu0 %v1267, 88
  %v2410 = vpop.permute.xlu0 %2409
  %2411 = vrot.lane.b32.xlu0 %v1266, 88
  %v2412 = vpop.permute.xlu0 %2411
  %2413 = vrot.lane.b32.xlu0 %v1268, 88
  %v2414 = vpop.permute.xlu0 %2413
  %2415 = vrot.lane.b32.xlu0 %v1276, 88
  %v2416 = vpop.permute.xlu0 %2415
  %2417 = vrot.lane.b32.xlu0 %v1277, 88
  %v2418 = vpop.permute.xlu0 %2417
  %v2419 = vrot.slane %v2360, 2
  %v2420 = vrot.slane %v2362, 2
  %v2421 = vrot.slane %v2364, 2
  %v2422 = vrot.slane %v2366, 2
  %v2423 = vrot.slane %v2368, 2
  %v2424 = vrot.slane %v2370, 2
  %v2425 = vrot.slane %v2372, 2
  %v2426 = vrot.slane %v2374, 2
  %v2427 = vrot.slane %v2376, 2
  %v2428 = vrot.slane %v2378, 2
  %v2429 = vrot.slane %v2380, 2
  %v2430 = vrot.slane %v2382, 2
  %v2431 = vrot.slane %v2384, 2
  %v2432 = vrot.slane %v2386, 2
  %v2433 = vrot.slane %v2388, 2
  %v2434 = vrot.slane %v2390, 2
  %v2435 = vrot.slane %v2392, 2
  %v2436 = vrot.slane %v2394, 2
  %v2437 = vrot.slane %v2396, 2
  %v2438 = vrot.slane %v2398, 2
  %v2439 = vrot.slane %v2400, 2
  %v2440 = vrot.slane %v2402, 2
  %v2441 = vrot.slane %v2404, 2
  %v2442 = vrot.slane %v2406, 2
  %v2443 = vrot.slane %v2408, 2
  %v2444 = vrot.slane %v2410, 2
  %v2445 = vrot.slane %v2412, 2
  %v2446 = vrot.slane %v2414, 2
  %v2447 = vrot.slane %v2416, 2
  %v2448 = vrot.slane %v2418, 2
  %2479 = vrot.lane.b32.xlu0 %v1151, 82
  %v2480 = vpop.permute.xlu0 %2479
  %2481 = vrot.lane.b32.xlu0 %v1159, 82
  %v2482 = vpop.permute.xlu0 %2481
  %2483 = vrot.lane.b32.xlu0 %v1158, 82
  %v2484 = vpop.permute.xlu0 %2483
  %2485 = vrot.lane.b32.xlu0 %v1160, 82
  %v2486 = vpop.permute.xlu0 %2485
  %2487 = vrot.lane.b32.xlu0 %v1169, 82
  %v2488 = vpop.permute.xlu0 %2487
  %2489 = vrot.lane.b32.xlu0 %v1177, 82
  %v2490 = vpop.permute.xlu0 %2489
  %2491 = vrot.lane.b32.xlu0 %v1176, 82
  %v2492 = vpop.permute.xlu0 %2491
  %2493 = vrot.lane.b32.xlu0 %v1178, 82
  %v2494 = vpop.permute.xlu0 %2493
  %2495 = vrot.lane.b32.xlu0 %v1187, 82
  %v2496 = vpop.permute.xlu0 %2495
  %2497 = vrot.lane.b32.xlu0 %v1195, 82
  %v2498 = vpop.permute.xlu0 %2497
  %2499 = vrot.lane.b32.xlu0 %v1194, 82
  %v2500 = vpop.permute.xlu0 %2499
  %2501 = vrot.lane.b32.xlu0 %v1196, 82
  %v2502 = vpop.permute.xlu0 %2501
  %2503 = vrot.lane.b32.xlu0 %v1205, 82
  %v2504 = vpop.permute.xlu0 %2503
  %2505 = vrot.lane.b32.xlu0 %v1213, 82
  %v2506 = vpop.permute.xlu0 %2505
  %2507 = vrot.lane.b32.xlu0 %v1212, 82
  %v2508 = vpop.permute.xlu0 %2507
  %2509 = vrot.lane.b32.xlu0 %v1214, 82
  %v2510 = vpop.permute.xlu0 %2509
  %2511 = vrot.lane.b32.xlu0 %v1223, 82
  %v2512 = vpop.permute.xlu0 %2511
  %2513 = vrot.lane.b32.xlu0 %v1231, 82
  %v2514 = vpop.permute.xlu0 %2513
  %2515 = vrot.lane.b32.xlu0 %v1230, 82
  %v2516 = vpop.permute.xlu0 %2515
  %2517 = vrot.lane.b32.xlu0 %v1232, 82
  %v2518 = vpop.permute.xlu0 %2517
  %2519 = vrot.lane.b32.xlu0 %v1241, 82
  %v2520 = vpop.permute.xlu0 %2519
  %2521 = vrot.lane.b32.xlu0 %v1249, 82
  %v2522 = vpop.permute.xlu0 %2521
  %2523 = vrot.lane.b32.xlu0 %v1248, 82
  %v2524 = vpop.permute.xlu0 %2523
  %2525 = vrot.lane.b32.xlu0 %v1250, 82
  %v2526 = vpop.permute.xlu0 %2525
  %2527 = vrot.lane.b32.xlu0 %v1259, 82
  %v2528 = vpop.permute.xlu0 %2527
  %2529 = vrot.lane.b32.xlu0 %v1267, 82
  %v2530 = vpop.permute.xlu0 %2529
  %2531 = vrot.lane.b32.xlu0 %v1266, 82
  %v2532 = vpop.permute.xlu0 %2531
  %2533 = vrot.lane.b32.xlu0 %v1268, 82
  %v2534 = vpop.permute.xlu0 %2533
  %2535 = vrot.lane.b32.xlu0 %v1276, 82
  %v2536 = vpop.permute.xlu0 %2535
  %2537 = vrot.lane.b32.xlu0 %v1277, 82
  %v2538 = vpop.permute.xlu0 %2537
  %v2539 = vrot.slane %v2480, 2
  %v2540 = vrot.slane %v2482, 2
  %v2541 = vrot.slane %v2484, 2
  %v2542 = vrot.slane %v2486, 2
  %v2543 = vrot.slane %v2488, 2
  %v2544 = vrot.slane %v2490, 2
  %v2545 = vrot.slane %v2492, 2
  %v2546 = vrot.slane %v2494, 2
  %v2547 = vrot.slane %v2496, 2
  %v2548 = vrot.slane %v2498, 2
  %v2549 = vrot.slane %v2500, 2
  %v2550 = vrot.slane %v2502, 2
  %v2551 = vrot.slane %v2504, 2
  %v2552 = vrot.slane %v2506, 2
  %v2553 = vrot.slane %v2508, 2
  %v2554 = vrot.slane %v2510, 2
  %v2555 = vrot.slane %v2512, 2
  %v2556 = vrot.slane %v2514, 2
  %v2557 = vrot.slane %v2516, 2
  %v2558 = vrot.slane %v2518, 2
  %v2559 = vrot.slane %v2520, 2
  %v2560 = vrot.slane %v2522, 2
  %v2561 = vrot.slane %v2524, 2
  %v2562 = vrot.slane %v2526, 2
  %v2563 = vrot.slane %v2528, 2
  %v2564 = vrot.slane %v2530, 2
  %v2565 = vrot.slane %v2532, 2
  %v2566 = vrot.slane %v2534, 2
  %v2567 = vrot.slane %v2536, 2
  %v2568 = vrot.slane %v2538, 2
  %v2599 = vmax.f32 %v2419, %v2539
  %v2600 = vmax.f32 %v2420, %v2540
  %v2601 = vmax.f32 %v2421, %v2541
  %v2602 = vmax.f32 %v2422, %v2542
  %v2603 = vmax.f32 %v2423, %v2543
  %v2604 = vmax.f32 %v2424, %v2544
  %v2605 = vmax.f32 %v2425, %v2545
  %v2606 = vmax.f32 %v2426, %v2546
  %v2607 = vmax.f32 %v2427, %v2547
  %v2608 = vmax.f32 %v2428, %v2548
  %v2609 = vmax.f32 %v2429, %v2549
  %v2610 = vmax.f32 %v2430, %v2550
  %v2611 = vmax.f32 %v2431, %v2551
  %v2612 = vmax.f32 %v2432, %v2552
  %v2613 = vmax.f32 %v2433, %v2553
  %v2614 = vmax.f32 %v2434, %v2554
  %v2615 = vmax.f32 %v2435, %v2555
  %v2616 = vmax.f32 %v2436, %v2556
  %v2617 = vmax.f32 %v2437, %v2557
  %v2618 = vmax.f32 %v2438, %v2558
  %v2619 = vmax.f32 %v2439, %v2559
  %v2620 = vmax.f32 %v2440, %v2560
  %v2621 = vmax.f32 %v2441, %v2561
  %v2622 = vmax.f32 %v2442, %v2562
  %v2623 = vmax.f32 %v2443, %v2563
  %v2624 = vmax.f32 %v2444, %v2564
  %v2625 = vmax.f32 %v2445, %v2565
  %v2626 = vmax.f32 %v2446, %v2566
  %v2627 = vmax.f32 %v2447, %v2567
  %v2628 = vmax.f32 %v2448, %v2568
  %v2659 = vcombine.low %v1398, %v1399
  %v2660 = vcombine.low %v1400, %v1401
  %v2662 = vunpack.c.l.s4 1983009808
  %v2663 = vunpack.c.0.s8 %v2662
  %v2664 = vlaneseq
  %v2665 = vshrl.u32 %v2664, 7
  %v2666 = vsub.s32 %v2663, %v2665
  %v2667 = vrot.slane %v2659, %v2666
  %v2669 = vunpack.c.l.s4 1983009808
  %v2670 = vunpack.c.0.s8 %v2669
  %v2671 = vlaneseq
  %v2672 = vshrl.u32 %v2671, 7
  %v2673 = vsub.s32 %v2670, %v2672
  %v2674 = vrot.slane %v2660, %v2673
  %v2675 = vcombine.low %v2667, %v2674
  %v2676 = vcombine.low %v1402, %v1403
  %v2677 = vcombine.low %v1404, %v1405
  %v2679 = vunpack.c.l.s4 1983009808
  %v2680 = vunpack.c.0.s8 %v2679
  %v2681 = vlaneseq
  %v2682 = vshrl.u32 %v2681, 7
  %v2683 = vsub.s32 %v2680, %v2682
  %v2684 = vrot.slane %v2676, %v2683
  %v2686 = vunpack.c.l.s4 1983009808
  %v2687 = vunpack.c.0.s8 %v2686
  %v2688 = vlaneseq
  %v2689 = vshrl.u32 %v2688, 7
  %v2690 = vsub.s32 %v2687, %v2689
  %v2691 = vrot.slane %v2677, %v2690
  %v2692 = vcombine.low %v2684, %v2691
  %v2693 = vcombine.low %v1406, %v1407
  %v2694 = vcombine.low %v1408, %v1409
  %v2696 = vunpack.c.l.s4 1983009808
  %v2697 = vunpack.c.0.s8 %v2696
  %v2698 = vlaneseq
  %v2699 = vshrl.u32 %v2698, 7
  %v2700 = vsub.s32 %v2697, %v2699
  %v2701 = vrot.slane %v2693, %v2700
  %v2703 = vunpack.c.l.s4 1983009808
  %v2704 = vunpack.c.0.s8 %v2703
  %v2705 = vlaneseq
  %v2706 = vshrl.u32 %v2705, 7
  %v2707 = vsub.s32 %v2704, %v2706
  %v2708 = vrot.slane %v2694, %v2707
  %v2709 = vcombine.low %v2701, %v2708
  %v2710 = vcombine.low %v1410, %v1411
  %v2712 = vunpack.c.l.s4 1983009808
  %v2713 = vunpack.c.0.s8 %v2712
  %v2714 = vlaneseq
  %v2715 = vshrl.u32 %v2714, 7
  %v2716 = vsub.s32 %v2713, %v2715
  %v2717 = vrot.slane %v2710, %v2716
  %v2719 = vunpack.c.l.s4 1983009808
  %v2720 = vunpack.c.0.s8 %v2719
  %v2721 = vlaneseq
  %v2722 = vshrl.u32 %v2721, 7
  %v2723 = vsub.s32 %v2720, %v2722
  %v2724 = vrot.slane %v1412, %v2723
  %v2725 = vcombine.low %v2717, %v2724
  %v2726 = vcombine.low %v1413, %v1414
  %v2727 = vcombine.low %v1415, %v1416
  %v2729 = vunpack.c.l.s4 1983009808
  %v2730 = vunpack.c.0.s8 %v2729
  %v2731 = vlaneseq
  %v2732 = vshrl.u32 %v2731, 7
  %v2733 = vsub.s32 %v2730, %v2732
  %v2734 = vrot.slane %v2726, %v2733
  %v2736 = vunpack.c.l.s4 1983009808
  %v2737 = vunpack.c.0.s8 %v2736
  %v2738 = vlaneseq
  %v2739 = vshrl.u32 %v2738, 7
  %v2740 = vsub.s32 %v2737, %v2739
  %v2741 = vrot.slane %v2727, %v2740
  %v2742 = vcombine.low %v2734, %v2741
  %v2743 = vcombine.low %v1417, %v1418
  %v2744 = vcombine.low %v1419, %v1420
  %v2746 = vunpack.c.l.s4 1983009808
  %v2747 = vunpack.c.0.s8 %v2746
  %v2748 = vlaneseq
  %v2749 = vshrl.u32 %v2748, 7
  %v2750 = vsub.s32 %v2747, %v2749
  %v2751 = vrot.slane %v2743, %v2750
  %v2753 = vunpack.c.l.s4 1983009808
  %v2754 = vunpack.c.0.s8 %v2753
  %v2755 = vlaneseq
  %v2756 = vshrl.u32 %v2755, 7
  %v2757 = vsub.s32 %v2754, %v2756
  %v2758 = vrot.slane %v2744, %v2757
  %v2759 = vcombine.low %v2751, %v2758
  %v2760 = vcombine.low %v1421, %v1422
  %v2761 = vcombine.low %v1423, %v1424
  %v2763 = vunpack.c.l.s4 1983009808
  %v2764 = vunpack.c.0.s8 %v2763
  %v2765 = vlaneseq
  %v2766 = vshrl.u32 %v2765, 7
  %v2767 = vsub.s32 %v2764, %v2766
  %v2768 = vrot.slane %v2760, %v2767
  %v2770 = vunpack.c.l.s4 1983009808
  %v2771 = vunpack.c.0.s8 %v2770
  %v2772 = vlaneseq
  %v2773 = vshrl.u32 %v2772, 7
  %v2774 = vsub.s32 %v2771, %v2773
  %v2775 = vrot.slane %v2761, %v2774
  %v2776 = vcombine.low %v2768, %v2775
  %v2777 = vcombine.low %v1425, %v1426
  %v2779 = vunpack.c.l.s4 1983009808
  %v2780 = vunpack.c.0.s8 %v2779
  %v2781 = vlaneseq
  %v2782 = vshrl.u32 %v2781, 7
  %v2783 = vsub.s32 %v2780, %v2782
  %v2784 = vrot.slane %v2777, %v2783
  %v2786 = vunpack.c.l.s4 1983009808
  %v2787 = vunpack.c.0.s8 %v2786
  %v2788 = vlaneseq
  %v2789 = vshrl.u32 %v2788, 7
  %v2790 = vsub.s32 %v2787, %v2789
  %v2791 = vrot.slane %v1427, %v2790
  %v2792 = vcombine.low %v2784, %v2791
  %2801 = vrot.lane.b32.xlu0 %v2675, 122
  %v2802 = vpop.permute.xlu0 %2801
  %2803 = vrot.lane.b32.xlu0 %v2692, 122
  %v2804 = vpop.permute.xlu0 %2803
  %2805 = vrot.lane.b32.xlu0 %v2709, 122
  %v2806 = vpop.permute.xlu0 %2805
  %2807 = vrot.lane.b32.xlu0 %v2725, 122
  %v2808 = vpop.permute.xlu0 %2807
  %2809 = vrot.lane.b32.xlu0 %v2742, 122
  %v2810 = vpop.permute.xlu0 %2809
  %2811 = vrot.lane.b32.xlu0 %v2759, 122
  %v2812 = vpop.permute.xlu0 %2811
  %2813 = vrot.lane.b32.xlu0 %v2776, 122
  %v2814 = vpop.permute.xlu0 %2813
  %2815 = vrot.lane.b32.xlu0 %v2792, 122
  %v2816 = vpop.permute.xlu0 %2815
  %2825 = vrot.lane.b32.xlu0 %v2675, 116
  %v2826 = vpop.permute.xlu0 %2825
  %2827 = vrot.lane.b32.xlu0 %v2692, 116
  %v2828 = vpop.permute.xlu0 %2827
  %2829 = vrot.lane.b32.xlu0 %v2709, 116
  %v2830 = vpop.permute.xlu0 %2829
  %2831 = vrot.lane.b32.xlu0 %v2725, 116
  %v2832 = vpop.permute.xlu0 %2831
  %2833 = vrot.lane.b32.xlu0 %v2742, 116
  %v2834 = vpop.permute.xlu0 %2833
  %2835 = vrot.lane.b32.xlu0 %v2759, 116
  %v2836 = vpop.permute.xlu0 %2835
  %2837 = vrot.lane.b32.xlu0 %v2776, 116
  %v2838 = vpop.permute.xlu0 %2837
  %2839 = vrot.lane.b32.xlu0 %v2792, 116
  %v2840 = vpop.permute.xlu0 %2839
  %2849 = vrot.lane.b32.xlu0 %v2675, 110
  %v2850 = vpop.permute.xlu0 %2849
  %2851 = vrot.lane.b32.xlu0 %v2692, 110
  %v2852 = vpop.permute.xlu0 %2851
  %2853 = vrot.lane.b32.xlu0 %v2709, 110
  %v2854 = vpop.permute.xlu0 %2853
  %2855 = vrot.lane.b32.xlu0 %v2725, 110
  %v2856 = vpop.permute.xlu0 %2855
  %2857 = vrot.lane.b32.xlu0 %v2742, 110
  %v2858 = vpop.permute.xlu0 %2857
  %2859 = vrot.lane.b32.xlu0 %v2759, 110
  %v2860 = vpop.permute.xlu0 %2859
  %2861 = vrot.lane.b32.xlu0 %v2776, 110
  %v2862 = vpop.permute.xlu0 %2861
  %2863 = vrot.lane.b32.xlu0 %v2792, 110
  %v2864 = vpop.permute.xlu0 %2863
  %2873 = vrot.lane.b32.xlu0 %v2675, 104
  %v2874 = vpop.permute.xlu0 %2873
  %2875 = vrot.lane.b32.xlu0 %v2692, 104
  %v2876 = vpop.permute.xlu0 %2875
  %2877 = vrot.lane.b32.xlu0 %v2709, 104
  %v2878 = vpop.permute.xlu0 %2877
  %2879 = vrot.lane.b32.xlu0 %v2725, 104
  %v2880 = vpop.permute.xlu0 %2879
  %2881 = vrot.lane.b32.xlu0 %v2742, 104
  %v2882 = vpop.permute.xlu0 %2881
  %2883 = vrot.lane.b32.xlu0 %v2759, 104
  %v2884 = vpop.permute.xlu0 %2883
  %2885 = vrot.lane.b32.xlu0 %v2776, 104
  %v2886 = vpop.permute.xlu0 %2885
  %2887 = vrot.lane.b32.xlu0 %v2792, 104
  %v2888 = vpop.permute.xlu0 %2887
  %2897 = vrot.lane.b32.xlu0 %v2675, 98
  %v2898 = vpop.permute.xlu0 %2897
  %2899 = vrot.lane.b32.xlu0 %v2692, 98
  %v2900 = vpop.permute.xlu0 %2899
  %2901 = vrot.lane.b32.xlu0 %v2709, 98
  %v2902 = vpop.permute.xlu0 %2901
  %2903 = vrot.lane.b32.xlu0 %v2725, 98
  %v2904 = vpop.permute.xlu0 %2903
  %2905 = vrot.lane.b32.xlu0 %v2742, 98
  %v2906 = vpop.permute.xlu0 %2905
  %2907 = vrot.lane.b32.xlu0 %v2759, 98
  %v2908 = vpop.permute.xlu0 %2907
  %2909 = vrot.lane.b32.xlu0 %v2776, 98
  %v2910 = vpop.permute.xlu0 %2909
  %2911 = vrot.lane.b32.xlu0 %v2792, 98
  %v2912 = vpop.permute.xlu0 %2911
  %2921 = vrot.lane.b32.xlu0 %v2675, 92
  %v2922 = vpop.permute.xlu0 %2921
  %2923 = vrot.lane.b32.xlu0 %v2692, 92
  %v2924 = vpop.permute.xlu0 %2923
  %2925 = vrot.lane.b32.xlu0 %v2709, 92
  %v2926 = vpop.permute.xlu0 %2925
  %2927 = vrot.lane.b32.xlu0 %v2725, 92
  %v2928 = vpop.permute.xlu0 %2927
  %2929 = vrot.lane.b32.xlu0 %v2742, 92
  %v2930 = vpop.permute.xlu0 %2929
  %2931 = vrot.lane.b32.xlu0 %v2759, 92
  %v2932 = vpop.permute.xlu0 %2931
  %2933 = vrot.lane.b32.xlu0 %v2776, 92
  %v2934 = vpop.permute.xlu0 %2933
  %2935 = vrot.lane.b32.xlu0 %v2792, 92
  %v2936 = vpop.permute.xlu0 %2935
  %2945 = vrot.lane.b32.xlu0 %v2675, 86
  %v2946 = vpop.permute.xlu0 %2945
  %2947 = vrot.lane.b32.xlu0 %v2692, 86
  %v2948 = vpop.permute.xlu0 %2947
  %2949 = vrot.lane.b32.xlu0 %v2709, 86
  %v2950 = vpop.permute.xlu0 %2949
  %2951 = vrot.lane.b32.xlu0 %v2725, 86
  %v2952 = vpop.permute.xlu0 %2951
  %2953 = vrot.lane.b32.xlu0 %v2742, 86
  %v2954 = vpop.permute.xlu0 %2953
  %2955 = vrot.lane.b32.xlu0 %v2759, 86
  %v2956 = vpop.permute.xlu0 %2955
  %2957 = vrot.lane.b32.xlu0 %v2776, 86
  %v2958 = vpop.permute.xlu0 %2957
  %2959 = vrot.lane.b32.xlu0 %v2792, 86
  %v2960 = vpop.permute.xlu0 %2959
  %2969 = vrot.lane.b32.xlu0 %v2675, 80
  %v2970 = vpop.permute.xlu0 %2969
  %2971 = vrot.lane.b32.xlu0 %v2692, 80
  %v2972 = vpop.permute.xlu0 %2971
  %2973 = vrot.lane.b32.xlu0 %v2709, 80
  %v2974 = vpop.permute.xlu0 %2973
  %2975 = vrot.lane.b32.xlu0 %v2725, 80
  %v2976 = vpop.permute.xlu0 %2975
  %2977 = vrot.lane.b32.xlu0 %v2742, 80
  %v2978 = vpop.permute.xlu0 %2977
  %2979 = vrot.lane.b32.xlu0 %v2759, 80
  %v2980 = vpop.permute.xlu0 %2979
  %2981 = vrot.lane.b32.xlu0 %v2776, 80
  %v2982 = vpop.permute.xlu0 %2981
  %2983 = vrot.lane.b32.xlu0 %v2792, 80
  %v2984 = vpop.permute.xlu0 %2983
  %2993 = vrot.lane.b32.xlu0 %v2675, 74
  %v2994 = vpop.permute.xlu0 %2993
  %2995 = vrot.lane.b32.xlu0 %v2692, 74
  %v2996 = vpop.permute.xlu0 %2995
  %2997 = vrot.lane.b32.xlu0 %v2709, 74
  %v2998 = vpop.permute.xlu0 %2997
  %2999 = vrot.lane.b32.xlu0 %v2725, 74
  %v3000 = vpop.permute.xlu0 %2999
  %3001 = vrot.lane.b32.xlu0 %v2742, 74
  %v3002 = vpop.permute.xlu0 %3001
  %3003 = vrot.lane.b32.xlu0 %v2759, 74
  %v3004 = vpop.permute.xlu0 %3003
  %3005 = vrot.lane.b32.xlu0 %v2776, 74
  %v3006 = vpop.permute.xlu0 %3005
  %3007 = vrot.lane.b32.xlu0 %v2792, 74
  %v3008 = vpop.permute.xlu0 %3007
  %v3047 = vcombine.low %v1519, %v1520
  %v3048 = vcombine.low %v1521, %v1522
  %v3050 = vunpack.c.l.s4 1983009808
  %v3051 = vunpack.c.0.s8 %v3050
  %v3052 = vlaneseq
  %v3053 = vshrl.u32 %v3052, 7
  %v3054 = vsub.s32 %v3051, %v3053
  %v3055 = vrot.slane %v3047, %v3054
  %v3057 = vunpack.c.l.s4 1983009808
  %v3058 = vunpack.c.0.s8 %v3057
  %v3059 = vlaneseq
  %v3060 = vshrl.u32 %v3059, 7
  %v3061 = vsub.s32 %v3058, %v3060
  %v3062 = vrot.slane %v3048, %v3061
  %v3063 = vcombine.low %v3055, %v3062
  %v3064 = vcombine.low %v1523, %v1524
  %v3065 = vcombine.low %v1525, %v1526
  %v3067 = vunpack.c.l.s4 1983009808
  %v3068 = vunpack.c.0.s8 %v3067
  %v3069 = vlaneseq
  %v3070 = vshrl.u32 %v3069, 7
  %v3071 = vsub.s32 %v3068, %v3070
  %v3072 = vrot.slane %v3064, %v3071
  %v3074 = vunpack.c.l.s4 1983009808
  %v3075 = vunpack.c.0.s8 %v3074
  %v3076 = vlaneseq
  %v3077 = vshrl.u32 %v3076, 7
  %v3078 = vsub.s32 %v3075, %v3077
  %v3079 = vrot.slane %v3065, %v3078
  %v3080 = vcombine.low %v3072, %v3079
  %v3081 = vcombine.low %v1527, %v1528
  %v3082 = vcombine.low %v1529, %v1530
  %v3084 = vunpack.c.l.s4 1983009808
  %v3085 = vunpack.c.0.s8 %v3084
  %v3086 = vlaneseq
  %v3087 = vshrl.u32 %v3086, 7
  %v3088 = vsub.s32 %v3085, %v3087
  %v3089 = vrot.slane %v3081, %v3088
  %v3091 = vunpack.c.l.s4 1983009808
  %v3092 = vunpack.c.0.s8 %v3091
  %v3093 = vlaneseq
  %v3094 = vshrl.u32 %v3093, 7
  %v3095 = vsub.s32 %v3092, %v3094
  %v3096 = vrot.slane %v3082, %v3095
  %v3097 = vcombine.low %v3089, %v3096
  %v3098 = vcombine.low %v1531, %v1532
  %v3100 = vunpack.c.l.s4 1983009808
  %v3101 = vunpack.c.0.s8 %v3100
  %v3102 = vlaneseq
  %v3103 = vshrl.u32 %v3102, 7
  %v3104 = vsub.s32 %v3101, %v3103
  %v3105 = vrot.slane %v3098, %v3104
  %v3107 = vunpack.c.l.s4 1983009808
  %v3108 = vunpack.c.0.s8 %v3107
  %v3109 = vlaneseq
  %v3110 = vshrl.u32 %v3109, 7
  %v3111 = vsub.s32 %v3108, %v3110
  %v3112 = vrot.slane %v1533, %v3111
  %v3113 = vcombine.low %v3105, %v3112
  %v3114 = vcombine.low %v1534, %v1535
  %v3115 = vcombine.low %v1536, %v1537
  %v3117 = vunpack.c.l.s4 1983009808
  %v3118 = vunpack.c.0.s8 %v3117
  %v3119 = vlaneseq
  %v3120 = vshrl.u32 %v3119, 7
  %v3121 = vsub.s32 %v3118, %v3120
  %v3122 = vrot.slane %v3114, %v3121
  %v3124 = vunpack.c.l.s4 1983009808
  %v3125 = vunpack.c.0.s8 %v3124
  %v3126 = vlaneseq
  %v3127 = vshrl.u32 %v3126, 7
  %v3128 = vsub.s32 %v3125, %v3127
  %v3129 = vrot.slane %v3115, %v3128
  %v3130 = vcombine.low %v3122, %v3129
  %v3131 = vcombine.low %v1538, %v1539
  %v3132 = vcombine.low %v1540, %v1541
  %v3134 = vunpack.c.l.s4 1983009808
  %v3135 = vunpack.c.0.s8 %v3134
  %v3136 = vlaneseq
  %v3137 = vshrl.u32 %v3136, 7
  %v3138 = vsub.s32 %v3135, %v3137
  %v3139 = vrot.slane %v3131, %v3138
  %v3141 = vunpack.c.l.s4 1983009808
  %v3142 = vunpack.c.0.s8 %v3141
  %v3143 = vlaneseq
  %v3144 = vshrl.u32 %v3143, 7
  %v3145 = vsub.s32 %v3142, %v3144
  %v3146 = vrot.slane %v3132, %v3145
  %v3147 = vcombine.low %v3139, %v3146
  %v3148 = vcombine.low %v1542, %v1543
  %v3149 = vcombine.low %v1544, %v1545
  %v3151 = vunpack.c.l.s4 1983009808
  %v3152 = vunpack.c.0.s8 %v3151
  %v3153 = vlaneseq
  %v3154 = vshrl.u32 %v3153, 7
  %v3155 = vsub.s32 %v3152, %v3154
  %v3156 = vrot.slane %v3148, %v3155
  %v3158 = vunpack.c.l.s4 1983009808
  %v3159 = vunpack.c.0.s8 %v3158
  %v3160 = vlaneseq
  %v3161 = vshrl.u32 %v3160, 7
  %v3162 = vsub.s32 %v3159, %v3161
  %v3163 = vrot.slane %v3149, %v3162
  %v3164 = vcombine.low %v3156, %v3163
  %v3165 = vcombine.low %v1546, %v1547
  %v3167 = vunpack.c.l.s4 1983009808
  %v3168 = vunpack.c.0.s8 %v3167
  %v3169 = vlaneseq
  %v3170 = vshrl.u32 %v3169, 7
  %v3171 = vsub.s32 %v3168, %v3170
  %v3172 = vrot.slane %v3165, %v3171
  %v3174 = vunpack.c.l.s4 1983009808
  %v3175 = vunpack.c.0.s8 %v3174
  %v3176 = vlaneseq
  %v3177 = vshrl.u32 %v3176, 7
  %v3178 = vsub.s32 %v3175, %v3177
  %v3179 = vrot.slane %v1548, %v3178
  %v3180 = vcombine.low %v3172, %v3179
  %3181 = vrot.lane.b32.xlu0 %v3063, 68
  %v3182 = vpop.permute.xlu0 %3181
  %3183 = vrot.lane.b32.xlu0 %v3080, 68
  %v3184 = vpop.permute.xlu0 %3183
  %3185 = vrot.lane.b32.xlu0 %v3097, 68
  %v3186 = vpop.permute.xlu0 %3185
  %3187 = vrot.lane.b32.xlu0 %v3113, 68
  %v3188 = vpop.permute.xlu0 %3187
  %3189 = vrot.lane.b32.xlu0 %v3130, 68
  %v3190 = vpop.permute.xlu0 %3189
  %3191 = vrot.lane.b32.xlu0 %v3147, 68
  %v3192 = vpop.permute.xlu0 %3191
  %3193 = vrot.lane.b32.xlu0 %v3164, 68
  %v3194 = vpop.permute.xlu0 %3193
  %3195 = vrot.lane.b32.xlu0 %v3180, 68
  %v3196 = vpop.permute.xlu0 %3195
  %v3235 = vcombine.low %v1789, %v1790
  %v3236 = vcombine.low %v1791, %v1792
  %v3238 = vunpack.c.l.s4 1983009808
  %v3239 = vunpack.c.0.s8 %v3238
  %v3240 = vlaneseq
  %v3241 = vshrl.u32 %v3240, 7
  %v3242 = vsub.s32 %v3239, %v3241
  %v3243 = vrot.slane %v3235, %v3242
  %v3245 = vunpack.c.l.s4 1983009808
  %v3246 = vunpack.c.0.s8 %v3245
  %v3247 = vlaneseq
  %v3248 = vshrl.u32 %v3247, 7
  %v3249 = vsub.s32 %v3246, %v3248
  %v3250 = vrot.slane %v3236, %v3249
  %v3251 = vcombine.low %v3243, %v3250
  %v3252 = vcombine.low %v1793, %v1794
  %v3253 = vcombine.low %v1795, %v1796
  %v3255 = vunpack.c.l.s4 1983009808
  %v3256 = vunpack.c.0.s8 %v3255
  %v3257 = vlaneseq
  %v3258 = vshrl.u32 %v3257, 7
  %v3259 = vsub.s32 %v3256, %v3258
  %v3260 = vrot.slane %v3252, %v3259
  %v3262 = vunpack.c.l.s4 1983009808
  %v3263 = vunpack.c.0.s8 %v3262
  %v3264 = vlaneseq
  %v3265 = vshrl.u32 %v3264, 7
  %v3266 = vsub.s32 %v3263, %v3265
  %v3267 = vrot.slane %v3253, %v3266
  %v3268 = vcombine.low %v3260, %v3267
  %v3269 = vcombine.low %v1797, %v1798
  %v3270 = vcombine.low %v1799, %v1800
  %v3272 = vunpack.c.l.s4 1983009808
  %v3273 = vunpack.c.0.s8 %v3272
  %v3274 = vlaneseq
  %v3275 = vshrl.u32 %v3274, 7
  %v3276 = vsub.s32 %v3273, %v3275
  %v3277 = vrot.slane %v3269, %v3276
  %v3279 = vunpack.c.l.s4 1983009808
  %v3280 = vunpack.c.0.s8 %v3279
  %v3281 = vlaneseq
  %v3282 = vshrl.u32 %v3281, 7
  %v3283 = vsub.s32 %v3280, %v3282
  %v3284 = vrot.slane %v3270, %v3283
  %v3285 = vcombine.low %v3277, %v3284
  %v3286 = vcombine.low %v1801, %v1802
  %v3288 = vunpack.c.l.s4 1983009808
  %v3289 = vunpack.c.0.s8 %v3288
  %v3290 = vlaneseq
  %v3291 = vshrl.u32 %v3290, 7
  %v3292 = vsub.s32 %v3289, %v3291
  %v3293 = vrot.slane %v3286, %v3292
  %v3295 = vunpack.c.l.s4 1983009808
  %v3296 = vunpack.c.0.s8 %v3295
  %v3297 = vlaneseq
  %v3298 = vshrl.u32 %v3297, 7
  %v3299 = vsub.s32 %v3296, %v3298
  %v3300 = vrot.slane %v1803, %v3299
  %v3301 = vcombine.low %v3293, %v3300
  %v3302 = vcombine.low %v1804, %v1805
  %v3303 = vcombine.low %v1806, %v1807
  %v3305 = vunpack.c.l.s4 1983009808
  %v3306 = vunpack.c.0.s8 %v3305
  %v3307 = vlaneseq
  %v3308 = vshrl.u32 %v3307, 7
  %v3309 = vsub.s32 %v3306, %v3308
  %v3310 = vrot.slane %v3302, %v3309
  %v3312 = vunpack.c.l.s4 1983009808
  %v3313 = vunpack.c.0.s8 %v3312
  %v3314 = vlaneseq
  %v3315 = vshrl.u32 %v3314, 7
  %v3316 = vsub.s32 %v3313, %v3315
  %v3317 = vrot.slane %v3303, %v3316
  %v3318 = vcombine.low %v3310, %v3317
  %v3319 = vcombine.low %v1808, %v1809
  %v3320 = vcombine.low %v1810, %v1811
  %v3322 = vunpack.c.l.s4 1983009808
  %v3323 = vunpack.c.0.s8 %v3322
  %v3324 = vlaneseq
  %v3325 = vshrl.u32 %v3324, 7
  %v3326 = vsub.s32 %v3323, %v3325
  %v3327 = vrot.slane %v3319, %v3326
  %v3329 = vunpack.c.l.s4 1983009808
  %v3330 = vunpack.c.0.s8 %v3329
  %v3331 = vlaneseq
  %v3332 = vshrl.u32 %v3331, 7
  %v3333 = vsub.s32 %v3330, %v3332
  %v3334 = vrot.slane %v3320, %v3333
  %v3335 = vcombine.low %v3327, %v3334
  %v3336 = vcombine.low %v1812, %v1813
  %v3337 = vcombine.low %v1814, %v1815
  %v3339 = vunpack.c.l.s4 1983009808
  %v3340 = vunpack.c.0.s8 %v3339
  %v3341 = vlaneseq
  %v3342 = vshrl.u32 %v3341, 7
  %v3343 = vsub.s32 %v3340, %v3342
  %v3344 = vrot.slane %v3336, %v3343
  %v3346 = vunpack.c.l.s4 1983009808
  %v3347 = vunpack.c.0.s8 %v3346
  %v3348 = vlaneseq
  %v3349 = vshrl.u32 %v3348, 7
  %v3350 = vsub.s32 %v3347, %v3349
  %v3351 = vrot.slane %v3337, %v3350
  %v3352 = vcombine.low %v3344, %v3351
  %v3353 = vcombine.low %v1816, %v1817
  %v3355 = vunpack.c.l.s4 1983009808
  %v3356 = vunpack.c.0.s8 %v3355
  %v3357 = vlaneseq
  %v3358 = vshrl.u32 %v3357, 7
  %v3359 = vsub.s32 %v3356, %v3358
  %v3360 = vrot.slane %v3353, %v3359
  %v3362 = vunpack.c.l.s4 1983009808
  %v3363 = vunpack.c.0.s8 %v3362
  %v3364 = vlaneseq
  %v3365 = vshrl.u32 %v3364, 7
  %v3366 = vsub.s32 %v3363, %v3365
  %v3367 = vrot.slane %v1818, %v3366
  %v3368 = vcombine.low %v3360, %v3367
  %3369 = vrot.lane.b32.xlu0 %v3251, 66
  %v3370 = vpop.permute.xlu0 %3369
  %3371 = vrot.lane.b32.xlu0 %v3268, 66
  %v3372 = vpop.permute.xlu0 %3371
  %3373 = vrot.lane.b32.xlu0 %v3285, 66
  %v3374 = vpop.permute.xlu0 %3373
  %3375 = vrot.lane.b32.xlu0 %v3301, 66
  %v3376 = vpop.permute.xlu0 %3375
  %3377 = vrot.lane.b32.xlu0 %v3318, 66
  %v3378 = vpop.permute.xlu0 %3377
  %3379 = vrot.lane.b32.xlu0 %v3335, 66
  %v3380 = vpop.permute.xlu0 %3379
  %3381 = vrot.lane.b32.xlu0 %v3352, 66
  %v3382 = vpop.permute.xlu0 %3381
  %3383 = vrot.lane.b32.xlu0 %v3368, 66
  %v3384 = vpop.permute.xlu0 %3383
  %v3423 = vcombine.low %v2059, %v2060
  %v3424 = vcombine.low %v2061, %v2062
  %v3426 = vunpack.c.l.s4 1983009808
  %v3427 = vunpack.c.0.s8 %v3426
  %v3428 = vlaneseq
  %v3429 = vshrl.u32 %v3428, 7
  %v3430 = vsub.s32 %v3427, %v3429
  %v3431 = vrot.slane %v3423, %v3430
  %v3433 = vunpack.c.l.s4 1983009808
  %v3434 = vunpack.c.0.s8 %v3433
  %v3435 = vlaneseq
  %v3436 = vshrl.u32 %v3435, 7
  %v3437 = vsub.s32 %v3434, %v3436
  %v3438 = vrot.slane %v3424, %v3437
  %v3439 = vcombine.low %v3431, %v3438
  %v3440 = vcombine.low %v2063, %v2064
  %v3441 = vcombine.low %v2065, %v2066
  %v3443 = vunpack.c.l.s4 1983009808
  %v3444 = vunpack.c.0.s8 %v3443
  %v3445 = vlaneseq
  %v3446 = vshrl.u32 %v3445, 7
  %v3447 = vsub.s32 %v3444, %v3446
  %v3448 = vrot.slane %v3440, %v3447
  %v3450 = vunpack.c.l.s4 1983009808
  %v3451 = vunpack.c.0.s8 %v3450
  %v3452 = vlaneseq
  %v3453 = vshrl.u32 %v3452, 7
  %v3454 = vsub.s32 %v3451, %v3453
  %v3455 = vrot.slane %v3441, %v3454
  %v3456 = vcombine.low %v3448, %v3455
  %v3457 = vcombine.low %v2067, %v2068
  %v3458 = vcombine.low %v2069, %v2070
  %v3460 = vunpack.c.l.s4 1983009808
  %v3461 = vunpack.c.0.s8 %v3460
  %v3462 = vlaneseq
  %v3463 = vshrl.u32 %v3462, 7
  %v3464 = vsub.s32 %v3461, %v3463
  %v3465 = vrot.slane %v3457, %v3464
  %v3467 = vunpack.c.l.s4 1983009808
  %v3468 = vunpack.c.0.s8 %v3467
  %v3469 = vlaneseq
  %v3470 = vshrl.u32 %v3469, 7
  %v3471 = vsub.s32 %v3468, %v3470
  %v3472 = vrot.slane %v3458, %v3471
  %v3473 = vcombine.low %v3465, %v3472
  %v3474 = vcombine.low %v2071, %v2072
  %v3476 = vunpack.c.l.s4 1983009808
  %v3477 = vunpack.c.0.s8 %v3476
  %v3478 = vlaneseq
  %v3479 = vshrl.u32 %v3478, 7
  %v3480 = vsub.s32 %v3477, %v3479
  %v3481 = vrot.slane %v3474, %v3480
  %v3483 = vunpack.c.l.s4 1983009808
  %v3484 = vunpack.c.0.s8 %v3483
  %v3485 = vlaneseq
  %v3486 = vshrl.u32 %v3485, 7
  %v3487 = vsub.s32 %v3484, %v3486
  %v3488 = vrot.slane %v2073, %v3487
  %v3489 = vcombine.low %v3481, %v3488
  %v3490 = vcombine.low %v2074, %v2075
  %v3491 = vcombine.low %v2076, %v2077
  %v3493 = vunpack.c.l.s4 1983009808
  %v3494 = vunpack.c.0.s8 %v3493
  %v3495 = vlaneseq
  %v3496 = vshrl.u32 %v3495, 7
  %v3497 = vsub.s32 %v3494, %v3496
  %v3498 = vrot.slane %v3490, %v3497
  %v3500 = vunpack.c.l.s4 1983009808
  %v3501 = vunpack.c.0.s8 %v3500
  %v3502 = vlaneseq
  %v3503 = vshrl.u32 %v3502, 7
  %v3504 = vsub.s32 %v3501, %v3503
  %v3505 = vrot.slane %v3491, %v3504
  %v3506 = vcombine.low %v3498, %v3505
  %v3507 = vcombine.low %v2078, %v2079
  %v3508 = vcombine.low %v2080, %v2081
  %v3510 = vunpack.c.l.s4 1983009808
  %v3511 = vunpack.c.0.s8 %v3510
  %v3512 = vlaneseq
  %v3513 = vshrl.u32 %v3512, 7
  %v3514 = vsub.s32 %v3511, %v3513
  %v3515 = vrot.slane %v3507, %v3514
  %v3517 = vunpack.c.l.s4 1983009808
  %v3518 = vunpack.c.0.s8 %v3517
  %v3519 = vlaneseq
  %v3520 = vshrl.u32 %v3519, 7
  %v3521 = vsub.s32 %v3518, %v3520
  %v3522 = vrot.slane %v3508, %v3521
  %v3523 = vcombine.low %v3515, %v3522
  %v3524 = vcombine.low %v2082, %v2083
  %v3525 = vcombine.low %v2084, %v2085
  %v3527 = vunpack.c.l.s4 1983009808
  %v3528 = vunpack.c.0.s8 %v3527
  %v3529 = vlaneseq
  %v3530 = vshrl.u32 %v3529, 7
  %v3531 = vsub.s32 %v3528, %v3530
  %v3532 = vrot.slane %v3524, %v3531
  %v3534 = vunpack.c.l.s4 1983009808
  %v3535 = vunpack.c.0.s8 %v3534
  %v3536 = vlaneseq
  %v3537 = vshrl.u32 %v3536, 7
  %v3538 = vsub.s32 %v3535, %v3537
  %v3539 = vrot.slane %v3525, %v3538
  %v3540 = vcombine.low %v3532, %v3539
  %v3541 = vcombine.low %v2086, %v2087
  %v3543 = vunpack.c.l.s4 1983009808
  %v3544 = vunpack.c.0.s8 %v3543
  %v3545 = vlaneseq
  %v3546 = vshrl.u32 %v3545, 7
  %v3547 = vsub.s32 %v3544, %v3546
  %v3548 = vrot.slane %v3541, %v3547
  %v3550 = vunpack.c.l.s4 1983009808
  %v3551 = vunpack.c.0.s8 %v3550
  %v3552 = vlaneseq
  %v3553 = vshrl.u32 %v3552, 7
  %v3554 = vsub.s32 %v3551, %v3553
  %v3555 = vrot.slane %v2088, %v3554
  %v3556 = vcombine.low %v3548, %v3555
  %3557 = vrot.lane.b32.xlu0 %v3439, 72
  %v3558 = vpop.permute.xlu0 %3557
  %3559 = vrot.lane.b32.xlu0 %v3456, 72
  %v3560 = vpop.permute.xlu0 %3559
  %3561 = vrot.lane.b32.xlu0 %v3473, 72
  %v3562 = vpop.permute.xlu0 %3561
  %3563 = vrot.lane.b32.xlu0 %v3489, 72
  %v3564 = vpop.permute.xlu0 %3563
  %3565 = vrot.lane.b32.xlu0 %v3506, 72
  %v3566 = vpop.permute.xlu0 %3565
  %3567 = vrot.lane.b32.xlu0 %v3523, 72
  %v3568 = vpop.permute.xlu0 %3567
  %3569 = vrot.lane.b32.xlu0 %v3540, 72
  %v3570 = vpop.permute.xlu0 %3569
  %3571 = vrot.lane.b32.xlu0 %v3556, 72
  %v3572 = vpop.permute.xlu0 %3571
  %v3611 = vcombine.low %v2329, %v2330
  %v3612 = vcombine.low %v2331, %v2332
  %v3614 = vunpack.c.l.s4 1983009808
  %v3615 = vunpack.c.0.s8 %v3614
  %v3616 = vlaneseq
  %v3617 = vshrl.u32 %v3616, 7
  %v3618 = vsub.s32 %v3615, %v3617
  %v3619 = vrot.slane %v3611, %v3618
  %v3621 = vunpack.c.l.s4 1983009808
  %v3622 = vunpack.c.0.s8 %v3621
  %v3623 = vlaneseq
  %v3624 = vshrl.u32 %v3623, 7
  %v3625 = vsub.s32 %v3622, %v3624
  %v3626 = vrot.slane %v3612, %v3625
  %v3627 = vcombine.low %v3619, %v3626
  %v3628 = vcombine.low %v2333, %v2334
  %v3629 = vcombine.low %v2335, %v2336
  %v3631 = vunpack.c.l.s4 1983009808
  %v3632 = vunpack.c.0.s8 %v3631
  %v3633 = vlaneseq
  %v3634 = vshrl.u32 %v3633, 7
  %v3635 = vsub.s32 %v3632, %v3634
  %v3636 = vrot.slane %v3628, %v3635
  %v3638 = vunpack.c.l.s4 1983009808
  %v3639 = vunpack.c.0.s8 %v3638
  %v3640 = vlaneseq
  %v3641 = vshrl.u32 %v3640, 7
  %v3642 = vsub.s32 %v3639, %v3641
  %v3643 = vrot.slane %v3629, %v3642
  %v3644 = vcombine.low %v3636, %v3643
  %v3645 = vcombine.low %v2337, %v2338
  %v3646 = vcombine.low %v2339, %v2340
  %v3648 = vunpack.c.l.s4 1983009808
  %v3649 = vunpack.c.0.s8 %v3648
  %v3650 = vlaneseq
  %v3651 = vshrl.u32 %v3650, 7
  %v3652 = vsub.s32 %v3649, %v3651
  %v3653 = vrot.slane %v3645, %v3652
  %v3655 = vunpack.c.l.s4 1983009808
  %v3656 = vunpack.c.0.s8 %v3655
  %v3657 = vlaneseq
  %v3658 = vshrl.u32 %v3657, 7
  %v3659 = vsub.s32 %v3656, %v3658
  %v3660 = vrot.slane %v3646, %v3659
  %v3661 = vcombine.low %v3653, %v3660
  %v3662 = vcombine.low %v2341, %v2342
  %v3664 = vunpack.c.l.s4 1983009808
  %v3665 = vunpack.c.0.s8 %v3664
  %v3666 = vlaneseq
  %v3667 = vshrl.u32 %v3666, 7
  %v3668 = vsub.s32 %v3665, %v3667
  %v3669 = vrot.slane %v3662, %v3668
  %v3671 = vunpack.c.l.s4 1983009808
  %v3672 = vunpack.c.0.s8 %v3671
  %v3673 = vlaneseq
  %v3674 = vshrl.u32 %v3673, 7
  %v3675 = vsub.s32 %v3672, %v3674
  %v3676 = vrot.slane %v2343, %v3675
  %v3677 = vcombine.low %v3669, %v3676
  %v3678 = vcombine.low %v2344, %v2345
  %v3679 = vcombine.low %v2346, %v2347
  %v3681 = vunpack.c.l.s4 1983009808
  %v3682 = vunpack.c.0.s8 %v3681
  %v3683 = vlaneseq
  %v3684 = vshrl.u32 %v3683, 7
  %v3685 = vsub.s32 %v3682, %v3684
  %v3686 = vrot.slane %v3678, %v3685
  %v3688 = vunpack.c.l.s4 1983009808
  %v3689 = vunpack.c.0.s8 %v3688
  %v3690 = vlaneseq
  %v3691 = vshrl.u32 %v3690, 7
  %v3692 = vsub.s32 %v3689, %v3691
  %v3693 = vrot.slane %v3679, %v3692
  %v3694 = vcombine.low %v3686, %v3693
  %v3695 = vcombine.low %v2348, %v2349
  %v3696 = vcombine.low %v2350, %v2351
  %v3698 = vunpack.c.l.s4 1983009808
  %v3699 = vunpack.c.0.s8 %v3698
  %v3700 = vlaneseq
  %v3701 = vshrl.u32 %v3700, 7
  %v3702 = vsub.s32 %v3699, %v3701
  %v3703 = vrot.slane %v3695, %v3702
  %v3705 = vunpack.c.l.s4 1983009808
  %v3706 = vunpack.c.0.s8 %v3705
  %v3707 = vlaneseq
  %v3708 = vshrl.u32 %v3707, 7
  %v3709 = vsub.s32 %v3706, %v3708
  %v3710 = vrot.slane %v3696, %v3709
  %v3711 = vcombine.low %v3703, %v3710
  %v3712 = vcombine.low %v2352, %v2353
  %v3713 = vcombine.low %v2354, %v2355
  %v3715 = vunpack.c.l.s4 1983009808
  %v3716 = vunpack.c.0.s8 %v3715
  %v3717 = vlaneseq
  %v3718 = vshrl.u32 %v3717, 7
  %v3719 = vsub.s32 %v3716, %v3718
  %v3720 = vrot.slane %v3712, %v3719
  %v3722 = vunpack.c.l.s4 1983009808
  %v3723 = vunpack.c.0.s8 %v3722
  %v3724 = vlaneseq
  %v3725 = vshrl.u32 %v3724, 7
  %v3726 = vsub.s32 %v3723, %v3725
  %v3727 = vrot.slane %v3713, %v3726
  %v3728 = vcombine.low %v3720, %v3727
  %v3729 = vcombine.low %v2356, %v2357
  %v3731 = vunpack.c.l.s4 1983009808
  %v3732 = vunpack.c.0.s8 %v3731
  %v3733 = vlaneseq
  %v3734 = vshrl.u32 %v3733, 7
  %v3735 = vsub.s32 %v3732, %v3734
  %v3736 = vrot.slane %v3729, %v3735
  %v3738 = vunpack.c.l.s4 1983009808
  %v3739 = vunpack.c.0.s8 %v3738
  %v3740 = vlaneseq
  %v3741 = vshrl.u32 %v3740, 7
  %v3742 = vsub.s32 %v3739, %v3741
  %v3743 = vrot.slane %v2358, %v3742
  %v3744 = vcombine.low %v3736, %v3743
  %3745 = vrot.lane.b32.xlu0 %v3627, 78
  %v3746 = vpop.permute.xlu0 %3745
  %3747 = vrot.lane.b32.xlu0 %v3644, 78
  %v3748 = vpop.permute.xlu0 %3747
  %3749 = vrot.lane.b32.xlu0 %v3661, 78
  %v3750 = vpop.permute.xlu0 %3749
  %3751 = vrot.lane.b32.xlu0 %v3677, 78
  %v3752 = vpop.permute.xlu0 %3751
  %3753 = vrot.lane.b32.xlu0 %v3694, 78
  %v3754 = vpop.permute.xlu0 %3753
  %3755 = vrot.lane.b32.xlu0 %v3711, 78
  %v3756 = vpop.permute.xlu0 %3755
  %3757 = vrot.lane.b32.xlu0 %v3728, 78
  %v3758 = vpop.permute.xlu0 %3757
  %3759 = vrot.lane.b32.xlu0 %v3744, 78
  %v3760 = vpop.permute.xlu0 %3759
  %v3799 = vcombine.low %v2599, %v2600
  %v3800 = vcombine.low %v2601, %v2602
  %v3802 = vunpack.c.l.s4 1983009808
  %v3803 = vunpack.c.0.s8 %v3802
  %v3804 = vlaneseq
  %v3805 = vshrl.u32 %v3804, 7
  %v3806 = vsub.s32 %v3803, %v3805
  %v3807 = vrot.slane %v3799, %v3806
  %v3809 = vunpack.c.l.s4 1983009808
  %v3810 = vunpack.c.0.s8 %v3809
  %v3811 = vlaneseq
  %v3812 = vshrl.u32 %v3811, 7
  %v3813 = vsub.s32 %v3810, %v3812
  %v3814 = vrot.slane %v3800, %v3813
  %v3815 = vcombine.low %v3807, %v3814
  %v3816 = vcombine.low %v2603, %v2604
  %v3817 = vcombine.low %v2605, %v2606
  %v3819 = vunpack.c.l.s4 1983009808
  %v3820 = vunpack.c.0.s8 %v3819
  %v3821 = vlaneseq
  %v3822 = vshrl.u32 %v3821, 7
  %v3823 = vsub.s32 %v3820, %v3822
  %v3824 = vrot.slane %v3816, %v3823
  %v3826 = vunpack.c.l.s4 1983009808
  %v3827 = vunpack.c.0.s8 %v3826
  %v3828 = vlaneseq
  %v3829 = vshrl.u32 %v3828, 7
  %v3830 = vsub.s32 %v3827, %v3829
  %v3831 = vrot.slane %v3817, %v3830
  %v3832 = vcombine.low %v3824, %v3831
  %v3833 = vcombine.low %v2607, %v2608
  %v3834 = vcombine.low %v2609, %v2610
  %v3836 = vunpack.c.l.s4 1983009808
  %v3837 = vunpack.c.0.s8 %v3836
  %v3838 = vlaneseq
  %v3839 = vshrl.u32 %v3838, 7
  %v3840 = vsub.s32 %v3837, %v3839
  %v3841 = vrot.slane %v3833, %v3840
  %v3843 = vunpack.c.l.s4 1983009808
  %v3844 = vunpack.c.0.s8 %v3843
  %v3845 = vlaneseq
  %v3846 = vshrl.u32 %v3845, 7
  %v3847 = vsub.s32 %v3844, %v3846
  %v3848 = vrot.slane %v3834, %v3847
  %v3849 = vcombine.low %v3841, %v3848
  %v3850 = vcombine.low %v2611, %v2612
  %v3852 = vunpack.c.l.s4 1983009808
  %v3853 = vunpack.c.0.s8 %v3852
  %v3854 = vlaneseq
  %v3855 = vshrl.u32 %v3854, 7
  %v3856 = vsub.s32 %v3853, %v3855
  %v3857 = vrot.slane %v3850, %v3856
  %v3859 = vunpack.c.l.s4 1983009808
  %v3860 = vunpack.c.0.s8 %v3859
  %v3861 = vlaneseq
  %v3862 = vshrl.u32 %v3861, 7
  %v3863 = vsub.s32 %v3860, %v3862
  %v3864 = vrot.slane %v2613, %v3863
  %v3865 = vcombine.low %v3857, %v3864
  %v3866 = vcombine.low %v2614, %v2615
  %v3867 = vcombine.low %v2616, %v2617
  %v3869 = vunpack.c.l.s4 1983009808
  %v3870 = vunpack.c.0.s8 %v3869
  %v3871 = vlaneseq
  %v3872 = vshrl.u32 %v3871, 7
  %v3873 = vsub.s32 %v3870, %v3872
  %v3874 = vrot.slane %v3866, %v3873
  %v3876 = vunpack.c.l.s4 1983009808
  %v3877 = vunpack.c.0.s8 %v3876
  %v3878 = vlaneseq
  %v3879 = vshrl.u32 %v3878, 7
  %v3880 = vsub.s32 %v3877, %v3879
  %v3881 = vrot.slane %v3867, %v3880
  %v3882 = vcombine.low %v3874, %v3881
  %v3883 = vcombine.low %v2618, %v2619
  %v3884 = vcombine.low %v2620, %v2621
  %v3886 = vunpack.c.l.s4 1983009808
  %v3887 = vunpack.c.0.s8 %v3886
  %v3888 = vlaneseq
  %v3889 = vshrl.u32 %v3888, 7
  %v3890 = vsub.s32 %v3887, %v3889
  %v3891 = vrot.slane %v3883, %v3890
  %v3893 = vunpack.c.l.s4 1983009808
  %v3894 = vunpack.c.0.s8 %v3893
  %v3895 = vlaneseq
  %v3896 = vshrl.u32 %v3895, 7
  %v3897 = vsub.s32 %v3894, %v3896
  %v3898 = vrot.slane %v3884, %v3897
  %v3899 = vcombine.low %v3891, %v3898
  %v3900 = vcombine.low %v2622, %v2623
  %v3901 = vcombine.low %v2624, %v2625
  %v3903 = vunpack.c.l.s4 1983009808
  %v3904 = vunpack.c.0.s8 %v3903
  %v3905 = vlaneseq
  %v3906 = vshrl.u32 %v3905, 7
  %v3907 = vsub.s32 %v3904, %v3906
  %v3908 = vrot.slane %v3900, %v3907
  %v3910 = vunpack.c.l.s4 1983009808
  %v3911 = vunpack.c.0.s8 %v3910
  %v3912 = vlaneseq
  %v3913 = vshrl.u32 %v3912, 7
  %v3914 = vsub.s32 %v3911, %v3913
  %v3915 = vrot.slane %v3901, %v3914
  %v3916 = vcombine.low %v3908, %v3915
  %v3917 = vcombine.low %v2626, %v2627
  %v3919 = vunpack.c.l.s4 1983009808
  %v3920 = vunpack.c.0.s8 %v3919
  %v3921 = vlaneseq
  %v3922 = vshrl.u32 %v3921, 7
  %v3923 = vsub.s32 %v3920, %v3922
  %v3924 = vrot.slane %v3917, %v3923
  %v3926 = vunpack.c.l.s4 1983009808
  %v3927 = vunpack.c.0.s8 %v3926
  %v3928 = vlaneseq
  %v3929 = vshrl.u32 %v3928, 7
  %v3930 = vsub.s32 %v3927, %v3929
  %v3931 = vrot.slane %v2628, %v3930
  %v3932 = vcombine.low %v3924, %v3931
  %3933 = vrot.lane.b32.xlu0 %v3815, 84
  %v3934 = vpop.permute.xlu0 %3933
  %3935 = vrot.lane.b32.xlu0 %v3832, 84
  %v3936 = vpop.permute.xlu0 %3935
  %3937 = vrot.lane.b32.xlu0 %v3849, 84
  %v3938 = vpop.permute.xlu0 %3937
  %3939 = vrot.lane.b32.xlu0 %v3865, 84
  %v3940 = vpop.permute.xlu0 %3939
  %3941 = vrot.lane.b32.xlu0 %v3882, 84
  %v3942 = vpop.permute.xlu0 %3941
  %3943 = vrot.lane.b32.xlu0 %v3899, 84
  %v3944 = vpop.permute.xlu0 %3943
  %3945 = vrot.lane.b32.xlu0 %v3916, 84
  %v3946 = vpop.permute.xlu0 %3945
  %3947 = vrot.lane.b32.xlu0 %v3932, 84
  %v3948 = vpop.permute.xlu0 %3947
  %vm3957 = vcmask 48128
  %v3958 = vsel %vm3957, %v2675, %v2802
  %v3959 = vsel %vm3957, %v2692, %v2804
  %v3960 = vsel %vm3957, %v2709, %v2806
  %v3961 = vsel %vm3957, %v2725, %v2808
  %v3962 = vsel %vm3957, %v2742, %v2810
  %v3963 = vsel %vm3957, %v2759, %v2812
  %v3964 = vsel %vm3957, %v2776, %v2814
  %v3965 = vsel %vm3957, %v2792, %v2816
  %vm3966 = vcmask 97280
  %v3967 = vsel %vm3966, %v3958, %v2826
  %v3968 = vsel %vm3966, %v3959, %v2828
  %v3969 = vsel %vm3966, %v3960, %v2830
  %v3970 = vsel %vm3966, %v3961, %v2832
  %v3971 = vsel %vm3966, %v3962, %v2834
  %v3972 = vsel %vm3966, %v3963, %v2836
  %v3973 = vsel %vm3966, %v3964, %v2838
  %v3974 = vsel %vm3966, %v3965, %v2840
  %vm3975 = vcmask 146432
  %v3976 = vsel %vm3975, %v3967, %v2850
  %v3977 = vsel %vm3975, %v3968, %v2852
  %v3978 = vsel %vm3975, %v3969, %v2854
  %v3979 = vsel %vm3975, %v3970, %v2856
  %v3980 = vsel %vm3975, %v3971, %v2858
  %v3981 = vsel %vm3975, %v3972, %v2860
  %v3982 = vsel %vm3975, %v3973, %v2862
  %v3983 = vsel %vm3975, %v3974, %v2864
  %vm3984 = vcmask 195584
  %v3985 = vsel %vm3984, %v3976, %v2874
  %v3986 = vsel %vm3984, %v3977, %v2876
  %v3987 = vsel %vm3984, %v3978, %v2878
  %v3988 = vsel %vm3984, %v3979, %v2880
  %v3989 = vsel %vm3984, %v3980, %v2882
  %v3990 = vsel %vm3984, %v3981, %v2884
  %v3991 = vsel %vm3984, %v3982, %v2886
  %v3992 = vsel %vm3984, %v3983, %v2888
  %vm3993 = vcmask 244736
  %v3994 = vsel %vm3993, %v3985, %v2898
  %v3995 = vsel %vm3993, %v3986, %v2900
  %v3996 = vsel %vm3993, %v3987, %v2902
  %v3997 = vsel %vm3993, %v3988, %v2904
  %v3998 = vsel %vm3993, %v3989, %v2906
  %v3999 = vsel %vm3993, %v3990, %v2908
  %v4000 = vsel %vm3993, %v3991, %v2910
  %v4001 = vsel %vm3993, %v3992, %v2912
  %vm4002 = vcmask 293888
  %v4003 = vsel %vm4002, %v3994, %v2922
  %v4004 = vsel %vm4002, %v3995, %v2924
  %v4005 = vsel %vm4002, %v3996, %v2926
  %v4006 = vsel %vm4002, %v3997, %v2928
  %v4007 = vsel %vm4002, %v3998, %v2930
  %v4008 = vsel %vm4002, %v3999, %v2932
  %v4009 = vsel %vm4002, %v4000, %v2934
  %v4010 = vsel %vm4002, %v4001, %v2936
  %vm4011 = vcmask 343040
  %v4012 = vsel %vm4011, %v4003, %v2946
  %v4013 = vsel %vm4011, %v4004, %v2948
  %v4014 = vsel %vm4011, %v4005, %v2950
  %v4015 = vsel %vm4011, %v4006, %v2952
  %v4016 = vsel %vm4011, %v4007, %v2954
  %v4017 = vsel %vm4011, %v4008, %v2956
  %v4018 = vsel %vm4011, %v4009, %v2958
  %v4019 = vsel %vm4011, %v4010, %v2960
  %vm4020 = vcmask 392192
  %v4021 = vsel %vm4020, %v4012, %v2970
  %v4022 = vsel %vm4020, %v4013, %v2972
  %v4023 = vsel %vm4020, %v4014, %v2974
  %v4024 = vsel %vm4020, %v4015, %v2976
  %v4025 = vsel %vm4020, %v4016, %v2978
  %v4026 = vsel %vm4020, %v4017, %v2980
  %v4027 = vsel %vm4020, %v4018, %v2982
  %v4028 = vsel %vm4020, %v4019, %v2984
  %vm4029 = vcmask 441344
  %v4030 = vsel %vm4029, %v4021, %v2994
  %v4031 = vsel %vm4029, %v4022, %v2996
  %v4032 = vsel %vm4029, %v4023, %v2998
  %v4033 = vsel %vm4029, %v4024, %v3000
  %v4034 = vsel %vm4029, %v4025, %v3002
  %v4035 = vsel %vm4029, %v4026, %v3004
  %v4036 = vsel %vm4029, %v4027, %v3006
  %v4037 = vsel %vm4029, %v4028, %v3008
  %vm4038 = vcmask 490496
  %v4039 = vsel %vm4038, %v4030, %v3182
  %v4040 = vsel %vm4038, %v4031, %v3184
  %v4041 = vsel %vm4038, %v4032, %v3186
  %v4042 = vsel %vm4038, %v4033, %v3188
  %v4043 = vsel %vm4038, %v4034, %v3190
  %v4044 = vsel %vm4038, %v4035, %v3192
  %v4045 = vsel %vm4038, %v4036, %v3194
  %v4046 = vsel %vm4038, %v4037, %v3196
  %vm4047 = vcmask 539648
  %v4048 = vsel %vm4047, %v4039, %v3370
  %v4049 = vsel %vm4047, %v4040, %v3372
  %v4050 = vsel %vm4047, %v4041, %v3374
  %v4051 = vsel %vm4047, %v4042, %v3376
  %v4052 = vsel %vm4047, %v4043, %v3378
  %v4053 = vsel %vm4047, %v4044, %v3380
  %v4054 = vsel %vm4047, %v4045, %v3382
  %v4055 = vsel %vm4047, %v4046, %v3384
  %vm4056 = vcmask 588800
  %v4057 = vsel %vm4056, %v4048, %v3558
  %v4058 = vsel %vm4056, %v4049, %v3560
  %v4059 = vsel %vm4056, %v4050, %v3562
  %v4060 = vsel %vm4056, %v4051, %v3564
  %v4061 = vsel %vm4056, %v4052, %v3566
  %v4062 = vsel %vm4056, %v4053, %v3568
  %v4063 = vsel %vm4056, %v4054, %v3570
  %v4064 = vsel %vm4056, %v4055, %v3572
  %vm4065 = vcmask 637952
  %v4066 = vsel %vm4065, %v4057, %v3746
  %v4067 = vsel %vm4065, %v4058, %v3748
  %v4068 = vsel %vm4065, %v4059, %v3750
  %v4069 = vsel %vm4065, %v4060, %v3752
  %v4070 = vsel %vm4065, %v4061, %v3754
  %v4071 = vsel %vm4065, %v4062, %v3756
  %v4072 = vsel %vm4065, %v4063, %v3758
  %v4073 = vsel %vm4065, %v4064, %v3760
  %vm4074 = vcmask 687104
  %v4075 = vsel %vm4074, %v4066, %v3934
  %v4076 = vsel %vm4074, %v4067, %v3936
  %v4077 = vsel %vm4074, %v4068, %v3938
  %v4078 = vsel %vm4074, %v4069, %v3940
  %v4079 = vsel %vm4074, %v4070, %v3942
  %v4080 = vsel %vm4074, %v4071, %v3944
  %v4081 = vsel %vm4074, %v4072, %v3946
  %v4082 = vsel %vm4074, %v4073, %v3948
  %v4085 = vrot.slane %v4075, 1
  %v4086 = vrot.slane %v4079, 1
  %v4089 = vmax.f32 %v4075, %v4085
  %v4090 = vmax.f32 %v4079, %v4086
  %v4093 = vrot.slane %v4076, 1
  %v4094 = vrot.slane %v4080, 1
  %v4097 = vmax.f32 %v4076, %v4093
  %v4098 = vmax.f32 %v4080, %v4094
  %v4101 = vrot.slane %v4077, 1
  %v4102 = vrot.slane %v4081, 1
  %v4105 = vmax.f32 %v4077, %v4101
  %v4106 = vmax.f32 %v4081, %v4102
  %v4109 = vrot.slane %v4078, 1
  %v4110 = vrot.slane %v4082, 1
  %v4113 = vmax.f32 %v4078, %v4109
  %v4114 = vmax.f32 %v4082, %v4110
  %v4117 = vrot.slane %v4090, 7
  %vm4118 = vcmask 1041409
  %v4119 = vsel %vm4118, %v4117, %v4089
  %vm4121 = vcmask 1043459
  %v4122 = vsel %vm4121, %v4117, %v4089
  %vm4124 = vcmask 1045509
  %v4125 = vsel %vm4124, %v4117, %v4089
  %vm4127 = vcmask 1047559
  %v4128 = vsel %vm4127, %v4117, %v4089
  %v4132 = vrot.slane %v4098, 7
  %v4133 = vsel %vm4118, %v4132, %v4097
  %v4135 = vsel %vm4121, %v4132, %v4097
  %v4137 = vsel %vm4124, %v4132, %v4097
  %v4139 = vsel %vm4127, %v4132, %v4097
  %v4143 = vrot.slane %v4106, 7
  %v4144 = vsel %vm4118, %v4143, %v4105
  %v4146 = vsel %vm4121, %v4143, %v4105
  %v4148 = vsel %vm4124, %v4143, %v4105
  %v4150 = vsel %vm4127, %v4143, %v4105
  %v4154 = vrot.slane %v4114, 7
  %v4155 = vsel %vm4118, %v4154, %v4113
  %v4157 = vsel %vm4121, %v4154, %v4113
  %v4159 = vsel %vm4124, %v4154, %v4113
  %vm4161 = vcmask 1041408
  %v4162 = vsel %vm4161, %v4119, %v4122
  %vm4163 = vcmask 1043456
  %v4164 = vsel %vm4163, %v4162, %v4125
  %vm4165 = vcmask 1045504
  %v4166 = vsel %vm4165, %v4164, %v4128
  %v4167 = vsel %vm4161, %v4133, %v4135
  %v4168 = vsel %vm4163, %v4167, %v4137
  %v4169 = vsel %vm4165, %v4168, %v4139
  %v4170 = vsel %vm4161, %v4144, %v4146
  %v4171 = vsel %vm4163, %v4170, %v4148
  %v4172 = vsel %vm4165, %v4171, %v4150
  %v4173 = vsel %vm4161, %v4155, %v4157
  %v4174 = vsel %vm4163, %v4173, %v4159
  %v4179 = vcombine.high %v4166, %v4166
  %v4181 = vunpack.c.l.s4 1983009808
  %v4182 = vunpack.c.0.s8 %v4181
  %v4183 = vlaneseq
  %v4184 = vshrl.u32 %v4183, 7
  %v4185 = vsub.s32 %v4182, %v4184
  %v4186 = vrot.slane %v4166, %v4185
  %v4188 = vunpack.c.l.s4 1983009808
  %v4189 = vunpack.c.0.s8 %v4188
  %v4190 = vlaneseq
  %v4191 = vshrl.u32 %v4190, 7
  %v4192 = vsub.s32 %v4189, %v4191
  %v4193 = vrot.slane %v4179, %v4192
  %v4194 = vcombine.high %v4186, %v4186
  %v4195 = vcombine.high %v4193, %v4193
  %v4196 = vcombine.high %v4169, %v4169
  %v4198 = vunpack.c.l.s4 1983009808
  %v4199 = vunpack.c.0.s8 %v4198
  %v4200 = vlaneseq
  %v4201 = vshrl.u32 %v4200, 7
  %v4202 = vsub.s32 %v4199, %v4201
  %v4203 = vrot.slane %v4169, %v4202
  %v4205 = vunpack.c.l.s4 1983009808
  %v4206 = vunpack.c.0.s8 %v4205
  %v4207 = vlaneseq
  %v4208 = vshrl.u32 %v4207, 7
  %v4209 = vsub.s32 %v4206, %v4208
  %v4210 = vrot.slane %v4196, %v4209
  %v4211 = vcombine.high %v4203, %v4203
  %v4212 = vcombine.high %v4210, %v4210
  %v4213 = vcombine.high %v4172, %v4172
  %v4215 = vunpack.c.l.s4 1983009808
  %v4216 = vunpack.c.0.s8 %v4215
  %v4217 = vlaneseq
  %v4218 = vshrl.u32 %v4217, 7
  %v4219 = vsub.s32 %v4216, %v4218
  %v4220 = vrot.slane %v4172, %v4219
  %v4222 = vunpack.c.l.s4 1983009808
  %v4223 = vunpack.c.0.s8 %v4222
  %v4224 = vlaneseq
  %v4225 = vshrl.u32 %v4224, 7
  %v4226 = vsub.s32 %v4223, %v4225
  %v4227 = vrot.slane %v4213, %v4226
  %v4228 = vcombine.high %v4220, %v4220
  %v4229 = vcombine.high %v4227, %v4227
  %v4230 = vcombine.high %v4174, %v4174
  %v4232 = vunpack.c.l.s4 1983009808
  %v4233 = vunpack.c.0.s8 %v4232
  %v4234 = vlaneseq
  %v4235 = vshrl.u32 %v4234, 7
  %v4236 = vsub.s32 %v4233, %v4235
  %v4237 = vrot.slane %v4174, %v4236
  %v4239 = vunpack.c.l.s4 1983009808
  %v4240 = vunpack.c.0.s8 %v4239
  %v4241 = vlaneseq
  %v4242 = vshrl.u32 %v4241, 7
  %v4243 = vsub.s32 %v4240, %v4242
  %v4244 = vrot.slane %v4230, %v4243
  %v4245 = vcombine.high %v4237, %v4237
  %v4246 = vcombine.low %v4186, %v4194
  %v4247 = vcombine.low %v4193, %v4195
  %v4249 = vunpack.c.l.s4 1983009808
  %v4250 = vunpack.c.0.s8 %v4249
  %v4251 = vlaneseq
  %v4252 = vshrl.u32 %v4251, 7
  %v4253 = vsub.s32 %v4250, %v4252
  %v4254 = vrot.slane %v4246, %v4253
  %v4256 = vunpack.c.l.s4 1983009808
  %v4257 = vunpack.c.0.s8 %v4256
  %v4258 = vlaneseq
  %v4259 = vshrl.u32 %v4258, 7
  %v4260 = vsub.s32 %v4257, %v4259
  %v4261 = vrot.slane %v4247, %v4260
  %v4262 = vcombine.low %v4254, %v4261
  %v4263 = vcombine.low %v4203, %v4211
  %v4264 = vcombine.low %v4210, %v4212
  %v4266 = vunpack.c.l.s4 1983009808
  %v4267 = vunpack.c.0.s8 %v4266
  %v4268 = vlaneseq
  %v4269 = vshrl.u32 %v4268, 7
  %v4270 = vsub.s32 %v4267, %v4269
  %v4271 = vrot.slane %v4263, %v4270
  %v4273 = vunpack.c.l.s4 1983009808
  %v4274 = vunpack.c.0.s8 %v4273
  %v4275 = vlaneseq
  %v4276 = vshrl.u32 %v4275, 7
  %v4277 = vsub.s32 %v4274, %v4276
  %v4278 = vrot.slane %v4264, %v4277
  %v4279 = vcombine.low %v4271, %v4278
  %v4280 = vcombine.low %v4220, %v4228
  %v4282 = vunpack.c.l.s4 1983009808
  %v4283 = vunpack.c.0.s8 %v4282
  %v4284 = vlaneseq
  %v4285 = vshrl.u32 %v4284, 7
  %v4286 = vsub.s32 %v4283, %v4285
  %v4287 = vrot.slane %v4280, %v4286
  %v4289 = vunpack.c.l.s4 1983009808
  %v4290 = vunpack.c.0.s8 %v4289
  %v4291 = vlaneseq
  %v4292 = vshrl.u32 %v4291, 7
  %v4293 = vsub.s32 %v4290, %v4292
  %v4294 = vrot.slane %v4227, %v4293
  %v4295 = vcombine.low %v4287, %v4294
  %v4299 = vpack.c.bf16 %v4279, %v4262
  %v4300 = vpack.c.bf16 %v4295, %v4295
  %v4301 = vld [vmem:[%s3] sm:$0xff]
  %v4302 = vld [vmem:[%s3 + $0x8] sm:$0xff]
  %v4303 = vld [vmem:[%s3 + $0x10] sm:$0xff]
  %v4304 = vld [vmem:[%s3 + $0x18] sm:$0xff]
  %v4305 = vld [vmem:[%s3 + $0x20] sm:$0xff]
  %v4306 = vld [vmem:[%s3 + $0x28] sm:$0xff]
  %v4307 = vld [vmem:[%s3 + $0x30] sm:$0xff]
  %v4308 = vld [vmem:[%s3 + $0x38] sm:$0xff]
  %v4309 = vld [vmem:[%s3 + $0x40] sm:$0xff]
  %v4310 = vld [vmem:[%s3 + $0x48] sm:$0xff]
  %v4311 = vld [vmem:[%s3 + $0x50] sm:$0xff]
  %v4312 = vld [vmem:[%s3 + $0x58] sm:$0x11]
  %v4313 = vcombine.low %v4194, %v4193
  %v4314 = vcombine.low %v4195, %v4203
  %v4316 = vunpack.c.l.s4 1983009808
  %v4317 = vunpack.c.0.s8 %v4316
  %v4318 = vlaneseq
  %v4319 = vshrl.u32 %v4318, 7
  %v4320 = vsub.s32 %v4317, %v4319
  %v4321 = vrot.slane %v4313, %v4320
  %v4323 = vunpack.c.l.s4 1983009808
  %v4324 = vunpack.c.0.s8 %v4323
  %v4325 = vlaneseq
  %v4326 = vshrl.u32 %v4325, 7
  %v4327 = vsub.s32 %v4324, %v4326
  %v4328 = vrot.slane %v4314, %v4327
  %v4329 = vcombine.low %v4321, %v4328
  %v4330 = vcombine.low %v4211, %v4210
  %v4331 = vcombine.low %v4212, %v4220
  %v4333 = vunpack.c.l.s4 1983009808
  %v4334 = vunpack.c.0.s8 %v4333
  %v4335 = vlaneseq
  %v4336 = vshrl.u32 %v4335, 7
  %v4337 = vsub.s32 %v4334, %v4336
  %v4338 = vrot.slane %v4330, %v4337
  %v4340 = vunpack.c.l.s4 1983009808
  %v4341 = vunpack.c.0.s8 %v4340
  %v4342 = vlaneseq
  %v4343 = vshrl.u32 %v4342, 7
  %v4344 = vsub.s32 %v4341, %v4343
  %v4345 = vrot.slane %v4331, %v4344
  %v4346 = vcombine.low %v4338, %v4345
  %v4347 = vcombine.low %v4228, %v4227
  %v4349 = vunpack.c.l.s4 1983009808
  %v4350 = vunpack.c.0.s8 %v4349
  %v4351 = vlaneseq
  %v4352 = vshrl.u32 %v4351, 7
  %v4353 = vsub.s32 %v4350, %v4352
  %v4354 = vrot.slane %v4347, %v4353
  %v4356 = vunpack.c.l.s4 1983009808
  %v4357 = vunpack.c.0.s8 %v4356
  %v4358 = vlaneseq
  %v4359 = vshrl.u32 %v4358, 7
  %v4360 = vsub.s32 %v4357, %v4359
  %v4361 = vrot.slane %v4229, %v4360
  %v4362 = vcombine.low %v4354, %v4361
  %v4366 = vpack.c.bf16 %v4346, %v4329
  %v4367 = vpack.c.bf16 %v4362, %v4362
  %s4368 = scalar_lea.vmem %s3, 96
  %v4369 = vld [vmem:[%s4368] sm:$0xff]
  %v4370 = vld [vmem:[%s4368 + $0x8] sm:$0xff]
  %v4371 = vld [vmem:[%s4368 + $0x10] sm:$0xff]
  %v4372 = vld [vmem:[%s4368 + $0x18] sm:$0xff]
  %v4373 = vld [vmem:[%s4368 + $0x20] sm:$0xff]
  %v4374 = vld [vmem:[%s4368 + $0x28] sm:$0xff]
  %v4375 = vld [vmem:[%s4368 + $0x30] sm:$0xff]
  %v4376 = vld [vmem:[%s4368 + $0x38] sm:$0xff]
  %v4377 = vld [vmem:[%s4368 + $0x40] sm:$0xff]
  %v4378 = vld [vmem:[%s4368 + $0x48] sm:$0xff]
  %v4379 = vld [vmem:[%s4368 + $0x50] sm:$0xff]
  %v4380 = vld [vmem:[%s4368 + $0x58] sm:$0x11]
  %v4393 = vunpack.c.l.b16 %v4369
  %v4394 = vunpack.c.h.b16 %v4369
  %v4395 = vunpack.c.l.b16 %v4370
  %v4396 = vunpack.c.h.b16 %v4370
  %v4397 = vunpack.c.l.b16 %v4371
  %v4398 = vunpack.c.h.b16 %v4371
  %v4399 = vunpack.c.l.b16 %v4372
  %v4400 = vunpack.c.h.b16 %v4372
  %v4401 = vunpack.c.l.b16 %v4373
  %v4402 = vunpack.c.h.b16 %v4373
  %v4403 = vunpack.c.l.b16 %v4374
  %v4404 = vunpack.c.h.b16 %v4374
  %v4405 = vunpack.c.l.b16 %v4375
  %v4406 = vunpack.c.h.b16 %v4375
  %v4407 = vunpack.c.l.b16 %v4376
  %v4408 = vunpack.c.h.b16 %v4376
  %v4409 = vunpack.c.l.b16 %v4377
  %v4410 = vunpack.c.h.b16 %v4377
  %v4411 = vunpack.c.l.b16 %v4378
  %v4412 = vunpack.c.h.b16 %v4378
  %v4413 = vunpack.c.l.b16 %v4379
  %v4414 = vunpack.c.h.b16 %v4379
  %v4415 = vunpack.c.l.b16 %v4380
  %v4416 = vunpack.c.h.b16 %v4380
  %v4417 = vpack.c.b16 %v4395, %v4393
  %v4418 = vpack.c.b16 %v4396, %v4394
  %v4419 = vpack.c.b16 %v4399, %v4397
  %v4420 = vpack.c.b16 %v4400, %v4398
  %v4421 = vpack.c.b16 %v4403, %v4401
  %v4422 = vpack.c.b16 %v4404, %v4402
  %v4423 = vpack.c.b16 %v4407, %v4405
  %v4424 = vpack.c.b16 %v4408, %v4406
  %v4425 = vpack.c.b16 %v4411, %v4409
  %v4426 = vpack.c.b16 %v4412, %v4410
  %v4427 = vpack.c.b16 %v4415, %v4413
  %v4428 = vpack.c.b16 %v4416, %v4414
  %vm4439 = vcmask 736256
  %v4441 = vsel %vm4439, %v4366, 0
  %v4444 = vsel %vm4439, %v4367, 0
  %vm4446 = vcmask 1044480
  %v4448 = vsel %vm4446, %v4427, 0
  %v4451 = vsel %vm4446, %v4428, 0
  %4453 = vmatprep.subr.bf16.mxu0 %v4418
  %4454 = vmatpush1.bf16.msra.mxu0 %v4417
  %4455 = vmatprep.subr.bf16.mxu0 %v4420
  %4456 = vmatpush1.bf16.msra.mxu0 %v4419
  %4457 = vmatprep.subr.bf16.mxu0 %v4422
  %4458 = vmatpush1.bf16.msra.mxu0 %v4421
  %4459 = vmatprep.subr.bf16.mxu0 %v4424
  %4460 = vmatpush1.bf16.msra.mxu0 %v4423
  %4461 = vmatprep.subr.bf16.mxu0 %v4426
  %4462 = vmatpush1.bf16.msra.mxu0 %v4425
  %4463 = vmatprep.subr.bf16.mxu0 %v4451
  %4464 = vmatpush1.bf16.msra.mxu0 %v4448
  %4465 = vmatprep.subr.bf16.mxu0 0
  %4466 = vmatpush1.bf16.msra.mxu0 0
  %4467 = vmatprep.subr.bf16.mxu0 0
  %4468 = vmatpush1.bf16.msra.mxu0 0
  %4469 = vmatprep.subr.bf16.mxu0 0
  %4470 = vmatpush1.bf16.msra.mxu0 0
  %4471 = vmatprep.subr.bf16.mxu0 0
  %4472 = vmatpush1.bf16.msra.mxu0 0
  %4473 = vmatprep.subr.bf16.mxu0 0
  %4474 = vmatpush1.bf16.msra.mxu0 0
  %4475 = vmatprep.subr.bf16.mxu0 0
  %4476 = vmatpush1.bf16.msra.mxu0 0
  %4477 = vmatprep.subr.bf16.mxu0 0
  %4478 = vmatpush1.bf16.msra.mxu0 0
  %4479 = vmatprep.subr.bf16.mxu0 0
  %4480 = vmatpush1.bf16.msra.mxu0 0
  %4481 = vmatprep.subr.bf16.mxu0 0
  %4482 = vmatpush1.bf16.msra.mxu0 0
  %4483 = vmatprep.subr.bf16.mxu0 0
  %4484 = vmatpush1.bf16.msra.mxu0 0
  %4485 = vmatprep.mubr.bf16.mxu0 0
  %4486 = vmatmul.mubr.bf16.gmra.mrb[0].mxu0 %v4441
  %v4487 = vpop.f32.mrb[0].mxu0
  %v4488 = vadd.f32 0.0, %v4487
  %v4489 = vpop.f32.mrb[0].mxu0
  %v4490 = vadd.f32 0.0, %v4489
  %v4491 = vpop.f32.mrb[0].mxu0
  %v4492 = vadd.f32 0.0, %v4491
  %v4493 = vpop.f32.mrb[0].mxu0
  %v4494 = vadd.f32 0.0, %v4493
  %4495 = vmatprep.mubr.bf16.mxu0 0
  %4496 = vmatmul.mubr.bf16.gmra.mrb[0].mxu0 %v4444
  %v4497 = vpop.f32.mrb[0].mxu0
  %v4498 = vadd.f32 0.0, %v4497
  %v4499 = vpop.f32.mrb[0].mxu0
  %v4500 = vadd.f32 0.0, %v4499
  %v4501 = vpop.f32.mrb[0].mxu0
  %v4502 = vpop.f32.mrb[0].mxu0
  %4503 = vdwg.mxu0
  %v4516 = vunpack.c.l.b16 %v4301
  %v4517 = vunpack.c.h.b16 %v4301
  %v4518 = vunpack.c.l.b16 %v4302
  %v4519 = vunpack.c.h.b16 %v4302
  %v4520 = vunpack.c.l.b16 %v4303
  %v4521 = vunpack.c.h.b16 %v4303
  %v4522 = vunpack.c.l.b16 %v4304
  %v4523 = vunpack.c.h.b16 %v4304
  %v4524 = vunpack.c.l.b16 %v4305
  %v4525 = vunpack.c.h.b16 %v4305
  %v4526 = vunpack.c.l.b16 %v4306
  %v4527 = vunpack.c.h.b16 %v4306
  %v4528 = vunpack.c.l.b16 %v4307
  %v4529 = vunpack.c.h.b16 %v4307
  %v4530 = vunpack.c.l.b16 %v4308
  %v4531 = vunpack.c.h.b16 %v4308
  %v4532 = vunpack.c.l.b16 %v4309
  %v4533 = vunpack.c.h.b16 %v4309
  %v4534 = vunpack.c.l.b16 %v4310
  %v4535 = vunpack.c.h.b16 %v4310
  %v4536 = vunpack.c.l.b16 %v4311
  %v4537 = vunpack.c.h.b16 %v4311
  %v4538 = vunpack.c.l.b16 %v4312
  %v4539 = vunpack.c.h.b16 %v4312
  %v4540 = vpack.c.b16 %v4518, %v4516
  %v4541 = vpack.c.b16 %v4519, %v4517
  %v4542 = vpack.c.b16 %v4522, %v4520
  %v4543 = vpack.c.b16 %v4523, %v4521
  %v4544 = vpack.c.b16 %v4526, %v4524
  %v4545 = vpack.c.b16 %v4527, %v4525
  %v4546 = vpack.c.b16 %v4530, %v4528
  %v4547 = vpack.c.b16 %v4531, %v4529
  %v4548 = vpack.c.b16 %v4534, %v4532
  %v4549 = vpack.c.b16 %v4535, %v4533
  %v4550 = vpack.c.b16 %v4538, %v4536
  %v4551 = vpack.c.b16 %v4539, %v4537
  %v4563 = vsel %vm4439, %v4299, 0
  %v4566 = vsel %vm4439, %v4300, 0
  %v4569 = vsel %vm4446, %v4550, 0
  %v4572 = vsel %vm4446, %v4551, 0
  %4574 = vmatprep.subr.bf16.mxu0 %v4541
  %4575 = vmatpush1.bf16.msra.mxu0 %v4540
  %4576 = vmatprep.subr.bf16.mxu0 %v4543
  %4577 = vmatpush1.bf16.msra.mxu0 %v4542
  %4578 = vmatprep.subr.bf16.mxu0 %v4545
  %4579 = vmatpush1.bf16.msra.mxu0 %v4544
  %4580 = vmatprep.subr.bf16.mxu0 %v4547
  %4581 = vmatpush1.bf16.msra.mxu0 %v4546
  %4582 = vmatprep.subr.bf16.mxu0 %v4549
  %4583 = vmatpush1.bf16.msra.mxu0 %v4548
  %4584 = vmatprep.subr.bf16.mxu0 %v4572
  %4585 = vmatpush1.bf16.msra.mxu0 %v4569
  %4586 = vmatprep.subr.bf16.mxu0 0
  %4587 = vmatpush1.bf16.msra.mxu0 0
  %4588 = vmatprep.subr.bf16.mxu0 0
  %4589 = vmatpush1.bf16.msra.mxu0 0
  %4590 = vmatprep.subr.bf16.mxu0 0
  %4591 = vmatpush1.bf16.msra.mxu0 0
  %4592 = vmatprep.subr.bf16.mxu0 0
  %4593 = vmatpush1.bf16.msra.mxu0 0
  %4594 = vmatprep.subr.bf16.mxu0 0
  %4595 = vmatpush1.bf16.msra.mxu0 0
  %4596 = vmatprep.subr.bf16.mxu0 0
  %4597 = vmatpush1.bf16.msra.mxu0 0
  %4598 = vmatprep.subr.bf16.mxu0 0
  %4599 = vmatpush1.bf16.msra.mxu0 0
  %4600 = vmatprep.subr.bf16.mxu0 0
  %4601 = vmatpush1.bf16.msra.mxu0 0
  %4602 = vmatprep.subr.bf16.mxu0 0
  %4603 = vmatpush1.bf16.msra.mxu0 0
  %4604 = vmatprep.subr.bf16.mxu0 0
  %4605 = vmatpush1.bf16.msra.mxu0 0
  %4606 = vmatprep.mubr.bf16.mxu0 0
  %4607 = vmatmul.mubr.bf16.gmra.mrb[0].mxu0 %v4563
  %v4608 = vpop.f32.mrb[0].mxu0
  %v4609 = vadd.f32 %v4488, %v4608
  %v4610 = vpop.f32.mrb[0].mxu0
  %v4611 = vadd.f32 %v4490, %v4610
  %v4612 = vpop.f32.mrb[0].mxu0
  %v4613 = vadd.f32 %v4492, %v4612
  %v4614 = vpop.f32.mrb[0].mxu0
  %v4615 = vadd.f32 %v4494, %v4614
  %4616 = vmatprep.mubr.bf16.mxu0 0
  %4617 = vmatmul.mubr.bf16.gmra.mrb[0].mxu0 %v4566
  %v4618 = vpop.f32.mrb[0].mxu0
  %v4619 = vadd.f32 %v4498, %v4618
  %v4620 = vpop.f32.mrb[0].mxu0
  %v4621 = vadd.f32 %v4500, %v4620
  %v4622 = vpop.f32.mrb[0].mxu0
  %v4623 = vpop.f32.mrb[0].mxu0
  %4624 = vdwg.mxu0
  %v4625 = vcombine.low %v4261, %v4271
  %v4626 = vcombine.low %v4278, %v4287
  %v4627 = vcombine.low %v4227, %v4229
  %v4629 = vunpack.c.l.s4 1983009808
  %v4630 = vunpack.c.0.s8 %v4629
  %v4631 = vlaneseq
  %v4632 = vshrl.u32 %v4631, 7
  %v4633 = vsub.s32 %v4630, %v4632
  %v4634 = vrot.slane %v4627, %v4633
  %v4636 = vunpack.c.l.s4 1983009808
  %v4637 = vunpack.c.0.s8 %v4636
  %v4638 = vlaneseq
  %v4639 = vshrl.u32 %v4638, 7
  %v4640 = vsub.s32 %v4637, %v4639
  %v4641 = vrot.slane %v4237, %v4640
  %v4642 = vcombine.low %v4634, %v4641
  %v4646 = vpack.c.bf16 %v4626, %v4625
  %v4647 = vpack.c.bf16 %v4642, %v4642
  %s4648 = scalar_lea.vmem %s3, 192
  %v4649 = vld [vmem:[%s4648] sm:$0xff]
  %v4650 = vld [vmem:[%s4648 + $0x8] sm:$0xff]
  %v4651 = vld [vmem:[%s4648 + $0x10] sm:$0xff]
  %v4652 = vld [vmem:[%s4648 + $0x18] sm:$0xff]
  %v4653 = vld [vmem:[%s4648 + $0x20] sm:$0xff]
  %v4654 = vld [vmem:[%s4648 + $0x28] sm:$0xff]
  %v4655 = vld [vmem:[%s4648 + $0x30] sm:$0xff]
  %v4656 = vld [vmem:[%s4648 + $0x38] sm:$0xff]
  %v4657 = vld [vmem:[%s4648 + $0x40] sm:$0xff]
  %v4658 = vld [vmem:[%s4648 + $0x48] sm:$0xff]
  %v4659 = vld [vmem:[%s4648 + $0x50] sm:$0xff]
  %v4660 = vld [vmem:[%s4648 + $0x58] sm:$0x11]
  %v4673 = vunpack.c.l.b16 %v4649
  %v4674 = vunpack.c.h.b16 %v4649
  %v4675 = vunpack.c.l.b16 %v4650
  %v4676 = vunpack.c.h.b16 %v4650
  %v4677 = vunpack.c.l.b16 %v4651
  %v4678 = vunpack.c.h.b16 %v4651
  %v4679 = vunpack.c.l.b16 %v4652
  %v4680 = vunpack.c.h.b16 %v4652
  %v4681 = vunpack.c.l.b16 %v4653
  %v4682 = vunpack.c.h.b16 %v4653
  %v4683 = vunpack.c.l.b16 %v4654
  %v4684 = vunpack.c.h.b16 %v4654
  %v4685 = vunpack.c.l.b16 %v4655
  %v4686 = vunpack.c.h.b16 %v4655
  %v4687 = vunpack.c.l.b16 %v4656
  %v4688 = vunpack.c.h.b16 %v4656
  %v4689 = vunpack.c.l.b16 %v4657
  %v4690 = vunpack.c.h.b16 %v4657
  %v4691 = vunpack.c.l.b16 %v4658
  %v4692 = vunpack.c.h.b16 %v4658
  %v4693 = vunpack.c.l.b16 %v4659
  %v4694 = vunpack.c.h.b16 %v4659
  %v4695 = vunpack.c.l.b16 %v4660
  %v4696 = vunpack.c.h.b16 %v4660
  %v4697 = vpack.c.b16 %v4675, %v4673
  %v4698 = vpack.c.b16 %v4676, %v4674
  %v4699 = vpack.c.b16 %v4679, %v4677
  %v4700 = vpack.c.b16 %v4680, %v4678
  %v4701 = vpack.c.b16 %v4683, %v4681
  %v4702 = vpack.c.b16 %v4684, %v4682
  %v4703 = vpack.c.b16 %v4687, %v4685
  %v4704 = vpack.c.b16 %v4688, %v4686
  %v4705 = vpack.c.b16 %v4691, %v4689
  %v4706 = vpack.c.b16 %v4692, %v4690
  %v4707 = vpack.c.b16 %v4695, %v4693
  %v4708 = vpack.c.b16 %v4696, %v4694
  %v4720 = vsel %vm4439, %v4646, 0
  %v4723 = vsel %vm4439, %v4647, 0
  %v4726 = vsel %vm4446, %v4707, 0
  %v4729 = vsel %vm4446, %v4708, 0
  %4731 = vmatprep.subr.bf16.mxu0 %v4698
  %4732 = vmatpush1.bf16.msra.mxu0 %v4697
  %4733 = vmatprep.subr.bf16.mxu0 %v4700
  %4734 = vmatpush1.bf16.msra.mxu0 %v4699
  %4735 = vmatprep.subr.bf16.mxu0 %v4702
  %4736 = vmatpush1.bf16.msra.mxu0 %v4701
  %4737 = vmatprep.subr.bf16.mxu0 %v4704
  %4738 = vmatpush1.bf16.msra.mxu0 %v4703
  %4739 = vmatprep.subr.bf16.mxu0 %v4706
  %4740 = vmatpush1.bf16.msra.mxu0 %v4705
  %4741 = vmatprep.subr.bf16.mxu0 %v4729
  %4742 = vmatpush1.bf16.msra.mxu0 %v4726
  %4743 = vmatprep.subr.bf16.mxu0 0
  %4744 = vmatpush1.bf16.msra.mxu0 0
  %4745 = vmatprep.subr.bf16.mxu0 0
  %4746 = vmatpush1.bf16.msra.mxu0 0
  %4747 = vmatprep.subr.bf16.mxu0 0
  %4748 = vmatpush1.bf16.msra.mxu0 0
  %4749 = vmatprep.subr.bf16.mxu0 0
  %4750 = vmatpush1.bf16.msra.mxu0 0
  %4751 = vmatprep.subr.bf16.mxu0 0
  %4752 = vmatpush1.bf16.msra.mxu0 0
  %4753 = vmatprep.subr.bf16.mxu0 0
  %4754 = vmatpush1.bf16.msra.mxu0 0
  %4755 = vmatprep.subr.bf16.mxu0 0
  %4756 = vmatpush1.bf16.msra.mxu0 0
  %4757 = vmatprep.subr.bf16.mxu0 0
  %4758 = vmatpush1.bf16.msra.mxu0 0
  %4759 = vmatprep.subr.bf16.mxu0 0
  %4760 = vmatpush1.bf16.msra.mxu0 0
  %4761 = vmatprep.subr.bf16.mxu0 0
  %4762 = vmatpush1.bf16.msra.mxu0 0
  %4763 = vmatprep.mubr.bf16.mxu0 0
  %4764 = vmatmul.mubr.bf16.gmra.mrb[0].mxu0 %v4720
  %v4765 = vpop.f32.mrb[0].mxu0
  %v4766 = vadd.f32 0.0, %v4765
  %v4767 = vpop.f32.mrb[0].mxu0
  %v4768 = vadd.f32 0.0, %v4767
  %v4769 = vpop.f32.mrb[0].mxu0
  %v4770 = vadd.f32 0.0, %v4769
  %v4771 = vpop.f32.mrb[0].mxu0
  %v4772 = vadd.f32 0.0, %v4771
  %4773 = vmatprep.mubr.bf16.mxu0 0
  %4774 = vmatmul.mubr.bf16.gmra.mrb[0].mxu0 %v4723
  %v4775 = vpop.f32.mrb[0].mxu0
  %v4776 = vadd.f32 0.0, %v4775
  %v4777 = vpop.f32.mrb[0].mxu0
  %v4778 = vadd.f32 0.0, %v4777
  %v4779 = vpop.f32.mrb[0].mxu0
  %v4780 = vpop.f32.mrb[0].mxu0
  %4781 = vdwg.mxu0
  %v4782 = vadd.f32 %v4609, %v4766
  %v4783 = vadd.f32 %v4611, %v4768
  %v4784 = vadd.f32 %v4613, %v4770
  %v4785 = vadd.f32 %v4615, %v4772
  %v4786 = vadd.f32 %v4619, %v4776
  %v4787 = vadd.f32 %v4621, %v4778
  %v4788 = vcombine.low %v4328, %v4338
  %v4789 = vcombine.low %v4345, %v4354
  %v4790 = vcombine.low %v4229, %v4237
  %v4792 = vunpack.c.l.s4 1983009808
  %v4793 = vunpack.c.0.s8 %v4792
  %v4794 = vlaneseq
  %v4795 = vshrl.u32 %v4794, 7
  %v4796 = vsub.s32 %v4793, %v4795
  %v4797 = vrot.slane %v4790, %v4796
  %v4799 = vunpack.c.l.s4 1983009808
  %v4800 = vunpack.c.0.s8 %v4799
  %v4801 = vlaneseq
  %v4802 = vshrl.u32 %v4801, 7
  %v4803 = vsub.s32 %v4800, %v4802
  %v4804 = vrot.slane %v4245, %v4803
  %v4805 = vcombine.low %v4797, %v4804
  %v4809 = vpack.c.bf16 %v4789, %v4788
  %v4810 = vpack.c.bf16 %v4805, %v4805
  %s4811 = scalar_lea.vmem %s3, 288
  %v4812 = vld [vmem:[%s4811] sm:$0xff]
  %v4813 = vld [vmem:[%s4811 + $0x8] sm:$0xff]
  %v4814 = vld [vmem:[%s4811 + $0x10] sm:$0xff]
  %v4815 = vld [vmem:[%s4811 + $0x18] sm:$0xff]
  %v4816 = vld [vmem:[%s4811 + $0x20] sm:$0xff]
  %v4817 = vld [vmem:[%s4811 + $0x28] sm:$0xff]
  %v4818 = vld [vmem:[%s4811 + $0x30] sm:$0xff]
  %v4819 = vld [vmem:[%s4811 + $0x38] sm:$0xff]
  %v4820 = vld [vmem:[%s4811 + $0x40] sm:$0xff]
  %v4821 = vld [vmem:[%s4811 + $0x48] sm:$0xff]
  %v4822 = vld [vmem:[%s4811 + $0x50] sm:$0xff]
  %v4823 = vld [vmem:[%s4811 + $0x58] sm:$0x11]
  %v4836 = vunpack.c.l.b16 %v4812
  %v4837 = vunpack.c.h.b16 %v4812
  %v4838 = vunpack.c.l.b16 %v4813
  %v4839 = vunpack.c.h.b16 %v4813
  %v4840 = vunpack.c.l.b16 %v4814
  %v4841 = vunpack.c.h.b16 %v4814
  %v4842 = vunpack.c.l.b16 %v4815
  %v4843 = vunpack.c.h.b16 %v4815
  %v4844 = vunpack.c.l.b16 %v4816
  %v4845 = vunpack.c.h.b16 %v4816
  %v4846 = vunpack.c.l.b16 %v4817
  %v4847 = vunpack.c.h.b16 %v4817
  %v4848 = vunpack.c.l.b16 %v4818
  %v4849 = vunpack.c.h.b16 %v4818
  %v4850 = vunpack.c.l.b16 %v4819
  %v4851 = vunpack.c.h.b16 %v4819
  %v4852 = vunpack.c.l.b16 %v4820
  %v4853 = vunpack.c.h.b16 %v4820
  %v4854 = vunpack.c.l.b16 %v4821
  %v4855 = vunpack.c.h.b16 %v4821
  %v4856 = vunpack.c.l.b16 %v4822
  %v4857 = vunpack.c.h.b16 %v4822
  %v4858 = vunpack.c.l.b16 %v4823
  %v4859 = vunpack.c.h.b16 %v4823
  %v4860 = vpack.c.b16 %v4838, %v4836
  %v4861 = vpack.c.b16 %v4839, %v4837
  %v4862 = vpack.c.b16 %v4842, %v4840
  %v4863 = vpack.c.b16 %v4843, %v4841
  %v4864 = vpack.c.b16 %v4846, %v4844
  %v4865 = vpack.c.b16 %v4847, %v4845
  %v4866 = vpack.c.b16 %v4850, %v4848
  %v4867 = vpack.c.b16 %v4851, %v4849
  %v4868 = vpack.c.b16 %v4854, %v4852
  %v4869 = vpack.c.b16 %v4855, %v4853
  %v4870 = vpack.c.b16 %v4858, %v4856
  %v4871 = vpack.c.b16 %v4859, %v4857
  %v4883 = vsel %vm4439, %v4809, 0
  %v4886 = vsel %vm4439, %v4810, 0
  %v4889 = vsel %vm4446, %v4870, 0
  %v4892 = vsel %vm4446, %v4871, 0
  %4894 = vmatprep.subr.bf16.mxu0 %v4861
  %4895 = vmatpush1.bf16.msra.mxu0 %v4860
  %4896 = vmatprep.subr.bf16.mxu0 %v4863
  %4897 = vmatpush1.bf16.msra.mxu0 %v4862
  %4898 = vmatprep.subr.bf16.mxu0 %v4865
  %4899 = vmatpush1.bf16.msra.mxu0 %v4864
  %4900 = vmatprep.subr.bf16.mxu0 %v4867
  %4901 = vmatpush1.bf16.msra.mxu0 %v4866
  %4902 = vmatprep.subr.bf16.mxu0 %v4869
  %4903 = vmatpush1.bf16.msra.mxu0 %v4868
  %4904 = vmatprep.subr.bf16.mxu0 %v4892
  %4905 = vmatpush1.bf16.msra.mxu0 %v4889
  %4906 = vmatprep.subr.bf16.mxu0 0
  %4907 = vmatpush1.bf16.msra.mxu0 0
  %4908 = vmatprep.subr.bf16.mxu0 0
  %4909 = vmatpush1.bf16.msra.mxu0 0
  %4910 = vmatprep.subr.bf16.mxu0 0
  %4911 = vmatpush1.bf16.msra.mxu0 0
  %4912 = vmatprep.subr.bf16.mxu0 0
  %4913 = vmatpush1.bf16.msra.mxu0 0
  %4914 = vmatprep.subr.bf16.mxu0 0
  %4915 = vmatpush1.bf16.msra.mxu0 0
  %4916 = vmatprep.subr.bf16.mxu0 0
  %4917 = vmatpush1.bf16.msra.mxu0 0
  %4918 = vmatprep.subr.bf16.mxu0 0
  %4919 = vmatpush1.bf16.msra.mxu0 0
  %4920 = vmatprep.subr.bf16.mxu0 0
  %4921 = vmatpush1.bf16.msra.mxu0 0
  %4922 = vmatprep.subr.bf16.mxu0 0
  %4923 = vmatpush1.bf16.msra.mxu0 0
  %4924 = vmatprep.subr.bf16.mxu0 0
  %4925 = vmatpush1.bf16.msra.mxu0 0
  %4926 = vmatprep.mubr.bf16.mxu0 0
  %4927 = vmatmul.mubr.bf16.gmra.mrb[0].mxu0 %v4883
  %v4928 = vpop.f32.mrb[0].mxu0
  %v4929 = vadd.f32 0.0, %v4928
  %v4930 = vpop.f32.mrb[0].mxu0
  %v4931 = vadd.f32 0.0, %v4930
  %v4932 = vpop.f32.mrb[0].mxu0
  %v4933 = vadd.f32 0.0, %v4932
  %v4934 = vpop.f32.mrb[0].mxu0
  %v4935 = vadd.f32 0.0, %v4934
  %4936 = vmatprep.mubr.bf16.mxu0 0
  %4937 = vmatmul.mubr.bf16.gmra.mrb[0].mxu0 %v4886
  %v4938 = vpop.f32.mrb[0].mxu0
  %v4939 = vadd.f32 0.0, %v4938
  %v4940 = vpop.f32.mrb[0].mxu0
  %v4941 = vadd.f32 0.0, %v4940
  %v4942 = vpop.f32.mrb[0].mxu0
  %v4943 = vpop.f32.mrb[0].mxu0
  %4944 = vdwg.mxu0
  %v4945 = vadd.f32 %v4782, %v4929
  %v4946 = vadd.f32 %v4783, %v4931
  %v4947 = vadd.f32 %v4784, %v4933
  %v4948 = vadd.f32 %v4785, %v4935
  %v4949 = vadd.f32 %v4786, %v4939
  %v4950 = vadd.f32 %v4787, %v4941
  %v4951 = vcombine.low %v4287, %v4634
  %v4952 = vcombine.low %v4237, %v4245
  %v4954 = vunpack.c.l.s4 1983009808
  %v4955 = vunpack.c.0.s8 %v4954
  %v4956 = vlaneseq
  %v4957 = vshrl.u32 %v4956, 7
  %v4958 = vsub.s32 %v4955, %v4957
  %v4959 = vrot.slane %v4952, %v4958
  %v4961 = vunpack.c.l.s4 1983009808
  %v4962 = vunpack.c.0.s8 %v4961
  %v4963 = vlaneseq
  %v4964 = vshrl.u32 %v4963, 7
  %v4965 = vsub.s32 %v4962, %v4964
  %v4966 = vrot.slane %v4244, %v4965
  %v4967 = vcombine.low %v4959, %v4966
  %v4970 = vpack.c.bf16 %v4951, %v4279
  %v4971 = vpack.c.bf16 %v4967, %v4967
  %s4972 = scalar_lea.vmem %s3, 384
  %v4973 = vld [vmem:[%s4972] sm:$0xff]
  %v4974 = vld [vmem:[%s4972 + $0x8] sm:$0xff]
  %v4975 = vld [vmem:[%s4972 + $0x10] sm:$0xff]
  %v4976 = vld [vmem:[%s4972 + $0x18] sm:$0xff]
  %v4977 = vld [vmem:[%s4972 + $0x20] sm:$0xff]
  %v4978 = vld [vmem:[%s4972 + $0x28] sm:$0xff]
  %v4979 = vld [vmem:[%s4972 + $0x30] sm:$0xff]
  %v4980 = vld [vmem:[%s4972 + $0x38] sm:$0xff]
  %v4981 = vld [vmem:[%s4972 + $0x40] sm:$0xff]
  %v4982 = vld [vmem:[%s4972 + $0x48] sm:$0xff]
  %v4983 = vld [vmem:[%s4972 + $0x50] sm:$0xff]
  %v4984 = vld [vmem:[%s4972 + $0x58] sm:$0x11]
  %v4997 = vunpack.c.l.b16 %v4973
  %v4998 = vunpack.c.h.b16 %v4973
  %v4999 = vunpack.c.l.b16 %v4974
  %v5000 = vunpack.c.h.b16 %v4974
  %v5001 = vunpack.c.l.b16 %v4975
  %v5002 = vunpack.c.h.b16 %v4975
  %v5003 = vunpack.c.l.b16 %v4976
  %v5004 = vunpack.c.h.b16 %v4976
  %v5005 = vunpack.c.l.b16 %v4977
  %v5006 = vunpack.c.h.b16 %v4977
  %v5007 = vunpack.c.l.b16 %v4978
  %v5008 = vunpack.c.h.b16 %v4978
  %v5009 = vunpack.c.l.b16 %v4979
  %v5010 = vunpack.c.h.b16 %v4979
  %v5011 = vunpack.c.l.b16 %v4980
  %v5012 = vunpack.c.h.b16 %v4980
  %v5013 = vunpack.c.l.b16 %v4981
  %v5014 = vunpack.c.h.b16 %v4981
  %v5015 = vunpack.c.l.b16 %v4982
  %v5016 = vunpack.c.h.b16 %v4982
  %v5017 = vunpack.c.l.b16 %v4983
  %v5018 = vunpack.c.h.b16 %v4983
  %v5019 = vunpack.c.l.b16 %v4984
  %v5020 = vunpack.c.h.b16 %v4984
  %v5021 = vpack.c.b16 %v4999, %v4997
  %v5022 = vpack.c.b16 %v5000, %v4998
  %v5023 = vpack.c.b16 %v5003, %v5001
  %v5024 = vpack.c.b16 %v5004, %v5002
  %v5025 = vpack.c.b16 %v5007, %v5005
  %v5026 = vpack.c.b16 %v5008, %v5006
  %v5027 = vpack.c.b16 %v5011, %v5009
  %v5028 = vpack.c.b16 %v5012, %v5010
  %v5029 = vpack.c.b16 %v5015, %v5013
  %v5030 = vpack.c.b16 %v5016, %v5014
  %v5031 = vpack.c.b16 %v5019, %v5017
  %v5032 = vpack.c.b16 %v5020, %v5018
  %v5044 = vsel %vm4439, %v4970, 0
  %v5047 = vsel %vm4439, %v4971, 0
  %v5050 = vsel %vm4446, %v5031, 0
  %v5053 = vsel %vm4446, %v5032, 0
  %5055 = vmatprep.subr.bf16.mxu0 %v5022
  %5056 = vmatpush1.bf16.msra.mxu0 %v5021
  %5057 = vmatprep.subr.bf16.mxu0 %v5024
  %5058 = vmatpush1.bf16.msra.mxu0 %v5023
  %5059 = vmatprep.subr.bf16.mxu0 %v5026
  %5060 = vmatpush1.bf16.msra.mxu0 %v5025
  %5061 = vmatprep.subr.bf16.mxu0 %v5028
  %5062 = vmatpush1.bf16.msra.mxu0 %v5027
  %5063 = vmatprep.subr.bf16.mxu0 %v5030
  %5064 = vmatpush1.bf16.msra.mxu0 %v5029
  %5065 = vmatprep.subr.bf16.mxu0 %v5053
  %5066 = vmatpush1.bf16.msra.mxu0 %v5050
  %5067 = vmatprep.subr.bf16.mxu0 0
  %5068 = vmatpush1.bf16.msra.mxu0 0
  %5069 = vmatprep.subr.bf16.mxu0 0
  %5070 = vmatpush1.bf16.msra.mxu0 0
  %5071 = vmatprep.subr.bf16.mxu0 0
  %5072 = vmatpush1.bf16.msra.mxu0 0
  %5073 = vmatprep.subr.bf16.mxu0 0
  %5074 = vmatpush1.bf16.msra.mxu0 0
  %5075 = vmatprep.subr.bf16.mxu0 0
  %5076 = vmatpush1.bf16.msra.mxu0 0
  %5077 = vmatprep.subr.bf16.mxu0 0
  %5078 = vmatpush1.bf16.msra.mxu0 0
  %5079 = vmatprep.subr.bf16.mxu0 0
  %5080 = vmatpush1.bf16.msra.mxu0 0
  %5081 = vmatprep.subr.bf16.mxu0 0
  %5082 = vmatpush1.bf16.msra.mxu0 0
  %5083 = vmatprep.subr.bf16.mxu0 0
  %5084 = vmatpush1.bf16.msra.mxu0 0
  %5085 = vmatprep.subr.bf16.mxu0 0
  %5086 = vmatpush1.bf16.msra.mxu0 0
  %5087 = vmatprep.mubr.bf16.mxu0 0
  %5088 = vmatmul.mubr.bf16.gmra.mrb[0].mxu0 %v5044
  %v5089 = vpop.f32.mrb[0].mxu0
  %v5090 = vadd.f32 0.0, %v5089
  %v5091 = vpop.f32.mrb[0].mxu0
  %v5092 = vadd.f32 0.0, %v5091
  %v5093 = vpop.f32.mrb[0].mxu0
  %v5094 = vadd.f32 0.0, %v5093
  %v5095 = vpop.f32.mrb[0].mxu0
  %v5096 = vadd.f32 0.0, %v5095
  %5097 = vmatprep.mubr.bf16.mxu0 0
  %5098 = vmatmul.mubr.bf16.gmra.mrb[0].mxu0 %v5047
  %v5099 = vpop.f32.mrb[0].mxu0
  %v5100 = vadd.f32 0.0, %v5099
  %v5101 = vpop.f32.mrb[0].mxu0
  %v5102 = vadd.f32 0.0, %v5101
  %v5103 = vpop.f32.mrb[0].mxu0
  %v5104 = vpop.f32.mrb[0].mxu0
  %5105 = vdwg.mxu0
  %v5106 = vadd.f32 %v4945, %v5090
  %v5107 = vadd.f32 %v4946, %v5092
  %v5108 = vadd.f32 %v4947, %v5094
  %v5109 = vadd.f32 %v4948, %v5096
  %v5110 = vadd.f32 %v4949, %v5100
  %v5111 = vadd.f32 %v4950, %v5102
  %v5112 = vld [vmem:[%s4] sm:$0x3]
  %v5114 = vlaneseq
  %v5115 = vshrl.u32 %v5114, 7
  %v5116 = vsub.s32 0, %v5115
  %v5117 = vrot.slane %v5112, %v5116
  %v5118 = vlaneseq
  %v5119 = vshrl.u32 %v5118, 7
  %v5120 = vsub.s32 1, %v5119
  %v5121 = vrot.slane %v5112, %v5120
  %v5124 = vadd.f32 %v5106, %v5117
  %v5125 = vadd.f32 %v5107, %v5121
  %v5126 = vadd.f32 %v5108, %v5117
  %v5127 = vadd.f32 %v5109, %v5121
  %v5128 = vadd.f32 %v5110, %v5117
  %v5129 = vadd.f32 %v5111, %v5121
  %v5130 = vmax.f32 %v5124, 0.0
  %v5131 = vmax.f32 %v5125, 0.0
  %v5132 = vmax.f32 %v5126, 0.0
  %v5133 = vmax.f32 %v5127, 0.0
  %v5134 = vmax.f32 %v5128, 0.0
  %v5135 = vmax.f32 %v5129, 0.0
  %v5142 = vcombine.low %v5130, %v5131
  %v5143 = vcombine.high %v5130, %v5131
  %v5145 = vunpack.c.l.s4 1983009808
  %v5146 = vunpack.c.0.s8 %v5145
  %v5147 = vlaneseq
  %v5148 = vshrl.u32 %v5147, 7
  %v5149 = vsub.s32 %v5146, %v5148
  %v5150 = vrot.slane %v5142, %v5149
  %v5152 = vunpack.c.l.s4 1983009808
  %v5153 = vunpack.c.0.s8 %v5152
  %v5154 = vlaneseq
  %v5155 = vshrl.u32 %v5154, 7
  %v5156 = vsub.s32 %v5153, %v5155
  %v5157 = vrot.slane %v5143, %v5156
  %v5158 = vcombine.high %v5150, %v5150
  %v5159 = vcombine.high %v5157, %v5157
  %v5160 = vcombine.low %v5132, %v5133
  %v5161 = vcombine.high %v5132, %v5133
  %v5163 = vunpack.c.l.s4 1983009808
  %v5164 = vunpack.c.0.s8 %v5163
  %v5165 = vlaneseq
  %v5166 = vshrl.u32 %v5165, 7
  %v5167 = vsub.s32 %v5164, %v5166
  %v5168 = vrot.slane %v5160, %v5167
  %v5170 = vunpack.c.l.s4 1983009808
  %v5171 = vunpack.c.0.s8 %v5170
  %v5172 = vlaneseq
  %v5173 = vshrl.u32 %v5172, 7
  %v5174 = vsub.s32 %v5171, %v5173
  %v5175 = vrot.slane %v5161, %v5174
  %v5176 = vcombine.high %v5168, %v5168
  %v5177 = vcombine.high %v5175, %v5175
  %v5178 = vcombine.low %v5134, %v5135
  %v5180 = vunpack.c.l.s4 1983009808
  %v5181 = vunpack.c.0.s8 %v5180
  %v5182 = vlaneseq
  %v5183 = vshrl.u32 %v5182, 7
  %v5184 = vsub.s32 %v5181, %v5183
  %v5185 = vrot.slane %v5178, %v5184
  %v5186 = vcombine.high %v5185, %v5185
  %v5197 = vmax.f32 %v5150, %v5158
  %5199 = vrot.lane.b32.xlu0 %v5197, 112
  %v5200 = vpop.permute.xlu0 %5199
  %v5202 = vmax.f32 %v5197, %v5200
  %v5203 = vrot.slane %v5197, 2
  %v5205 = vrot.slane %v5200, 2
  %v5207 = vmax.f32 %v5203, %v5205
  %v5208 = vmax.f32 %v5157, %v5159
  %5210 = vrot.lane.b32.xlu0 %v5208, 112
  %v5211 = vpop.permute.xlu0 %5210
  %v5213 = vmax.f32 %v5208, %v5211
  %v5214 = vrot.slane %v5208, 2
  %v5216 = vrot.slane %v5211, 2
  %v5218 = vmax.f32 %v5214, %v5216
  %v5219 = vmax.f32 %v5168, %v5176
  %5221 = vrot.lane.b32.xlu0 %v5219, 112
  %v5222 = vpop.permute.xlu0 %5221
  %v5224 = vmax.f32 %v5219, %v5222
  %v5225 = vrot.slane %v5219, 2
  %v5227 = vrot.slane %v5222, 2
  %v5229 = vmax.f32 %v5225, %v5227
  %v5230 = vmax.f32 %v5175, %v5177
  %5232 = vrot.lane.b32.xlu0 %v5230, 112
  %v5233 = vpop.permute.xlu0 %5232
  %v5235 = vmax.f32 %v5230, %v5233
  %v5236 = vrot.slane %v5230, 2
  %v5238 = vrot.slane %v5233, 2
  %v5240 = vmax.f32 %v5236, %v5238
  %v5241 = vmax.f32 %v5185, %v5186
  %5243 = vrot.lane.b32.xlu0 %v5241, 112
  %v5244 = vpop.permute.xlu0 %5243
  %v5246 = vmax.f32 %v5241, %v5244
  %v5247 = vrot.slane %v5241, 2
  %v5249 = vrot.slane %v5244, 2
  %v5251 = vmax.f32 %v5247, %v5249
  %v5254 = vunpack.c.l.s4 1983009808
  %v5255 = vunpack.c.0.s8 %v5254
  %v5256 = vlaneseq
  %v5257 = vshrl.u32 %v5256, 7
  %v5258 = vsub.s32 %v5255, %v5257
  %v5259 = vrot.slane %v5202, %v5258
  %5260 = vrot.lane.b32.xlu0 %v5259, 112
  %v5261 = vpop.permute.xlu0 %5260
  %5263 = vrot.lane.b32.xlu0 %v5259, 96
  %v5264 = vpop.permute.xlu0 %5263
  %5266 = vrot.lane.b32.xlu0 %v5259, 80
  %v5267 = vpop.permute.xlu0 %5266
  %v5271 = vunpack.c.l.s4 1983009808
  %v5272 = vunpack.c.0.s8 %v5271
  %v5273 = vlaneseq
  %v5274 = vshrl.u32 %v5273, 7
  %v5275 = vsub.s32 %v5272, %v5274
  %v5276 = vrot.slane %v5207, %v5275
  %5277 = vrot.lane.b32.xlu0 %v5276, 64
  %v5278 = vpop.permute.xlu0 %5277
  %v5282 = vunpack.c.l.s4 1983009808
  %v5283 = vunpack.c.0.s8 %v5282
  %v5284 = vlaneseq
  %v5285 = vshrl.u32 %v5284, 7
  %v5286 = vsub.s32 %v5283, %v5285
  %v5287 = vrot.slane %v5213, %v5286
  %5288 = vrot.lane.b32.xlu0 %v5287, 80
  %v5289 = vpop.permute.xlu0 %5288
  %5291 = vrot.lane.b32.xlu0 %v5287, 64
  %v5292 = vpop.permute.xlu0 %5291
  %5294 = vrot.lane.b32.xlu0 %v5287, 48
  %v5295 = vpop.permute.xlu0 %5294
  %5297 = vrot.lane.b32.xlu0 %v5287, 32
  %v5298 = vpop.permute.xlu0 %5297
  %v5302 = vunpack.c.l.s4 1983009808
  %v5303 = vunpack.c.0.s8 %v5302
  %v5304 = vlaneseq
  %v5305 = vshrl.u32 %v5304, 7
  %v5306 = vsub.s32 %v5303, %v5305
  %v5307 = vrot.slane %v5218, %v5306
  %5308 = vrot.lane.b32.xlu0 %v5307, 16
  %v5309 = vpop.permute.xlu0 %5308
  %v5313 = vunpack.c.l.s4 1983009808
  %v5314 = vunpack.c.0.s8 %v5313
  %v5315 = vlaneseq
  %v5316 = vshrl.u32 %v5315, 7
  %v5317 = vsub.s32 %v5314, %v5316
  %v5318 = vrot.slane %v5224, %v5317
  %5319 = vrot.lane.b32.xlu0 %v5318, 32
  %v5320 = vpop.permute.xlu0 %5319
  %5322 = vrot.lane.b32.xlu0 %v5318, 16
  %v5323 = vpop.permute.xlu0 %5322
  %5325 = vrot.lane.b32.xlu0 %v5318, 112
  %v5326 = vpop.permute.xlu0 %5325
  %v5330 = vunpack.c.l.s4 1983009808
  %v5331 = vunpack.c.0.s8 %v5330
  %v5332 = vlaneseq
  %v5333 = vshrl.u32 %v5332, 7
  %v5334 = vsub.s32 %v5331, %v5333
  %v5335 = vrot.slane %v5229, %v5334
  %5336 = vrot.lane.b32.xlu0 %v5335, 96
  %v5337 = vpop.permute.xlu0 %5336
  %v5341 = vunpack.c.l.s4 1983009808
  %v5342 = vunpack.c.0.s8 %v5341
  %v5343 = vlaneseq
  %v5344 = vshrl.u32 %v5343, 7
  %v5345 = vsub.s32 %v5342, %v5344
  %v5346 = vrot.slane %v5235, %v5345
  %5347 = vrot.lane.b32.xlu0 %v5346, 112
  %v5348 = vpop.permute.xlu0 %5347
  %vm5350 = vcmask 130048
  %v5351 = vsel %vm5350, %v5202, %v5261
  %v5352 = vsel %vm416, %v5351, %v5264
  %v5353 = vsel %vm4020, %v5352, %v5267
  %vm5354 = vcmask 523264
  %v5355 = vsel %vm5354, %v5353, %v5278
  %vm5356 = vcmask 654336
  %v5357 = vsel %vm5356, %v5355, %v5289
  %vm5358 = vcmask 785408
  %v5359 = vsel %vm5358, %v5357, %v5292
  %vm5360 = vcmask 916480
  %v5361 = vsel %vm5360, %v5359, %v5295
  %v5362 = vsel %vm5350, %v5298, %v5309
  %v5363 = vsel %vm416, %v5362, %v5320
  %v5364 = vsel %vm4020, %v5363, %v5323
  %v5365 = vsel %vm5354, %v5364, %v5224
  %v5366 = vsel %vm5356, %v5365, %v5326
  %v5367 = vsel %vm5358, %v5366, %v5337
  %v5368 = vsel %vm5360, %v5367, %v5348
  %5369 = vrot.lane.b32.xlu0 %v5346, 96
  %v5370 = vpop.permute.xlu0 %5369
  %5372 = vrot.lane.b32.xlu0 %v5346, 80
  %v5373 = vpop.permute.xlu0 %5372
  %5375 = vrot.lane.b32.xlu0 %v5346, 64
  %v5376 = vpop.permute.xlu0 %5375
  %v5380 = vunpack.c.l.s4 1983009808
  %v5381 = vunpack.c.0.s8 %v5380
  %v5382 = vlaneseq
  %v5383 = vshrl.u32 %v5382, 7
  %v5384 = vsub.s32 %v5381, %v5383
  %v5385 = vrot.slane %v5240, %v5384
  %5386 = vrot.lane.b32.xlu0 %v5385, 48
  %v5387 = vpop.permute.xlu0 %5386
  %v5391 = vunpack.c.l.s4 1983009808
  %v5392 = vunpack.c.0.s8 %v5391
  %v5393 = vlaneseq
  %v5394 = vshrl.u32 %v5393, 7
  %v5395 = vsub.s32 %v5392, %v5394
  %v5396 = vrot.slane %v5246, %v5395
  %5397 = vrot.lane.b32.xlu0 %v5396, 64
  %v5398 = vpop.permute.xlu0 %5397
  %5400 = vrot.lane.b32.xlu0 %v5396, 48
  %v5401 = vpop.permute.xlu0 %5400
  %5403 = vrot.lane.b32.xlu0 %v5396, 32
  %v5404 = vpop.permute.xlu0 %5403
  %5406 = vrot.lane.b32.xlu0 %v5396, 16
  %v5407 = vpop.permute.xlu0 %5406
  %v5409 = vsel %vm5350, %v5370, %v5373
  %v5410 = vsel %vm416, %v5409, %v5376
  %v5411 = vsel %vm4020, %v5410, %v5387
  %v5412 = vsel %vm5354, %v5411, %v5398
  %v5413 = vsel %vm5356, %v5412, %v5401
  %v5414 = vsel %vm5358, %v5413, %v5404
  %v5415 = vsel %vm5360, %v5414, %v5407
  %v5416 = vsel %vm5350, %v5251, 0.0
  %v5421 = vcombine.low %v5361, %v5368
  %v5422 = vcombine.low %v5415, %v5416
  %v5424 = vunpack.c.l.s4 1983009808
  %v5425 = vunpack.c.0.s8 %v5424
  %v5426 = vlaneseq
  %v5427 = vshrl.u32 %v5426, 7
  %v5428 = vsub.s32 %v5425, %v5427
  %v5429 = vrot.slane %v5421, %v5428
  %v5431 = vunpack.c.l.s4 1983009808
  %v5432 = vunpack.c.0.s8 %v5431
  %v5433 = vlaneseq
  %v5434 = vshrl.u32 %v5433, 7
  %v5435 = vsub.s32 %v5432, %v5434
  %v5436 = vrot.slane %v5422, %v5435
  %v5437 = vcombine.low %v5429, %v5436
  %5439 = vst [vmem:[%s5] sm:$0xff] %v5437
  // Predicated region
  $region22: #{lenet_forward.2} parent=0 // pred_check
    _
  $region23: #{lenet_forward.2} parent=0 // pred_check_branch
    %5441 = sbr.rel (0) target = $region25
  $region24: #{lenet_forward.2} parent=0 // pred_region
    _
  $region25: #{lenet_forward.2} parent=0 // pred_fallthru
    _
  // Predicated region
  $region26: #{lenet_forward.2} parent=0 // pred_check
    _
  $region27: #{lenet_forward.2} parent=0 // pred_check_branch
    %5443 = sbr.rel (0) target = $region29
  $region28: #{lenet_forward.2} parent=0 // pred_region
    _
  $region29: #{lenet_forward.2} parent=0 // pred_fallthru
    _

</llo_original>
